<compile_context>
chip_gen: v6e
topology: v6e:2x2x1
jax: 0.10.0
libtpu: 0.0.40
codegen_flags: <defaults>
</compile_context>

<pallas_src>
import functools

import jax
import jax.numpy as jnp
from jax.experimental import pallas as pl
from jax.experimental.pallas import tpu as pltpu

LANE = 128  # TPU lane width: Cout and K are zero-padded to multiples of this.


def _round_up(x, m):
    return (x + m - 1) // m * m


def _pad_to(x, target, axis):
    amount = target - x.shape[axis]
    if amount == 0:
        return x
    cfg = [(0, 0)] * x.ndim
    cfg[axis] = (0, amount)
    return jnp.pad(x, cfg)


# ----------------------------------------------------------------------------
# Pallas kernels
# ----------------------------------------------------------------------------
def _gemm_bias_kernel(x_ref, w_ref, b_ref, o_ref, *, relu):
    """(TM, K) @ (K, 128) + bias (+ ReLU), f32 accumulate, lane-dense store."""
    y = jnp.dot(x_ref[...], w_ref[...], preferred_element_type=jnp.float32)
    y = y + b_ref[...]
    if relu:
        y = jnp.maximum(y, 0.0)
    o_ref[...] = y.astype(o_ref.dtype)


def _fused_gemm2_kernel(x_ref, w1_ref, b1_ref, w2_ref, b2_ref, o_ref):
    """conv1 GEMM + bias + ReLU, then the fused 1x1 conv2 GEMM + bias + ReLU,
    all on the (TM, 128) tile already resident in VMEM/vregs."""
    h = jnp.dot(x_ref[...], w1_ref[...], preferred_element_type=jnp.float32)
    h = jnp.maximum(h + b1_ref[...], 0.0)
    y = jnp.dot(h.astype(w2_ref.dtype), w2_ref[...],
                preferred_element_type=jnp.float32)
    y = jnp.maximum(y + b2_ref[...], 0.0)
    o_ref[...] = y.astype(o_ref.dtype)


# ----------------------------------------------------------------------------
# Tiled pallas_call wrapper (grid over M, weights/bias resident)
# ----------------------------------------------------------------------------
def _run_tiled(kernel, cols, resident, *, flops, block_m):
    m, k = cols.shape
    tm = min(block_m, _round_up(m, 8))      # biggest tile that fits / sweepable
    m_pad = _round_up(m, tm)
    cols = _pad_to(cols, m_pad, 0)          # pad M so every grid block is full
    n = LANE

    bytes_accessed = int(cols.size) * cols.dtype.itemsize + m_pad * n * 4
    in_specs = [pl.BlockSpec((tm, k), lambda i: (i, 0))]
    for arr in resident:                    # weights / biases: resident blocks
        bytes_accessed += int(arr.size) * arr.dtype.itemsize
        in_specs.append(pl.BlockSpec(arr.shape, lambda i: (0, 0)))

    out = pl.pallas_call(
        kernel,
        out_shape=jax.ShapeDtypeStruct((m_pad, n), jnp.float32),
        grid=(m_pad // tm,),
        in_specs=in_specs,
        out_specs=pl.BlockSpec((tm, n), lambda i: (i, 0)),
        compiler_params=pltpu.CompilerParams(
            dimension_semantics=("parallel",)),   # shard M tiles across TCs (v7x)
        cost_estimate=pl.CostEstimate(
            flops=int(flops), transcendentals=0,
            bytes_accessed=int(bytes_accessed)),
    )(cols, *resident)
    return out[:m]


# ----------------------------------------------------------------------------
# Conv plumbing (XLA side): replicate pad, im2col, weight/bias prep
# ----------------------------------------------------------------------------
def _replicate_pad(x_nhwc, pad):
    return jnp.pad(x_nhwc, ((0, 0), (pad, pad), (pad, pad), (0, 0)), mode="edge")


def _im2col(xp, k):
    """(N, Hp, Wp, C) -> ((N*Ho*Wo, k*k*C), (N, Ho, Wo)); (i, j, ci) K order."""
    n, hp, wp, c = xp.shape
    ho, wo = hp - k + 1, wp - k + 1
    patches = [xp[:, i:i + ho, j:j + wo, :] for i in range(k) for j in range(k)]
    p = jnp.stack(patches, axis=3)                    # (N, Ho, Wo, k*k, C)
    return p.reshape(n * ho * wo, k * k * c), (n, ho, wo)


def _prep_weight(w_oihw, k_pad, dtype):
    """(Cout, Cin, kh, kw) -> (k_pad, 128), matching im2col's (i, j, ci) order."""
    c_out = w_oihw.shape[0]
    wmat = jnp.transpose(w_oihw, (2, 3, 1, 0)).reshape(-1, c_out)
    wmat = _pad_to(_pad_to(wmat, k_pad, 0), LANE, 1)
    return wmat.astype(dtype)


def _prep_bias(b):
    return _pad_to(b.reshape(1, -1), LANE, 1).astype(jnp.float32)


# ----------------------------------------------------------------------------
# SRCNN forward (NCHW in/out, matching the PyTorch module)
# ----------------------------------------------------------------------------
def srcnn_forward(x_nchw, params, *, compute_dtype=jnp.bfloat16, block_m=512):
    x = jnp.transpose(x_nchw, (0, 2, 3, 1)).astype(jnp.float32)   # -> NHWC

    # --- conv1 (9x9, replicate pad 2) fused with conv2 (1x1) -----------------
    cols1, (n, h1, wd1) = _im2col(_replicate_pad(x, 2), 9)
    k1 = _round_up(cols1.shape[1], LANE)              # 243 -> 256
    cols1 = _pad_to(cols1, k1, 1).astype(compute_dtype)
    w1p = _prep_weight(params["w1"], k1, compute_dtype)
    w2p = _prep_weight(params["w2"], LANE, compute_dtype)   # (64,32) -> (128,128)
    b1p, b2p = _prep_bias(params["b1"]), _prep_bias(params["b2"])
    m1 = cols1.shape[0]
    y12 = _run_tiled(_fused_gemm2_kernel, cols1, [w1p, b1p, w2p, b2p],
                     flops=2 * m1 * k1 * LANE + 2 * m1 * LANE * LANE,
                     block_m=block_m)
    c2 = params["w2"].shape[0]
    y12 = y12[:, :c2].reshape(n, h1, wd1, c2)

    # --- conv3 (5x5, replicate pad 2) -----------------------------------------
    # conv2's own replicate-pad-2 border is pointwise, so it commutes with the
    # fused 1x1 conv and is applied here as extra replicate padding (2 + 2 = 4).
    cols3, (n, h3, wd3) = _im2col(_replicate_pad(y12, 4), 5)
    k3 = _round_up(cols3.shape[1], LANE)              # 800 -> 896
    cols3 = _pad_to(cols3, k3, 1).astype(compute_dtype)
    w3p = _prep_weight(params["w3"], k3, compute_dtype)
    b3p = _prep_bias(params["b3"])
    m3 = cols3.shape[0]
    y3 = _run_tiled(functools.partial(_gemm_bias_kernel, relu=False),
                    cols3, [w3p, b3p],
                    flops=2 * m3 * k3 * LANE, block_m=block_m)
    c3 = params["w3"].shape[0]
    y3 = y3[:, :c3].reshape(n, h3, wd3, c3)

    return jnp.transpose(y3, (0, 3, 1, 2))            # -> NCHW


# ----------------------------------------------------------------------------
# Pure-JAX reference (literal PyTorch op ordering, for correctness check only)
# ----------------------------------------------------------------------------
def _conv_ref(x_nhwc, w_oihw, b, pad):
    xp = _replicate_pad(x_nhwc, pad)
    w_hwio = jnp.transpose(w_oihw, (2, 3, 1, 0))
    y = jax.lax.conv_general_dilated(
        xp, w_hwio, window_strides=(1, 1), padding="VALID",
        dimension_numbers=("NHWC", "HWIO", "NHWC"),
        precision=jax.lax.Precision.HIGHEST)
    return y + b


def srcnn_forward_ref(x_nchw, params):
    x = jnp.transpose(x_nchw, (0, 2, 3, 1))
    x = jax.nn.relu(_conv_ref(x, params["w1"], params["b1"], pad=2))
    x = jax.nn.relu(_conv_ref(x, params["w2"], params["b2"], pad=2))
    x = _conv_ref(x, params["w3"], params["b3"], pad=2)
    return jnp.transpose(x, (0, 3, 1, 2))


# ----------------------------------------------------------------------------
# Deterministic parameter init (same shapes as the nn.Module __init__)
# ----------------------------------------------------------------------------
def init_params(key):
    def conv_init(k, c_out, c_in, ksz):
        k_w, k_b = jax.random.split(k)
        bound = 1.0 / jnp.sqrt(c_in * ksz * ksz)
        w = jax.random.uniform(k_w, (c_out, c_in, ksz, ksz),
                               minval=-bound, maxval=bound, dtype=jnp.float32)
        b = jax.random.uniform(k_b, (c_out,),
                               minval=-bound, maxval=bound, dtype=jnp.float32)
        return w, b

    k1, k2, k3 = jax.random.split(key, 3)
    w1, b1 = conv_init(k1, 64, 3, 9)
    w2, b2 = conv_init(k2, 32, 64, 1)
    w3, b3 = conv_init(k3, 3, 32, 5)
    return {"w1": w1, "b1": b1, "w2": w2, "b2": b2, "w3": w3, "b3": b3}


if __name__ == "__main__":
    key = jax.random.PRNGKey(0)
    params = init_params(key)
    # Small but big enough that both pallas_calls run a multi-block M grid.
    x = jax.random.normal(jax.random.fold_in(key, 999), (2, 3, 24, 24),
                          dtype=jnp.float32)

    fwd_bf16 = jax.jit(functools.partial(srcnn_forward,
                                         compute_dtype=jnp.bfloat16))
    fwd_f32 = jax.jit(functools.partial(srcnn_forward,
                                        compute_dtype=jnp.float32))

    out = jax.block_until_ready(fwd_bf16(x, params))
    out_f32 = jax.block_until_ready(fwd_f32(x, params))
    ref = jax.block_until_ready(srcnn_forward_ref(x, params))

    assert out.shape == (2, 3, 24, 24), out.shape
    err_f32 = float(jnp.max(jnp.abs(out_f32 - ref)))
    err_bf16 = float(jnp.max(jnp.abs(out - ref)))
    assert err_f32 < 1e-3, f"f32 path max-abs error {err_f32}"
    assert err_bf16 < 2e-2, f"bf16 path max-abs error {err_bf16}"  # bf16 operands
    print("KERNEL_OK")
</pallas_src>

<mosaic_0001>
module attributes {stable_mosaic.version = 11 : i64} {
  func.func @_fused_gemm2_kernel(%arg0: i32, %arg1: memref<512x256xbf16, #tpu.memory_space<vmem>>, %arg2: memref<256x128xbf16, #tpu.memory_space<vmem>>, %arg3: memref<1x128xf32, #tpu.memory_space<vmem>>, %arg4: memref<128x128xbf16, #tpu.memory_space<vmem>>, %arg5: memref<1x128xf32, #tpu.memory_space<vmem>>, %arg6: memref<512x128xf32, #tpu.memory_space<vmem>>) attributes {dimension_semantics = [#tpu.dimension_semantics<parallel>], iteration_bounds = array<i64: 2>, scalar_prefetch = 0 : i64, scratch_operands = 0 : i64, tpu.core_type = #tpu.core_type<tc>, window_params = [{transform_indices = @transform_0, window_bounds = array<i64: 512, 256>}, {pipeline_mode = #tpu.pipeline_mode<synchronous>, transform_indices = @transform_1, window_bounds = array<i64: 256, 128>}, {pipeline_mode = #tpu.pipeline_mode<synchronous>, transform_indices = @transform_2, window_bounds = array<i64: 1, 128>}, {pipeline_mode = #tpu.pipeline_mode<synchronous>, transform_indices = @transform_3, window_bounds = array<i64: 128, 128>}, {pipeline_mode = #tpu.pipeline_mode<synchronous>, transform_indices = @transform_4, window_bounds = array<i64: 1, 128>}, {transform_indices = @transform_5, window_bounds = array<i64: 512, 128>}]} {
    %c0 = arith.constant 0 : index
    %c0_0 = arith.constant 0 : index
    %0 = vector.load %arg1[%c0, %c0_0] : memref<512x256xbf16, #tpu.memory_space<vmem>>, vector<512x256xbf16>
    %c0_1 = arith.constant 0 : index
    %c0_2 = arith.constant 0 : index
    %1 = vector.load %arg2[%c0_1, %c0_2] : memref<256x128xbf16, #tpu.memory_space<vmem>>, vector<256x128xbf16>
    %cst = arith.constant dense<0.000000e+00> : vector<512x128xf32>
    %2 = tpu.matmul %0, %1, %cst {dimension_numbers = #tpu.dot_dimension_numbers<[1], [0], [0], [1], [0, 0, 1, 1], [], []>} : vector<512x256xbf16>, vector<256x128xbf16>, vector<512x128xf32> -> vector<512x128xf32>
    %c0_3 = arith.constant 0 : index
    %c0_4 = arith.constant 0 : index
    %3 = vector.load %arg3[%c0_3, %c0_4] : memref<1x128xf32, #tpu.memory_space<vmem>>, vector<1x128xf32>
    %4 = vector.broadcast %3 : vector<1x128xf32> to vector<512x128xf32>
    %5 = arith.addf %2, %4 : vector<512x128xf32>
    %cst_5 = arith.constant 0.000000e+00 : f32
    %6 = vector.broadcast %cst_5 : f32 to vector<512x128xf32>
    %7 = arith.maximumf %5, %6 : vector<512x128xf32>
    %8 = arith.truncf %7 : vector<512x128xf32> to vector<512x128xbf16>
    %c0_6 = arith.constant 0 : index
    %c0_7 = arith.constant 0 : index
    %9 = vector.load %arg4[%c0_6, %c0_7] : memref<128x128xbf16, #tpu.memory_space<vmem>>, vector<128x128xbf16>
    %cst_8 = arith.constant dense<0.000000e+00> : vector<512x128xf32>
    %10 = tpu.matmul %8, %9, %cst_8 {dimension_numbers = #tpu.dot_dimension_numbers<[1], [0], [0], [1], [0, 0, 1, 1], [], []>} : vector<512x128xbf16>, vector<128x128xbf16>, vector<512x128xf32> -> vector<512x128xf32>
    %c0_9 = arith.constant 0 : index
    %c0_10 = arith.constant 0 : index
    %11 = vector.load %arg5[%c0_9, %c0_10] : memref<1x128xf32, #tpu.memory_space<vmem>>, vector<1x128xf32>
    %12 = vector.broadcast %11 : vector<1x128xf32> to vector<512x128xf32>
    %13 = arith.addf %10, %12 : vector<512x128xf32>
    %cst_11 = arith.constant 0.000000e+00 : f32
    %14 = vector.broadcast %cst_11 : f32 to vector<512x128xf32>
    %15 = arith.maximumf %13, %14 : vector<512x128xf32>
    %c0_12 = arith.constant 0 : index
    %c0_13 = arith.constant 0 : index
    %16 = vector.load %arg6[%c0_12, %c0_13] : memref<512x128xf32, #tpu.memory_space<vmem>>, vector<512x128xf32>
    tpu.vector_store %arg6[%c0_12, %c0_13], %15 {strides = array<i32>} : memref<512x128xf32, #tpu.memory_space<vmem>>, vector<512x128xf32>,
    return
  }
  func.func @transform_0(%arg0: i32) -> (i32, i32) {
    %c0_i32 = arith.constant 0 : i32
    %c0_i32_0 = arith.constant 0 : i32
    return %arg0, %c0_i32 : i32, i32
  }
  func.func @transform_1(%arg0: i32) -> (i32, i32) {
    %c0_i32 = arith.constant 0 : i32
    %c0_i32_0 = arith.constant 0 : i32
    %c0_i32_1 = arith.constant 0 : i32
    return %c0_i32, %c0_i32_0 : i32, i32
  }
  func.func @transform_2(%arg0: i32) -> (i32, i32) {
    %c0_i32 = arith.constant 0 : i32
    %c0_i32_0 = arith.constant 0 : i32
    %c0_i32_1 = arith.constant 0 : i32
    return %c0_i32, %c0_i32_0 : i32, i32
  }
  func.func @transform_3(%arg0: i32) -> (i32, i32) {
    %c0_i32 = arith.constant 0 : i32
    %c0_i32_0 = arith.constant 0 : i32
    %c0_i32_1 = arith.constant 0 : i32
    return %c0_i32, %c0_i32_0 : i32, i32
  }
  func.func @transform_4(%arg0: i32) -> (i32, i32) {
    %c0_i32 = arith.constant 0 : i32
    %c0_i32_0 = arith.constant 0 : i32
    %c0_i32_1 = arith.constant 0 : i32
    return %c0_i32, %c0_i32_0 : i32, i32
  }
  func.func @transform_5(%arg0: i32) -> (i32, i32) {
    %c0_i32 = arith.constant 0 : i32
    %c0_i32_0 = arith.constant 0 : i32
    return %arg0, %c0_i32 : i32, i32
  }
}

module attributes {stable_mosaic.version = 11 : i64} {
  func.func @_gemm_bias_kernel(%arg0: i32, %arg1: memref<512x896xbf16, #tpu.memory_space<vmem>>, %arg2: memref<896x128xbf16, #tpu.memory_space<vmem>>, %arg3: memref<1x128xf32, #tpu.memory_space<vmem>>, %arg4: memref<512x128xf32, #tpu.memory_space<vmem>>) attributes {dimension_semantics = [#tpu.dimension_semantics<parallel>], iteration_bounds = array<i64: 3>, scalar_prefetch = 0 : i64, scratch_operands = 0 : i64, tpu.core_type = #tpu.core_type<tc>, window_params = [{transform_indices = @transform_0, window_bounds = array<i64: 512, 896>}, {pipeline_mode = #tpu.pipeline_mode<synchronous>, transform_indices = @transform_1, window_bounds = array<i64: 896, 128>}, {pipeline_mode = #tpu.pipeline_mode<synchronous>, transform_indices = @transform_2, window_bounds = array<i64: 1, 128>}, {transform_indices = @transform_3, window_bounds = array<i64: 512, 128>}]} {
    %c0 = arith.constant 0 : index
    %c0_0 = arith.constant 0 : index
    %0 = vector.load %arg1[%c0, %c0_0] : memref<512x896xbf16, #tpu.memory_space<vmem>>, vector<512x896xbf16>
    %c0_1 = arith.constant 0 : index
    %c0_2 = arith.constant 0 : index
    %1 = vector.load %arg2[%c0_1, %c0_2] : memref<896x128xbf16, #tpu.memory_space<vmem>>, vector<896x128xbf16>
    %cst = arith.constant dense<0.000000e+00> : vector<512x128xf32>
    %2 = tpu.matmul %0, %1, %cst {dimension_numbers = #tpu.dot_dimension_numbers<[1], [0], [0], [1], [0, 0, 1, 1], [], []>} : vector<512x896xbf16>, vector<896x128xbf16>, vector<512x128xf32> -> vector<512x128xf32>
    %c0_3 = arith.constant 0 : index
    %c0_4 = arith.constant 0 : index
    %3 = vector.load %arg3[%c0_3, %c0_4] : memref<1x128xf32, #tpu.memory_space<vmem>>, vector<1x128xf32>
    %4 = vector.broadcast %3 : vector<1x128xf32> to vector<512x128xf32>
    %5 = arith.addf %2, %4 : vector<512x128xf32>
    %c0_5 = arith.constant 0 : index
    %c0_6 = arith.constant 0 : index
    %6 = vector.load %arg4[%c0_5, %c0_6] : memref<512x128xf32, #tpu.memory_space<vmem>>, vector<512x128xf32>
    tpu.vector_store %arg4[%c0_5, %c0_6], %5 {strides = array<i32>} : memref<512x128xf32, #tpu.memory_space<vmem>>, vector<512x128xf32>,
    return
  }
  func.func @transform_0(%arg0: i32) -> (i32, i32) {
    %c0_i32 = arith.constant 0 : i32
    %c0_i32_0 = arith.constant 0 : i32
    return %arg0, %c0_i32 : i32, i32
  }
  func.func @transform_1(%arg0: i32) -> (i32, i32) {
    %c0_i32 = arith.constant 0 : i32
    %c0_i32_0 = arith.constant 0 : i32
    %c0_i32_1 = arith.constant 0 : i32
    return %c0_i32, %c0_i32_0 : i32, i32
  }
  func.func @transform_2(%arg0: i32) -> (i32, i32) {
    %c0_i32 = arith.constant 0 : i32
    %c0_i32_0 = arith.constant 0 : i32
    %c0_i32_1 = arith.constant 0 : i32
    return %c0_i32, %c0_i32_0 : i32, i32
  }
  func.func @transform_3(%arg0: i32) -> (i32, i32) {
    %c0_i32 = arith.constant 0 : i32
    %c0_i32_0 = arith.constant 0 : i32
    return %arg0, %c0_i32 : i32, i32
  }
}

</mosaic_0001>

<llo_original>
// kernel: srcnn_forward.2
$region0: #{srcnn_forward.2}
  #allocation0 [shape = 'u32[]', space=smem, size = 0x4, offset = 0x4, fixed_abs, tag = 'smem constant byte address 0x4 - core index']
  #allocation1 [shape = 'u32[144,128]{1,0:T(1,128)}', space=vmem, size = 0x12000, scoped, tag = 'internal scratch']
  %s0 = inlined_call_operand.vmem [shape: bf16[1024,256], index: 0, kind: input, shape index: {}]
  %s1 = inlined_call_operand.vmem [shape: bf16[256,128], index: 1, kind: input, shape index: {}]
  %s2 = inlined_call_operand.vmem [shape: f32[1,128], index: 2, kind: input, shape index: {}]
  %s3 = inlined_call_operand.vmem [shape: bf16[128,128], index: 3, kind: input, shape index: {}]
  %s4 = inlined_call_operand.vmem [shape: f32[1,128], index: 4, kind: input, shape index: {}]
  %s5 = inlined_call_operand.vmem [shape: f32[1024,128], index: 5, kind: output, shape index: {}]
  %s6 = sld [smem:[#allocation0]]
  $region53: #{srcnn_forward.2} parent=0
    _
  %s8 = ssub.s32 1, %s6
  %s9 = scalar_select 0, %s8, %s6
  loop: start=0, step=1, limit=4
  $region2: #{srcnn_forward.2} parent=0 // loop_pre_header
    _
  $region3: #{srcnn_forward.2} parent=0 // loop_header
    %s11 = sphi 0, %s15
    %p12 = scmp.ge.s32.totalorder %s11, 4
    %s21 = sphi 0, %s23
    %s24 = sphi 0, %s21
    %s25 = sphi 0, %s24
    %s41 = sphi 0, %s25
    %s45 = sphi 0, %s45
    %s47 = sphi 0, %s45
    %s48 = sphi 0, %s47
    %s62 = sphi 0, %s48
    %s66 = sphi 0, %s66
    %s68 = sphi 0, %s66
    %s69 = sphi 0, %s68
    %s83 = sphi 0, %s69
    %s87 = sphi 0, %s87
    %s89 = sphi 0, %s87
    %s90 = sphi 0, %s89
    %s104 = sphi 0, %s90
    %s108 = sphi 0, %s108
    %s110 = sphi 0, %s108
    %s111 = sphi 0, %s110
    %s125 = sphi 0, %s111
    %s131 = sphi 0, %s133
    %s134 = sphi 0, %s131
    %s135 = sphi 0, %s134
    %s151 = sphi 0, %s135
  $region4: #{srcnn_forward.2} parent=0 // loop_header_branch
    %14 = sbr.rel (%p12) target = $region8
  $region5: #{srcnn_forward.2} parent=0 // loop_body
    %s16 = ssub.s32 %s11, 1
    %s17 = ssub.s32 %s11, 2
    %s18 = sadd.s32 %s11, 1
    %s19 = ssub.s32 %s11, %s18
    %p20 = scmp.eq.s32.totalorder %s19, 0
    %s22 = sadd.s32 %s21, 1
    %s23 = scalar_select %p20, %s21, %s22
    %p26 = pneg %p20
    %p27 = scmp.eq.s32.totalorder %s11, 1
    %p28 = por %p26, %p27
    %p29 = scmp.ne.s32.totalorder %s21, %s24
    %p30 = scmp.eq.s32.totalorder %s11, 0
    %p31 = por %p29, %p30
    %p32 = scmp.ne.s32.totalorder %s21, %s24
    %p33 = scmp.eq.s32.totalorder %s16, 1
    %p34 = por %p32, %p33
    %p35 = scmp.ne.s32.totalorder %s24, %s25
    %p36 = scmp.eq.s32.totalorder %s16, 0
    %p37 = por %p35, %p36
    %p38 = scmp.ne.s32.totalorder %s24, %s25
    %p39 = scmp.eq.s32.totalorder %s17, 1
    %p40 = por %p38, %p39
    %p42 = scmp.ne.s32.totalorder %s25, %s41
    %p43 = scmp.eq.s32.totalorder %s17, 0
    %p44 = por %p42, %p43
    %s46 = sadd.s32 %s45, 1
    %p49 = scmp.eq.s32.totalorder %s11, 1
    %p50 = scmp.ne.s32.totalorder %s45, %s47
    %p51 = scmp.eq.s32.totalorder %s11, 0
    %p52 = por %p50, %p51
    %p53 = scmp.ne.s32.totalorder %s45, %s47
    %p54 = scmp.eq.s32.totalorder %s16, 1
    %p55 = por %p53, %p54
    %p56 = scmp.ne.s32.totalorder %s47, %s48
    %p57 = scmp.eq.s32.totalorder %s16, 0
    %p58 = por %p56, %p57
    %p59 = scmp.ne.s32.totalorder %s47, %s48
    %p60 = scmp.eq.s32.totalorder %s17, 1
    %p61 = por %p59, %p60
    %p63 = scmp.ne.s32.totalorder %s48, %s62
    %p64 = scmp.eq.s32.totalorder %s17, 0
    %p65 = por %p63, %p64
    %s67 = sadd.s32 %s66, 1
    %p70 = scmp.eq.s32.totalorder %s11, 1
    %p71 = scmp.ne.s32.totalorder %s66, %s68
    %p72 = scmp.eq.s32.totalorder %s11, 0
    %p73 = por %p71, %p72
    %p74 = scmp.ne.s32.totalorder %s66, %s68
    %p75 = scmp.eq.s32.totalorder %s16, 1
    %p76 = por %p74, %p75
    %p77 = scmp.ne.s32.totalorder %s68, %s69
    %p78 = scmp.eq.s32.totalorder %s16, 0
    %p79 = por %p77, %p78
    %p80 = scmp.ne.s32.totalorder %s68, %s69
    %p81 = scmp.eq.s32.totalorder %s17, 1
    %p82 = por %p80, %p81
    %p84 = scmp.ne.s32.totalorder %s69, %s83
    %p85 = scmp.eq.s32.totalorder %s17, 0
    %p86 = por %p84, %p85
    %s88 = sadd.s32 %s87, 1
    %p91 = scmp.eq.s32.totalorder %s11, 1
    %p92 = scmp.ne.s32.totalorder %s87, %s89
    %p93 = scmp.eq.s32.totalorder %s11, 0
    %p94 = por %p92, %p93
    %p95 = scmp.ne.s32.totalorder %s87, %s89
    %p96 = scmp.eq.s32.totalorder %s16, 1
    %p97 = por %p95, %p96
    %p98 = scmp.ne.s32.totalorder %s89, %s90
    %p99 = scmp.eq.s32.totalorder %s16, 0
    %p100 = por %p98, %p99
    %p101 = scmp.ne.s32.totalorder %s89, %s90
    %p102 = scmp.eq.s32.totalorder %s17, 1
    %p103 = por %p101, %p102
    %p105 = scmp.ne.s32.totalorder %s90, %s104
    %p106 = scmp.eq.s32.totalorder %s17, 0
    %p107 = por %p105, %p106
    %s109 = sadd.s32 %s108, 1
    %p112 = scmp.eq.s32.totalorder %s11, 1
    %p113 = scmp.ne.s32.totalorder %s108, %s110
    %p114 = scmp.eq.s32.totalorder %s11, 0
    %p115 = por %p113, %p114
    %p116 = scmp.ne.s32.totalorder %s108, %s110
    %p117 = scmp.eq.s32.totalorder %s16, 1
    %p118 = por %p116, %p117
    %p119 = scmp.ne.s32.totalorder %s110, %s111
    %p120 = scmp.eq.s32.totalorder %s16, 0
    %p121 = por %p119, %p120
    %p122 = scmp.ne.s32.totalorder %s110, %s111
    %p123 = scmp.eq.s32.totalorder %s17, 1
    %p124 = por %p122, %p123
    %p126 = scmp.ne.s32.totalorder %s111, %s125
    %p127 = scmp.eq.s32.totalorder %s17, 0
    %p128 = por %p126, %p127
    %s129 = ssub.s32 %s11, %s18
    %p130 = scmp.eq.s32.totalorder %s129, 0
    %s132 = sadd.s32 %s131, 1
    %s133 = scalar_select %p130, %s131, %s132
    %p136 = pneg %p130
    %p137 = scmp.eq.s32.totalorder %s11, 1
    %p138 = por %p136, %p137
    %p139 = scmp.ne.s32.totalorder %s131, %s134
    %p140 = scmp.eq.s32.totalorder %s11, 0
    %p141 = por %p139, %p140
    %p142 = scmp.ne.s32.totalorder %s131, %s134
    %p143 = scmp.eq.s32.totalorder %s16, 1
    %p144 = por %p142, %p143
    %p145 = scmp.ne.s32.totalorder %s134, %s135
    %p146 = scmp.eq.s32.totalorder %s16, 0
    %p147 = por %p145, %p146
    %p148 = scmp.ne.s32.totalorder %s134, %s135
    %p149 = scmp.eq.s32.totalorder %s17, 1
    %p150 = por %p148, %p149
    %p152 = scmp.ne.s32.totalorder %s135, %s151
    %p153 = scmp.eq.s32.totalorder %s17, 0
    %p154 = por %p152, %p153
    %p155 = scmp.le.s32.totalorder 1, %s11
    %p156 = scmp.lt.s32.totalorder %s11, 3
    %p157 = pnand %p155, %p156
    %p158 = pneg %p157
    // Predicated region
    $region9: #{srcnn_forward.2} parent=5 // pred_check
      _
    $region10: #{srcnn_forward.2} parent=5 // pred_check_branch
      %160 = sbr.rel (%p157) target = $region12
    $region11: #{srcnn_forward.2} parent=5 // pred_region
      %s161 = ssub.s32 %s11, 1
      // Predicated region
      $region13: #{srcnn_forward.2} parent=11 // pred_check
        %p162 = pneg %p58
      $region14: #{srcnn_forward.2} parent=11 // pred_check_branch
        %164 = sbr.rel (%p162) target = $region16
      $region15: #{srcnn_forward.2} parent=11 // pred_region
        _
      $region16: #{srcnn_forward.2} parent=11 // pred_fallthru
        _
      // Predicated region
      $region17: #{srcnn_forward.2} parent=11 // pred_check
        %p165 = pneg %p79
      $region18: #{srcnn_forward.2} parent=11 // pred_check_branch
        %167 = sbr.rel (%p165) target = $region20
      $region19: #{srcnn_forward.2} parent=11 // pred_region
        _
      $region20: #{srcnn_forward.2} parent=11 // pred_fallthru
        _
      // Predicated region
      $region21: #{srcnn_forward.2} parent=11 // pred_check
        %p168 = pneg %p100
      $region22: #{srcnn_forward.2} parent=11 // pred_check_branch
        %170 = sbr.rel (%p168) target = $region24
      $region23: #{srcnn_forward.2} parent=11 // pred_region
        _
      $region24: #{srcnn_forward.2} parent=11 // pred_fallthru
        _
      // Predicated region
      $region25: #{srcnn_forward.2} parent=11 // pred_check
        %p171 = pneg %p121
      $region26: #{srcnn_forward.2} parent=11 // pred_check_branch
        %173 = sbr.rel (%p171) target = $region28
      $region27: #{srcnn_forward.2} parent=11 // pred_region
        _
      $region28: #{srcnn_forward.2} parent=11 // pred_fallthru
        _
    $region12: #{srcnn_forward.2} parent=5 // pred_fallthru
      _
    %p174 = scmp.lt.s32.totalorder %s11, 2
    // Predicated region
    $region29: #{srcnn_forward.2} parent=5 // pred_check
      %p175 = pneg %p174
    $region30: #{srcnn_forward.2} parent=5 // pred_check_branch
      %177 = sbr.rel (%p175) target = $region32
    $region31: #{srcnn_forward.2} parent=5 // pred_region
      // Predicated region
      $region33: #{srcnn_forward.2} parent=31 // pred_check
        %p178 = pneg %p31
      $region34: #{srcnn_forward.2} parent=31 // pred_check_branch
        %180 = sbr.rel (%p178) target = $region36
      $region35: #{srcnn_forward.2} parent=31 // pred_region
        %s181 = smul.u32 64, %s11
        %p182 = scmp.lt.s32.totalorder %s181, 127
        %s183 = scalar_select %p182, %s181, 127
        %s184 = smul.addr %s183, 2
        %s185 = smul.addr %s184, 4
        %s186 = scalar_lea.vmem %s0, %s185
        %s187 = smul.u32 64, %s11
      $region36: #{srcnn_forward.2} parent=31 // pred_fallthru
        _
    $region32: #{srcnn_forward.2} parent=5 // pred_fallthru
      _
    %p188 = scmp.le.s32.totalorder 1, %s11
    %p189 = scmp.lt.s32.totalorder %s11, 3
    %p190 = pnand %p188, %p189
    %p191 = pneg %p190
    // Predicated region
    $region37: #{srcnn_forward.2} parent=5 // pred_check
      _
    $region38: #{srcnn_forward.2} parent=5 // pred_check_branch
      %193 = sbr.rel (%p190) target = $region40
    $region39: #{srcnn_forward.2} parent=5 // pred_region
      %s194 = ssub.s32 %s11, 1
      %s195 = smul.u32 64, %s16
      %p196 = scmp.lt.s32.totalorder %s195, 127
      %s197 = scalar_select %p196, %s195, 127
      %s198 = smul.addr %s197, 2
      %s199 = smul.addr %s198, 4
      %s200 = scalar_lea.vmem %s0, %s199
      %p201 = pneg %p37
      %p202 = pneg %p34
      %p203 = pneg %p58
      %p204 = pneg %p55
      %p205 = pneg %p79
      %p206 = pneg %p76
      %p207 = pneg %p100
      %p208 = pneg %p97
      %p209 = pneg %p121
      %p210 = pneg %p118
      %p211 = pneg %p147
      %p212 = pneg %p144
      %s213 = smul.u32 64, %s16
      %p214 = scmp.lt.s32.totalorder %s213, 127
      %s215 = scalar_select %p214, %s213, 127
      %s216 = smul.addr %s215, 8
      %s217 = scalar_lea.vmem %s5, %s216
      %s218 = smul.u32 64, %s16
      %p219 = scmp.lt.s32.totalorder %s218, 127
      %s220 = scalar_select %p219, %s218, 127
      %s221 = smul.addr %s220, 2
      %s222 = smul.addr %s221, 4
      %s223 = scalar_lea.vmem %s0, %s222
      %s224 = smul.u32 64, %s16
      %s225 = smul.u32 64, %s16
      %p226 = scmp.lt.s32.totalorder %s225, 127
      %s227 = scalar_select %p226, %s225, 127
      %s228 = smul.addr %s227, 8
      %s229 = scalar_lea.vmem %s5, %s228
      %s230 = smul.u32 64, %s16
      %v232 = vld [vmem:[%s223] sm:$0xff]
      %v233 = vld [vmem:[%s223 + $0x8] sm:$0xff]
      %v234 = vld [vmem:[%s223 + $0x10] sm:$0xff]
      %v235 = vld [vmem:[%s223 + $0x18] sm:$0xff]
      %v236 = vld [vmem:[%s223 + $0x20] sm:$0xff]
      %v237 = vld [vmem:[%s223 + $0x28] sm:$0xff]
      %v238 = vld [vmem:[%s223 + $0x30] sm:$0xff]
      %v239 = vld [vmem:[%s223 + $0x38] sm:$0xff]
      %v240 = vld [vmem:[%s223 + $0x40] sm:$0xff]
      %v241 = vld [vmem:[%s223 + $0x48] sm:$0xff]
      %v242 = vld [vmem:[%s223 + $0x50] sm:$0xff]
      %v243 = vld [vmem:[%s223 + $0x58] sm:$0xff]
      %v244 = vld [vmem:[%s223 + $0x60] sm:$0xff]
      %v245 = vld [vmem:[%s223 + $0x68] sm:$0xff]
      %v246 = vld [vmem:[%s223 + $0x70] sm:$0xff]
      %v247 = vld [vmem:[%s223 + $0x78] sm:$0xff]
      %v248 = vld [vmem:[%s223 + $0x80] sm:$0xff]
      %v249 = vld [vmem:[%s223 + $0x88] sm:$0xff]
      %v250 = vld [vmem:[%s223 + $0x90] sm:$0xff]
      %v251 = vld [vmem:[%s223 + $0x98] sm:$0xff]
      %v252 = vld [vmem:[%s223 + $0xa0] sm:$0xff]
      %v253 = vld [vmem:[%s223 + $0xa8] sm:$0xff]
      %v254 = vld [vmem:[%s223 + $0xb0] sm:$0xff]
      %v255 = vld [vmem:[%s223 + $0xb8] sm:$0xff]
      %v256 = vld [vmem:[%s223 + $0xc0] sm:$0xff]
      %v257 = vld [vmem:[%s223 + $0xc8] sm:$0xff]
      %v258 = vld [vmem:[%s223 + $0xd0] sm:$0xff]
      %v259 = vld [vmem:[%s223 + $0xd8] sm:$0xff]
      %v260 = vld [vmem:[%s223 + $0xe0] sm:$0xff]
      %v261 = vld [vmem:[%s223 + $0xe8] sm:$0xff]
      %v262 = vld [vmem:[%s223 + $0xf0] sm:$0xff]
      %v263 = vld [vmem:[%s223 + $0xf8] sm:$0xff]
      %v264 = vld [vmem:[%s223 + $0x100] sm:$0xff]
      %v265 = vld [vmem:[%s223 + $0x108] sm:$0xff]
      %v266 = vld [vmem:[%s223 + $0x110] sm:$0xff]
      %v267 = vld [vmem:[%s223 + $0x118] sm:$0xff]
      %v268 = vld [vmem:[%s223 + $0x120] sm:$0xff]
      %v269 = vld [vmem:[%s223 + $0x128] sm:$0xff]
      %v270 = vld [vmem:[%s223 + $0x130] sm:$0xff]
      %v271 = vld [vmem:[%s223 + $0x138] sm:$0xff]
      %v272 = vld [vmem:[%s223 + $0x140] sm:$0xff]
      %v273 = vld [vmem:[%s223 + $0x148] sm:$0xff]
      %v274 = vld [vmem:[%s223 + $0x150] sm:$0xff]
      %v275 = vld [vmem:[%s223 + $0x158] sm:$0xff]
      %v276 = vld [vmem:[%s223 + $0x160] sm:$0xff]
      %v277 = vld [vmem:[%s223 + $0x168] sm:$0xff]
      %v278 = vld [vmem:[%s223 + $0x170] sm:$0xff]
      %v279 = vld [vmem:[%s223 + $0x178] sm:$0xff]
      %v280 = vld [vmem:[%s223 + $0x180] sm:$0xff]
      %v281 = vld [vmem:[%s223 + $0x188] sm:$0xff]
      %v282 = vld [vmem:[%s223 + $0x190] sm:$0xff]
      %v283 = vld [vmem:[%s223 + $0x198] sm:$0xff]
      %v284 = vld [vmem:[%s223 + $0x1a0] sm:$0xff]
      %v285 = vld [vmem:[%s223 + $0x1a8] sm:$0xff]
      %v286 = vld [vmem:[%s223 + $0x1b0] sm:$0xff]
      %v287 = vld [vmem:[%s223 + $0x1b8] sm:$0xff]
      %v288 = vld [vmem:[%s223 + $0x1c0] sm:$0xff]
      %v289 = vld [vmem:[%s223 + $0x1c8] sm:$0xff]
      %v290 = vld [vmem:[%s223 + $0x1d0] sm:$0xff]
      %v291 = vld [vmem:[%s223 + $0x1d8] sm:$0xff]
      %v292 = vld [vmem:[%s223 + $0x1e0] sm:$0xff]
      %v293 = vld [vmem:[%s223 + $0x1e8] sm:$0xff]
      %v294 = vld [vmem:[%s223 + $0x1f0] sm:$0xff]
      %v295 = vld [vmem:[%s223 + $0x1f8] sm:$0xff]
      %v296 = vld [vmem:[%s1] sm:$0xf]
      %v297 = vld [vmem:[%s1 + $0x4] sm:$0xf]
      %v298 = vld [vmem:[%s1 + $0x8] sm:$0xf]
      %v299 = vld [vmem:[%s1 + $0xc] sm:$0xf]
      %v300 = vld [vmem:[%s1 + $0x10] sm:$0xf]
      %v301 = vld [vmem:[%s1 + $0x14] sm:$0xf]
      %v302 = vld [vmem:[%s1 + $0x18] sm:$0xf]
      %v303 = vld [vmem:[%s1 + $0x1c] sm:$0xf]
      %v304 = vld [vmem:[%s1 + $0x20] sm:$0xf]
      %v305 = vld [vmem:[%s1 + $0x24] sm:$0xf]
      %v306 = vld [vmem:[%s1 + $0x28] sm:$0xf]
      %v307 = vld [vmem:[%s1 + $0x2c] sm:$0xf]
      %v308 = vld [vmem:[%s1 + $0x30] sm:$0xf]
      %v309 = vld [vmem:[%s1 + $0x34] sm:$0xf]
      %v310 = vld [vmem:[%s1 + $0x38] sm:$0xf]
      %v311 = vld [vmem:[%s1 + $0x3c] sm:$0xf]
      %v312 = vld [vmem:[%s1 + $0x40] sm:$0xf]
      %v313 = vld [vmem:[%s1 + $0x44] sm:$0xf]
      %v314 = vld [vmem:[%s1 + $0x48] sm:$0xf]
      %v315 = vld [vmem:[%s1 + $0x4c] sm:$0xf]
      %v316 = vld [vmem:[%s1 + $0x50] sm:$0xf]
      %v317 = vld [vmem:[%s1 + $0x54] sm:$0xf]
      %v318 = vld [vmem:[%s1 + $0x58] sm:$0xf]
      %v319 = vld [vmem:[%s1 + $0x5c] sm:$0xf]
      %v320 = vld [vmem:[%s1 + $0x60] sm:$0xf]
      %v321 = vld [vmem:[%s1 + $0x64] sm:$0xf]
      %v322 = vld [vmem:[%s1 + $0x68] sm:$0xf]
      %v323 = vld [vmem:[%s1 + $0x6c] sm:$0xf]
      %v324 = vld [vmem:[%s1 + $0x70] sm:$0xf]
      %v325 = vld [vmem:[%s1 + $0x74] sm:$0xf]
      %v326 = vld [vmem:[%s1 + $0x78] sm:$0xf]
      %v327 = vld [vmem:[%s1 + $0x7c] sm:$0xf]
      %v328 = vld [vmem:[%s2] sm:$0x1]
      %v330 = vlaneseq
      %v331 = vshrl.u32 %v330, 7
      %v332 = vsub.s32 0, %v331
      %v333 = vrot.slane %v328, %v332
      %v399 = vunpack.c.l.b16 %v232
      %v400 = vunpack.c.h.b16 %v232
      %v401 = vunpack.c.l.b16 %v233
      %v402 = vunpack.c.h.b16 %v233
      %v403 = vunpack.c.l.b16 %v234
      %v404 = vunpack.c.h.b16 %v234
      %v405 = vunpack.c.l.b16 %v235
      %v406 = vunpack.c.h.b16 %v235
      %v407 = vunpack.c.l.b16 %v236
      %v408 = vunpack.c.h.b16 %v236
      %v409 = vunpack.c.l.b16 %v237
      %v410 = vunpack.c.h.b16 %v237
      %v411 = vunpack.c.l.b16 %v238
      %v412 = vunpack.c.h.b16 %v238
      %v413 = vunpack.c.l.b16 %v239
      %v414 = vunpack.c.h.b16 %v239
      %v415 = vunpack.c.l.b16 %v240
      %v416 = vunpack.c.h.b16 %v240
      %v417 = vunpack.c.l.b16 %v241
      %v418 = vunpack.c.h.b16 %v241
      %v419 = vunpack.c.l.b16 %v242
      %v420 = vunpack.c.h.b16 %v242
      %v421 = vunpack.c.l.b16 %v243
      %v422 = vunpack.c.h.b16 %v243
      %v423 = vunpack.c.l.b16 %v244
      %v424 = vunpack.c.h.b16 %v244
      %v425 = vunpack.c.l.b16 %v245
      %v426 = vunpack.c.h.b16 %v245
      %v427 = vunpack.c.l.b16 %v246
      %v428 = vunpack.c.h.b16 %v246
      %v429 = vunpack.c.l.b16 %v247
      %v430 = vunpack.c.h.b16 %v247
      %v431 = vunpack.c.l.b16 %v248
      %v432 = vunpack.c.h.b16 %v248
      %v433 = vunpack.c.l.b16 %v249
      %v434 = vunpack.c.h.b16 %v249
      %v435 = vunpack.c.l.b16 %v250
      %v436 = vunpack.c.h.b16 %v250
      %v437 = vunpack.c.l.b16 %v251
      %v438 = vunpack.c.h.b16 %v251
      %v439 = vunpack.c.l.b16 %v252
      %v440 = vunpack.c.h.b16 %v252
      %v441 = vunpack.c.l.b16 %v253
      %v442 = vunpack.c.h.b16 %v253
      %v443 = vunpack.c.l.b16 %v254
      %v444 = vunpack.c.h.b16 %v254
      %v445 = vunpack.c.l.b16 %v255
      %v446 = vunpack.c.h.b16 %v255
      %v447 = vunpack.c.l.b16 %v256
      %v448 = vunpack.c.h.b16 %v256
      %v449 = vunpack.c.l.b16 %v257
      %v450 = vunpack.c.h.b16 %v257
      %v451 = vunpack.c.l.b16 %v258
      %v452 = vunpack.c.h.b16 %v258
      %v453 = vunpack.c.l.b16 %v259
      %v454 = vunpack.c.h.b16 %v259
      %v455 = vunpack.c.l.b16 %v260
      %v456 = vunpack.c.h.b16 %v260
      %v457 = vunpack.c.l.b16 %v261
      %v458 = vunpack.c.h.b16 %v261
      %v459 = vunpack.c.l.b16 %v262
      %v460 = vunpack.c.h.b16 %v262
      %v461 = vunpack.c.l.b16 %v263
      %v462 = vunpack.c.h.b16 %v263
      %v463 = vunpack.c.l.b16 %v264
      %v464 = vunpack.c.h.b16 %v264
      %v465 = vunpack.c.l.b16 %v265
      %v466 = vunpack.c.h.b16 %v265
      %v467 = vunpack.c.l.b16 %v266
      %v468 = vunpack.c.h.b16 %v266
      %v469 = vunpack.c.l.b16 %v267
      %v470 = vunpack.c.h.b16 %v267
      %v471 = vunpack.c.l.b16 %v268
      %v472 = vunpack.c.h.b16 %v268
      %v473 = vunpack.c.l.b16 %v269
      %v474 = vunpack.c.h.b16 %v269
      %v475 = vunpack.c.l.b16 %v270
      %v476 = vunpack.c.h.b16 %v270
      %v477 = vunpack.c.l.b16 %v271
      %v478 = vunpack.c.h.b16 %v271
      %v479 = vunpack.c.l.b16 %v272
      %v480 = vunpack.c.h.b16 %v272
      %v481 = vunpack.c.l.b16 %v273
      %v482 = vunpack.c.h.b16 %v273
      %v483 = vunpack.c.l.b16 %v274
      %v484 = vunpack.c.h.b16 %v274
      %v485 = vunpack.c.l.b16 %v275
      %v486 = vunpack.c.h.b16 %v275
      %v487 = vunpack.c.l.b16 %v276
      %v488 = vunpack.c.h.b16 %v276
      %v489 = vunpack.c.l.b16 %v277
      %v490 = vunpack.c.h.b16 %v277
      %v491 = vunpack.c.l.b16 %v278
      %v492 = vunpack.c.h.b16 %v278
      %v493 = vunpack.c.l.b16 %v279
      %v494 = vunpack.c.h.b16 %v279
      %v495 = vunpack.c.l.b16 %v280
      %v496 = vunpack.c.h.b16 %v280
      %v497 = vunpack.c.l.b16 %v281
      %v498 = vunpack.c.h.b16 %v281
      %v499 = vunpack.c.l.b16 %v282
      %v500 = vunpack.c.h.b16 %v282
      %v501 = vunpack.c.l.b16 %v283
      %v502 = vunpack.c.h.b16 %v283
      %v503 = vunpack.c.l.b16 %v284
      %v504 = vunpack.c.h.b16 %v284
      %v505 = vunpack.c.l.b16 %v285
      %v506 = vunpack.c.h.b16 %v285
      %v507 = vunpack.c.l.b16 %v286
      %v508 = vunpack.c.h.b16 %v286
      %v509 = vunpack.c.l.b16 %v287
      %v510 = vunpack.c.h.b16 %v287
      %v511 = vunpack.c.l.b16 %v288
      %v512 = vunpack.c.h.b16 %v288
      %v513 = vunpack.c.l.b16 %v289
      %v514 = vunpack.c.h.b16 %v289
      %v515 = vunpack.c.l.b16 %v290
      %v516 = vunpack.c.h.b16 %v290
      %v517 = vunpack.c.l.b16 %v291
      %v518 = vunpack.c.h.b16 %v291
      %v519 = vunpack.c.l.b16 %v292
      %v520 = vunpack.c.h.b16 %v292
      %v521 = vunpack.c.l.b16 %v293
      %v522 = vunpack.c.h.b16 %v293
      %v523 = vunpack.c.l.b16 %v294
      %v524 = vunpack.c.h.b16 %v294
      %v525 = vunpack.c.l.b16 %v295
      %v526 = vunpack.c.h.b16 %v295
      %v527 = vpack.c.b16 %v401, %v399
      %v528 = vpack.c.b16 %v402, %v400
      %v529 = vpack.c.b16 %v405, %v403
      %v530 = vpack.c.b16 %v406, %v404
      %v531 = vpack.c.b16 %v409, %v407
      %v532 = vpack.c.b16 %v410, %v408
      %v533 = vpack.c.b16 %v413, %v411
      %v534 = vpack.c.b16 %v414, %v412
      %v535 = vpack.c.b16 %v417, %v415
      %v536 = vpack.c.b16 %v418, %v416
      %v537 = vpack.c.b16 %v421, %v419
      %v538 = vpack.c.b16 %v422, %v420
      %v539 = vpack.c.b16 %v425, %v423
      %v540 = vpack.c.b16 %v426, %v424
      %v541 = vpack.c.b16 %v429, %v427
      %v542 = vpack.c.b16 %v430, %v428
      %v543 = vpack.c.b16 %v433, %v431
      %v544 = vpack.c.b16 %v434, %v432
      %v545 = vpack.c.b16 %v437, %v435
      %v546 = vpack.c.b16 %v438, %v436
      %v547 = vpack.c.b16 %v441, %v439
      %v548 = vpack.c.b16 %v442, %v440
      %v549 = vpack.c.b16 %v445, %v443
      %v550 = vpack.c.b16 %v446, %v444
      %v551 = vpack.c.b16 %v449, %v447
      %v552 = vpack.c.b16 %v450, %v448
      %v553 = vpack.c.b16 %v453, %v451
      %v554 = vpack.c.b16 %v454, %v452
      %v555 = vpack.c.b16 %v457, %v455
      %v556 = vpack.c.b16 %v458, %v456
      %v557 = vpack.c.b16 %v461, %v459
      %v558 = vpack.c.b16 %v462, %v460
      %v559 = vpack.c.b16 %v465, %v463
      %v560 = vpack.c.b16 %v466, %v464
      %v561 = vpack.c.b16 %v469, %v467
      %v562 = vpack.c.b16 %v470, %v468
      %v563 = vpack.c.b16 %v473, %v471
      %v564 = vpack.c.b16 %v474, %v472
      %v565 = vpack.c.b16 %v477, %v475
      %v566 = vpack.c.b16 %v478, %v476
      %v567 = vpack.c.b16 %v481, %v479
      %v568 = vpack.c.b16 %v482, %v480
      %v569 = vpack.c.b16 %v485, %v483
      %v570 = vpack.c.b16 %v486, %v484
      %v571 = vpack.c.b16 %v489, %v487
      %v572 = vpack.c.b16 %v490, %v488
      %v573 = vpack.c.b16 %v493, %v491
      %v574 = vpack.c.b16 %v494, %v492
      %v575 = vpack.c.b16 %v497, %v495
      %v576 = vpack.c.b16 %v498, %v496
      %v577 = vpack.c.b16 %v501, %v499
      %v578 = vpack.c.b16 %v502, %v500
      %v579 = vpack.c.b16 %v505, %v503
      %v580 = vpack.c.b16 %v506, %v504
      %v581 = vpack.c.b16 %v509, %v507
      %v582 = vpack.c.b16 %v510, %v508
      %v583 = vpack.c.b16 %v513, %v511
      %v584 = vpack.c.b16 %v514, %v512
      %v585 = vpack.c.b16 %v517, %v515
      %v586 = vpack.c.b16 %v518, %v516
      %v587 = vpack.c.b16 %v521, %v519
      %v588 = vpack.c.b16 %v522, %v520
      %v589 = vpack.c.b16 %v525, %v523
      %v590 = vpack.c.b16 %v526, %v524
      %v687 = vunpack.c.l.b16 %v296
      %v688 = vunpack.c.l.b16 %v297
      %v689 = vunpack.c.l.b16 %v298
      %v690 = vunpack.c.l.b16 %v299
      %v691 = vunpack.c.l.b16 %v300
      %v692 = vunpack.c.l.b16 %v301
      %v693 = vunpack.c.l.b16 %v302
      %v694 = vunpack.c.l.b16 %v303
      %v695 = vunpack.c.l.b16 %v304
      %v696 = vunpack.c.l.b16 %v305
      %v697 = vunpack.c.l.b16 %v306
      %v698 = vunpack.c.l.b16 %v307
      %v699 = vunpack.c.l.b16 %v308
      %v700 = vunpack.c.l.b16 %v309
      %v701 = vunpack.c.l.b16 %v310
      %v702 = vunpack.c.l.b16 %v311
      %v703 = vunpack.c.l.b16 %v312
      %v704 = vunpack.c.l.b16 %v313
      %v705 = vunpack.c.l.b16 %v314
      %v706 = vunpack.c.l.b16 %v315
      %v707 = vunpack.c.l.b16 %v316
      %v708 = vunpack.c.l.b16 %v317
      %v709 = vunpack.c.l.b16 %v318
      %v710 = vunpack.c.l.b16 %v319
      %v711 = vunpack.c.l.b16 %v320
      %v712 = vunpack.c.l.b16 %v321
      %v713 = vunpack.c.l.b16 %v322
      %v714 = vunpack.c.l.b16 %v323
      %v715 = vunpack.c.l.b16 %v324
      %v716 = vunpack.c.l.b16 %v325
      %v717 = vunpack.c.l.b16 %v326
      %v718 = vunpack.c.l.b16 %v327
      %v719 = vpack.c.b16 %v688, %v687
      %v720 = vpack.c.b16 %v690, %v689
      %v721 = vpack.c.b16 %v692, %v691
      %v722 = vpack.c.b16 %v694, %v693
      %v723 = vpack.c.b16 %v696, %v695
      %v724 = vpack.c.b16 %v698, %v697
      %v725 = vpack.c.b16 %v700, %v699
      %v726 = vpack.c.b16 %v702, %v701
      %v727 = vpack.c.b16 %v704, %v703
      %v728 = vpack.c.b16 %v706, %v705
      %v729 = vpack.c.b16 %v708, %v707
      %v730 = vpack.c.b16 %v710, %v709
      %v731 = vpack.c.b16 %v712, %v711
      %v732 = vpack.c.b16 %v714, %v713
      %v733 = vpack.c.b16 %v716, %v715
      %v734 = vpack.c.b16 %v718, %v717
      %751 = vmatprep.subr.bf16.mxu0 0
      %752 = vmatpush1.bf16.msra.mxu0 %v726
      %753 = vmatprep.subr.bf16.mxu0 0
      %754 = vmatpush1.bf16.msra.mxu0 %v725
      %755 = vmatprep.subr.bf16.mxu0 0
      %756 = vmatpush1.bf16.msra.mxu0 %v724
      %757 = vmatprep.subr.bf16.mxu0 0
      %758 = vmatpush1.bf16.msra.mxu0 %v723
      %759 = vmatprep.subr.bf16.mxu0 0
      %760 = vmatpush1.bf16.msra.mxu0 %v722
      %761 = vmatprep.subr.bf16.mxu0 0
      %762 = vmatpush1.bf16.msra.mxu0 %v721
      %763 = vmatprep.subr.bf16.mxu0 0
      %764 = vmatpush1.bf16.msra.mxu0 %v720
      %765 = vmatprep.subr.bf16.mxu0 0
      %766 = vmatpush1.bf16.msra.mxu0 %v719
      %767 = vmatprep.subr.bf16.mxu0 0
      %768 = vmatpush2.bf16.msra.mxu0 %v734
      %769 = vmatprep.subr.bf16.mxu0 0
      %770 = vmatpush2.bf16.msra.mxu0 %v733
      %771 = vmatprep.subr.bf16.mxu0 0
      %772 = vmatpush2.bf16.msra.mxu0 %v732
      %773 = vmatprep.subr.bf16.mxu0 0
      %774 = vmatpush2.bf16.msra.mxu0 %v731
      %775 = vmatprep.subr.bf16.mxu0 0
      %776 = vmatpush2.bf16.msra.mxu0 %v730
      %777 = vmatprep.subr.bf16.mxu0 0
      %778 = vmatpush2.bf16.msra.mxu0 %v729
      %779 = vmatprep.subr.bf16.mxu0 0
      %780 = vmatpush2.bf16.msra.mxu0 %v728
      %781 = vmatprep.subr.bf16.mxu0 0
      %782 = vmatpush2.bf16.msra.mxu0 %v727
      %783 = vmatprep.mubr.bf16.mxu0 %v528
      %784 = vmatmul.mubr.bf16.gmra.mxu0 %v527
      %v785 = vpop.f32.mrf.mxu0
      %v786 = vadd.f32 %v333, %v785
      %v787 = vpop.f32.mrf.mxu0
      %v788 = vpop.f32.mrf.mxu0
      %v789 = vadd.f32 %v333, %v788
      %v790 = vpop.f32.mrf.mxu0
      %791 = vmatprep.mubr.bf16.mxu0 %v530
      %792 = vmatmul.mubr.bf16.gmra.mxu0 %v529
      %v793 = vpop.f32.mrf.mxu0
      %v794 = vadd.f32 %v333, %v793
      %v795 = vpop.f32.mrf.mxu0
      %v796 = vpop.f32.mrf.mxu0
      %v797 = vadd.f32 %v333, %v796
      %v798 = vpop.f32.mrf.mxu0
      %799 = vmatprep.mubr.bf16.mxu0 %v532
      %800 = vmatmul.mubr.bf16.gmra.mxu0 %v531
      %v801 = vpop.f32.mrf.mxu0
      %v802 = vadd.f32 %v333, %v801
      %v803 = vpop.f32.mrf.mxu0
      %v804 = vpop.f32.mrf.mxu0
      %v805 = vadd.f32 %v333, %v804
      %v806 = vpop.f32.mrf.mxu0
      %807 = vmatprep.mubr.bf16.mxu0 %v534
      %808 = vmatmul.mubr.bf16.gmra.mxu0 %v533
      %v809 = vpop.f32.mrf.mxu0
      %v810 = vadd.f32 %v333, %v809
      %v811 = vpop.f32.mrf.mxu0
      %v812 = vpop.f32.mrf.mxu0
      %v813 = vadd.f32 %v333, %v812
      %v814 = vpop.f32.mrf.mxu0
      %815 = vmatprep.mubr.bf16.mxu0 %v536
      %816 = vmatmul.mubr.bf16.gmra.mxu0 %v535
      %v817 = vpop.f32.mrf.mxu0
      %v818 = vadd.f32 %v333, %v817
      %v819 = vpop.f32.mrf.mxu0
      %v820 = vpop.f32.mrf.mxu0
      %v821 = vadd.f32 %v333, %v820
      %v822 = vpop.f32.mrf.mxu0
      %823 = vmatprep.mubr.bf16.mxu0 %v538
      %824 = vmatmul.mubr.bf16.gmra.mxu0 %v537
      %v825 = vpop.f32.mrf.mxu0
      %v826 = vadd.f32 %v333, %v825
      %v827 = vpop.f32.mrf.mxu0
      %v828 = vpop.f32.mrf.mxu0
      %v829 = vadd.f32 %v333, %v828
      %v830 = vpop.f32.mrf.mxu0
      %831 = vmatprep.mubr.bf16.mxu0 %v540
      %832 = vmatmul.mubr.bf16.gmra.mxu0 %v539
      %v833 = vpop.f32.mrf.mxu0
      %v834 = vadd.f32 %v333, %v833
      %v835 = vpop.f32.mrf.mxu0
      %v836 = vpop.f32.mrf.mxu0
      %v837 = vadd.f32 %v333, %v836
      %v838 = vpop.f32.mrf.mxu0
      %839 = vmatprep.mubr.bf16.mxu0 %v542
      %840 = vmatmul.mubr.bf16.gmra.mxu0 %v541
      %v841 = vpop.f32.mrf.mxu0
      %v842 = vadd.f32 %v333, %v841
      %v843 = vpop.f32.mrf.mxu0
      %v844 = vpop.f32.mrf.mxu0
      %v845 = vadd.f32 %v333, %v844
      %v846 = vpop.f32.mrf.mxu0
      %847 = vmatprep.mubr.bf16.mxu0 %v544
      %848 = vmatmul.mubr.bf16.gmra.mxu0 %v543
      %v849 = vpop.f32.mrf.mxu0
      %v850 = vadd.f32 %v333, %v849
      %v851 = vpop.f32.mrf.mxu0
      %v852 = vpop.f32.mrf.mxu0
      %v853 = vadd.f32 %v333, %v852
      %v854 = vpop.f32.mrf.mxu0
      %855 = vmatprep.mubr.bf16.mxu0 %v546
      %856 = vmatmul.mubr.bf16.gmra.mxu0 %v545
      %v857 = vpop.f32.mrf.mxu0
      %v858 = vadd.f32 %v333, %v857
      %v859 = vpop.f32.mrf.mxu0
      %v860 = vpop.f32.mrf.mxu0
      %v861 = vadd.f32 %v333, %v860
      %v862 = vpop.f32.mrf.mxu0
      %863 = vmatprep.mubr.bf16.mxu0 %v548
      %864 = vmatmul.mubr.bf16.gmra.mxu0 %v547
      %v865 = vpop.f32.mrf.mxu0
      %v866 = vadd.f32 %v333, %v865
      %v867 = vpop.f32.mrf.mxu0
      %v868 = vpop.f32.mrf.mxu0
      %v869 = vadd.f32 %v333, %v868
      %v870 = vpop.f32.mrf.mxu0
      %871 = vmatprep.mubr.bf16.mxu0 %v550
      %872 = vmatmul.mubr.bf16.gmra.mxu0 %v549
      %v873 = vpop.f32.mrf.mxu0
      %v874 = vadd.f32 %v333, %v873
      %v875 = vpop.f32.mrf.mxu0
      %v876 = vpop.f32.mrf.mxu0
      %v877 = vadd.f32 %v333, %v876
      %v878 = vpop.f32.mrf.mxu0
      %879 = vmatprep.mubr.bf16.mxu0 %v552
      %880 = vmatmul.mubr.bf16.gmra.mxu0 %v551
      %v881 = vpop.f32.mrf.mxu0
      %v882 = vadd.f32 %v333, %v881
      %v883 = vpop.f32.mrf.mxu0
      %v884 = vpop.f32.mrf.mxu0
      %v885 = vadd.f32 %v333, %v884
      %v886 = vpop.f32.mrf.mxu0
      %887 = vmatprep.mubr.bf16.mxu0 %v554
      %888 = vmatmul.mubr.bf16.gmra.mxu0 %v553
      %v889 = vpop.f32.mrf.mxu0
      %v890 = vadd.f32 %v333, %v889
      %v891 = vpop.f32.mrf.mxu0
      %v892 = vpop.f32.mrf.mxu0
      %v893 = vadd.f32 %v333, %v892
      %v894 = vpop.f32.mrf.mxu0
      %895 = vmatprep.mubr.bf16.mxu0 %v556
      %896 = vmatmul.mubr.bf16.gmra.mxu0 %v555
      %v897 = vpop.f32.mrf.mxu0
      %v898 = vadd.f32 %v333, %v897
      %v899 = vpop.f32.mrf.mxu0
      %v900 = vpop.f32.mrf.mxu0
      %v901 = vadd.f32 %v333, %v900
      %v902 = vpop.f32.mrf.mxu0
      %903 = vmatprep.mubr.bf16.mxu0 %v558
      %904 = vmatmul.mubr.bf16.gmra.mxu0 %v557
      %v905 = vpop.f32.mrf.mxu0
      %v906 = vadd.f32 %v333, %v905
      %v907 = vpop.f32.mrf.mxu0
      %v908 = vpop.f32.mrf.mxu0
      %v909 = vadd.f32 %v333, %v908
      %v910 = vpop.f32.mrf.mxu0
      %911 = vmatprep.mubr.bf16.mxu0 %v560
      %912 = vmatmul.mubr.bf16.gmra.mxu0 %v559
      %v913 = vpop.f32.mrf.mxu0
      %v914 = vadd.f32 %v333, %v913
      %v915 = vpop.f32.mrf.mxu0
      %v916 = vpop.f32.mrf.mxu0
      %v917 = vadd.f32 %v333, %v916
      %v918 = vpop.f32.mrf.mxu0
      %919 = vmatprep.mubr.bf16.mxu0 %v562
      %920 = vmatmul.mubr.bf16.gmra.mxu0 %v561
      %v921 = vpop.f32.mrf.mxu0
      %v922 = vadd.f32 %v333, %v921
      %v923 = vpop.f32.mrf.mxu0
      %v924 = vpop.f32.mrf.mxu0
      %v925 = vadd.f32 %v333, %v924
      %v926 = vpop.f32.mrf.mxu0
      %927 = vmatprep.mubr.bf16.mxu0 %v564
      %928 = vmatmul.mubr.bf16.gmra.mxu0 %v563
      %v929 = vpop.f32.mrf.mxu0
      %v930 = vadd.f32 %v333, %v929
      %v931 = vpop.f32.mrf.mxu0
      %v932 = vpop.f32.mrf.mxu0
      %v933 = vadd.f32 %v333, %v932
      %v934 = vpop.f32.mrf.mxu0
      %935 = vmatprep.mubr.bf16.mxu0 %v566
      %936 = vmatmul.mubr.bf16.gmra.mxu0 %v565
      %v937 = vpop.f32.mrf.mxu0
      %v938 = vadd.f32 %v333, %v937
      %v939 = vpop.f32.mrf.mxu0
      %v940 = vpop.f32.mrf.mxu0
      %v941 = vadd.f32 %v333, %v940
      %v942 = vpop.f32.mrf.mxu0
      %943 = vmatprep.mubr.bf16.mxu0 %v568
      %944 = vmatmul.mubr.bf16.gmra.mxu0 %v567
      %v945 = vpop.f32.mrf.mxu0
      %v946 = vadd.f32 %v333, %v945
      %v947 = vpop.f32.mrf.mxu0
      %v948 = vpop.f32.mrf.mxu0
      %v949 = vadd.f32 %v333, %v948
      %v950 = vpop.f32.mrf.mxu0
      %951 = vmatprep.mubr.bf16.mxu0 %v570
      %952 = vmatmul.mubr.bf16.gmra.mxu0 %v569
      %v953 = vpop.f32.mrf.mxu0
      %v954 = vadd.f32 %v333, %v953
      %v955 = vpop.f32.mrf.mxu0
      %v956 = vpop.f32.mrf.mxu0
      %v957 = vadd.f32 %v333, %v956
      %v958 = vpop.f32.mrf.mxu0
      %959 = vmatprep.mubr.bf16.mxu0 %v572
      %960 = vmatmul.mubr.bf16.gmra.mxu0 %v571
      %v961 = vpop.f32.mrf.mxu0
      %v962 = vadd.f32 %v333, %v961
      %v963 = vpop.f32.mrf.mxu0
      %v964 = vpop.f32.mrf.mxu0
      %v965 = vadd.f32 %v333, %v964
      %v966 = vpop.f32.mrf.mxu0
      %967 = vmatprep.mubr.bf16.mxu0 %v574
      %968 = vmatmul.mubr.bf16.gmra.mxu0 %v573
      %v969 = vpop.f32.mrf.mxu0
      %v970 = vadd.f32 %v333, %v969
      %v971 = vpop.f32.mrf.mxu0
      %v972 = vpop.f32.mrf.mxu0
      %v973 = vadd.f32 %v333, %v972
      %v974 = vpop.f32.mrf.mxu0
      %975 = vmatprep.mubr.bf16.mxu0 %v576
      %976 = vmatmul.mubr.bf16.gmra.mxu0 %v575
      %v977 = vpop.f32.mrf.mxu0
      %v978 = vadd.f32 %v333, %v977
      %v979 = vpop.f32.mrf.mxu0
      %v980 = vpop.f32.mrf.mxu0
      %v981 = vadd.f32 %v333, %v980
      %v982 = vpop.f32.mrf.mxu0
      %983 = vmatprep.mubr.bf16.mxu0 %v578
      %984 = vmatmul.mubr.bf16.gmra.mxu0 %v577
      %v985 = vpop.f32.mrf.mxu0
      %v986 = vadd.f32 %v333, %v985
      %v987 = vpop.f32.mrf.mxu0
      %v988 = vpop.f32.mrf.mxu0
      %v989 = vadd.f32 %v333, %v988
      %v990 = vpop.f32.mrf.mxu0
      %991 = vmatprep.mubr.bf16.mxu0 %v580
      %992 = vmatmul.mubr.bf16.gmra.mxu0 %v579
      %v993 = vpop.f32.mrf.mxu0
      %v994 = vadd.f32 %v333, %v993
      %v995 = vpop.f32.mrf.mxu0
      %v996 = vpop.f32.mrf.mxu0
      %v997 = vadd.f32 %v333, %v996
      %v998 = vpop.f32.mrf.mxu0
      %999 = vmatprep.mubr.bf16.mxu0 %v582
      %1000 = vmatmul.mubr.bf16.gmra.mxu0 %v581
      %v1001 = vpop.f32.mrf.mxu0
      %v1002 = vadd.f32 %v333, %v1001
      %v1003 = vpop.f32.mrf.mxu0
      %v1004 = vpop.f32.mrf.mxu0
      %v1005 = vadd.f32 %v333, %v1004
      %v1006 = vpop.f32.mrf.mxu0
      %1007 = vmatprep.mubr.bf16.mxu0 %v584
      %1008 = vmatmul.mubr.bf16.gmra.mxu0 %v583
      %v1009 = vpop.f32.mrf.mxu0
      %v1010 = vadd.f32 %v333, %v1009
      %v1011 = vpop.f32.mrf.mxu0
      %v1012 = vpop.f32.mrf.mxu0
      %v1013 = vadd.f32 %v333, %v1012
      %v1014 = vpop.f32.mrf.mxu0
      %1015 = vmatprep.mubr.bf16.mxu0 %v586
      %1016 = vmatmul.mubr.bf16.gmra.mxu0 %v585
      %v1017 = vpop.f32.mrf.mxu0
      %v1018 = vadd.f32 %v333, %v1017
      %v1019 = vpop.f32.mrf.mxu0
      %v1020 = vpop.f32.mrf.mxu0
      %v1021 = vadd.f32 %v333, %v1020
      %v1022 = vpop.f32.mrf.mxu0
      %1023 = vmatprep.mubr.bf16.mxu0 %v588
      %1024 = vmatmul.mubr.bf16.gmra.mxu0 %v587
      %v1025 = vpop.f32.mrf.mxu0
      %v1026 = vadd.f32 %v333, %v1025
      %v1027 = vpop.f32.mrf.mxu0
      %v1028 = vpop.f32.mrf.mxu0
      %v1029 = vadd.f32 %v333, %v1028
      %v1030 = vpop.f32.mrf.mxu0
      %1031 = vmatprep.mubr.bf16.mxu0 %v590
      %1032 = vmatmul.mubr.bf16.gmra.mxu0 %v589
      %v1033 = vpop.f32.mrf.mxu0
      %v1034 = vadd.f32 %v333, %v1033
      %v1035 = vpop.f32.mrf.mxu0
      %v1036 = vpop.f32.mrf.mxu0
      %v1037 = vadd.f32 %v333, %v1036
      %v1038 = vpop.f32.mrf.mxu0
      %1039 = vdwg.mxu0
      %v1040 = vmax.f32 %v786, 0.0
      %v1041 = vmax.f32 %v789, 0.0
      %v1042 = vmax.f32 %v794, 0.0
      %v1043 = vmax.f32 %v797, 0.0
      %v1044 = vmax.f32 %v802, 0.0
      %v1045 = vmax.f32 %v805, 0.0
      %v1046 = vmax.f32 %v810, 0.0
      %v1047 = vmax.f32 %v813, 0.0
      %v1048 = vmax.f32 %v818, 0.0
      %v1049 = vmax.f32 %v821, 0.0
      %v1050 = vmax.f32 %v826, 0.0
      %v1051 = vmax.f32 %v829, 0.0
      %v1052 = vmax.f32 %v834, 0.0
      %v1053 = vmax.f32 %v837, 0.0
      %v1054 = vmax.f32 %v842, 0.0
      %v1055 = vmax.f32 %v845, 0.0
      %v1056 = vmax.f32 %v850, 0.0
      %v1057 = vmax.f32 %v853, 0.0
      %v1058 = vmax.f32 %v858, 0.0
      %v1059 = vmax.f32 %v861, 0.0
      %v1060 = vmax.f32 %v866, 0.0
      %v1061 = vmax.f32 %v869, 0.0
      %v1062 = vmax.f32 %v874, 0.0
      %v1063 = vmax.f32 %v877, 0.0
      %v1064 = vmax.f32 %v882, 0.0
      %v1065 = vmax.f32 %v885, 0.0
      %v1066 = vmax.f32 %v890, 0.0
      %v1067 = vmax.f32 %v893, 0.0
      %v1068 = vmax.f32 %v898, 0.0
      %v1069 = vmax.f32 %v901, 0.0
      %v1070 = vmax.f32 %v906, 0.0
      %v1071 = vmax.f32 %v909, 0.0
      %v1072 = vmax.f32 %v914, 0.0
      %v1073 = vmax.f32 %v917, 0.0
      %v1074 = vmax.f32 %v922, 0.0
      %v1075 = vmax.f32 %v925, 0.0
      %v1076 = vmax.f32 %v930, 0.0
      %v1077 = vmax.f32 %v933, 0.0
      %v1078 = vmax.f32 %v938, 0.0
      %v1079 = vmax.f32 %v941, 0.0
      %v1080 = vmax.f32 %v946, 0.0
      %v1081 = vmax.f32 %v949, 0.0
      %v1082 = vmax.f32 %v954, 0.0
      %v1083 = vmax.f32 %v957, 0.0
      %v1084 = vmax.f32 %v962, 0.0
      %v1085 = vmax.f32 %v965, 0.0
      %v1086 = vmax.f32 %v970, 0.0
      %v1087 = vmax.f32 %v973, 0.0
      %v1088 = vmax.f32 %v978, 0.0
      %v1089 = vmax.f32 %v981, 0.0
      %v1090 = vmax.f32 %v986, 0.0
      %v1091 = vmax.f32 %v989, 0.0
      %v1092 = vmax.f32 %v994, 0.0
      %v1093 = vmax.f32 %v997, 0.0
      %v1094 = vmax.f32 %v1002, 0.0
      %v1095 = vmax.f32 %v1005, 0.0
      %v1096 = vmax.f32 %v1010, 0.0
      %v1097 = vmax.f32 %v1013, 0.0
      %v1098 = vmax.f32 %v1018, 0.0
      %v1099 = vmax.f32 %v1021, 0.0
      %v1100 = vmax.f32 %v1026, 0.0
      %v1101 = vmax.f32 %v1029, 0.0
      %v1102 = vmax.f32 %v1034, 0.0
      %v1103 = vmax.f32 %v1037, 0.0
      %v1104 = vpack.c.bf16 %v1041, %v1040
      %v1105 = vpack.c.bf16 %v1043, %v1042
      %v1106 = vpack.c.bf16 %v1045, %v1044
      %v1107 = vpack.c.bf16 %v1047, %v1046
      %v1108 = vpack.c.bf16 %v1049, %v1048
      %v1109 = vpack.c.bf16 %v1051, %v1050
      %v1110 = vpack.c.bf16 %v1053, %v1052
      %v1111 = vpack.c.bf16 %v1055, %v1054
      %v1112 = vpack.c.bf16 %v1057, %v1056
      %v1113 = vpack.c.bf16 %v1059, %v1058
      %v1114 = vpack.c.bf16 %v1061, %v1060
      %v1115 = vpack.c.bf16 %v1063, %v1062
      %v1116 = vpack.c.bf16 %v1065, %v1064
      %v1117 = vpack.c.bf16 %v1067, %v1066
      %v1118 = vpack.c.bf16 %v1069, %v1068
      %v1119 = vpack.c.bf16 %v1071, %v1070
      %v1120 = vpack.c.bf16 %v1073, %v1072
      %v1121 = vpack.c.bf16 %v1075, %v1074
      %v1122 = vpack.c.bf16 %v1077, %v1076
      %v1123 = vpack.c.bf16 %v1079, %v1078
      %v1124 = vpack.c.bf16 %v1081, %v1080
      %v1125 = vpack.c.bf16 %v1083, %v1082
      %v1126 = vpack.c.bf16 %v1085, %v1084
      %v1127 = vpack.c.bf16 %v1087, %v1086
      %v1128 = vpack.c.bf16 %v1089, %v1088
      %v1129 = vpack.c.bf16 %v1091, %v1090
      %v1130 = vpack.c.bf16 %v1093, %v1092
      %v1131 = vpack.c.bf16 %v1095, %v1094
      %v1132 = vpack.c.bf16 %v1097, %v1096
      %v1133 = vpack.c.bf16 %v1099, %v1098
      %v1134 = vpack.c.bf16 %v1101, %v1100
      %v1135 = vpack.c.bf16 %v1103, %v1102
      %v1136 = vld [vmem:[%s3] sm:$0xf]
      %v1137 = vld [vmem:[%s3 + $0x4] sm:$0xf]
      %v1138 = vld [vmem:[%s3 + $0x8] sm:$0xf]
      %v1139 = vld [vmem:[%s3 + $0xc] sm:$0xf]
      %v1140 = vld [vmem:[%s3 + $0x10] sm:$0xf]
      %v1141 = vld [vmem:[%s3 + $0x14] sm:$0xf]
      %v1142 = vld [vmem:[%s3 + $0x18] sm:$0xf]
      %v1143 = vld [vmem:[%s3 + $0x1c] sm:$0xf]
      %v1144 = vld [vmem:[%s3 + $0x20] sm:$0xf]
      %v1145 = vld [vmem:[%s3 + $0x24] sm:$0xf]
      %v1146 = vld [vmem:[%s3 + $0x28] sm:$0xf]
      %v1147 = vld [vmem:[%s3 + $0x2c] sm:$0xf]
      %v1148 = vld [vmem:[%s3 + $0x30] sm:$0xf]
      %v1149 = vld [vmem:[%s3 + $0x34] sm:$0xf]
      %v1150 = vld [vmem:[%s3 + $0x38] sm:$0xf]
      %v1151 = vld [vmem:[%s3 + $0x3c] sm:$0xf]
      %v1152 = vld [vmem:[%s4] sm:$0x1]
      %v1154 = vlaneseq
      %v1155 = vshrl.u32 %v1154, 7
      %v1156 = vsub.s32 0, %v1155
      %v1157 = vrot.slane %v1152, %v1156
      %v1175 = vunpack.c.l.b16 %v1136
      %v1176 = vunpack.c.l.b16 %v1137
      %v1177 = vunpack.c.l.b16 %v1138
      %v1178 = vunpack.c.l.b16 %v1139
      %v1179 = vunpack.c.l.b16 %v1140
      %v1180 = vunpack.c.l.b16 %v1141
      %v1181 = vunpack.c.l.b16 %v1142
      %v1182 = vunpack.c.l.b16 %v1143
      %v1183 = vunpack.c.l.b16 %v1144
      %v1184 = vunpack.c.l.b16 %v1145
      %v1185 = vunpack.c.l.b16 %v1146
      %v1186 = vunpack.c.l.b16 %v1147
      %v1187 = vunpack.c.l.b16 %v1148
      %v1188 = vunpack.c.l.b16 %v1149
      %v1189 = vunpack.c.l.b16 %v1150
      %v1190 = vunpack.c.l.b16 %v1151
      %v1191 = vpack.c.b16 %v1176, %v1175
      %v1192 = vpack.c.b16 %v1178, %v1177
      %v1193 = vpack.c.b16 %v1180, %v1179
      %v1194 = vpack.c.b16 %v1182, %v1181
      %v1195 = vpack.c.b16 %v1184, %v1183
      %v1196 = vpack.c.b16 %v1186, %v1185
      %v1197 = vpack.c.b16 %v1188, %v1187
      %v1198 = vpack.c.b16 %v1190, %v1189
      %1207 = vmatprep.subr.bf16.mxu0 0
      %1208 = vmatpush1.bf16.msra.mxu0 %v1198
      %1209 = vmatprep.subr.bf16.mxu0 0
      %1210 = vmatpush1.bf16.msra.mxu0 %v1197
      %1211 = vmatprep.subr.bf16.mxu0 0
      %1212 = vmatpush1.bf16.msra.mxu0 %v1196
      %1213 = vmatprep.subr.bf16.mxu0 0
      %1214 = vmatpush1.bf16.msra.mxu0 %v1195
      %1215 = vmatprep.subr.bf16.mxu0 0
      %1216 = vmatpush1.bf16.msra.mxu0 %v1194
      %1217 = vmatprep.subr.bf16.mxu0 0
      %1218 = vmatpush1.bf16.msra.mxu0 %v1193
      %1219 = vmatprep.subr.bf16.mxu0 0
      %1220 = vmatpush1.bf16.msra.mxu0 %v1192
      %1221 = vmatprep.subr.bf16.mxu0 0
      %1222 = vmatpush1.bf16.msra.mxu0 %v1191
      %1223 = vmatprep.subr.bf16.mxu0 0
      %1224 = vmatpush2.bf16.msra.mxu0 0
      %1225 = vmatprep.subr.bf16.mxu0 0
      %1226 = vmatpush2.bf16.msra.mxu0 0
      %1227 = vmatprep.subr.bf16.mxu0 0
      %1228 = vmatpush2.bf16.msra.mxu0 0
      %1229 = vmatprep.subr.bf16.mxu0 0
      %1230 = vmatpush2.bf16.msra.mxu0 0
      %1231 = vmatprep.subr.bf16.mxu0 0
      %1232 = vmatpush2.bf16.msra.mxu0 0
      %1233 = vmatprep.subr.bf16.mxu0 0
      %1234 = vmatpush2.bf16.msra.mxu0 0
      %1235 = vmatprep.subr.bf16.mxu0 0
      %1236 = vmatpush2.bf16.msra.mxu0 0
      %1237 = vmatprep.subr.bf16.mxu0 0
      %1238 = vmatpush2.bf16.msra.mxu0 0
      %1239 = vmatprep.mubr.bf16.mxu0 0
      %1240 = vmatmul.mubr.bf16.gmra.mxu0 %v1104
      %v1241 = vpop.f32.mrf.mxu0
      %v1242 = vadd.f32 %v1157, %v1241
      %v1243 = vpop.f32.mrf.mxu0
      %v1244 = vpop.f32.mrf.mxu0
      %v1245 = vadd.f32 %v1157, %v1244
      %v1246 = vpop.f32.mrf.mxu0
      %1247 = vmatprep.mubr.bf16.mxu0 0
      %1248 = vmatmul.mubr.bf16.gmra.mxu0 %v1105
      %v1249 = vpop.f32.mrf.mxu0
      %v1250 = vadd.f32 %v1157, %v1249
      %v1251 = vpop.f32.mrf.mxu0
      %v1252 = vpop.f32.mrf.mxu0
      %v1253 = vadd.f32 %v1157, %v1252
      %v1254 = vpop.f32.mrf.mxu0
      %1255 = vmatprep.mubr.bf16.mxu0 0
      %1256 = vmatmul.mubr.bf16.gmra.mxu0 %v1106
      %v1257 = vpop.f32.mrf.mxu0
      %v1258 = vadd.f32 %v1157, %v1257
      %v1259 = vpop.f32.mrf.mxu0
      %v1260 = vpop.f32.mrf.mxu0
      %v1261 = vadd.f32 %v1157, %v1260
      %v1262 = vpop.f32.mrf.mxu0
      %1263 = vmatprep.mubr.bf16.mxu0 0
      %1264 = vmatmul.mubr.bf16.gmra.mxu0 %v1107
      %v1265 = vpop.f32.mrf.mxu0
      %v1266 = vadd.f32 %v1157, %v1265
      %v1267 = vpop.f32.mrf.mxu0
      %v1268 = vpop.f32.mrf.mxu0
      %v1269 = vadd.f32 %v1157, %v1268
      %v1270 = vpop.f32.mrf.mxu0
      %1271 = vmatprep.mubr.bf16.mxu0 0
      %1272 = vmatmul.mubr.bf16.gmra.mxu0 %v1108
      %v1273 = vpop.f32.mrf.mxu0
      %v1274 = vadd.f32 %v1157, %v1273
      %v1275 = vpop.f32.mrf.mxu0
      %v1276 = vpop.f32.mrf.mxu0
      %v1277 = vadd.f32 %v1157, %v1276
      %v1278 = vpop.f32.mrf.mxu0
      %1279 = vmatprep.mubr.bf16.mxu0 0
      %1280 = vmatmul.mubr.bf16.gmra.mxu0 %v1109
      %v1281 = vpop.f32.mrf.mxu0
      %v1282 = vadd.f32 %v1157, %v1281
      %v1283 = vpop.f32.mrf.mxu0
      %v1284 = vpop.f32.mrf.mxu0
      %v1285 = vadd.f32 %v1157, %v1284
      %v1286 = vpop.f32.mrf.mxu0
      %1287 = vmatprep.mubr.bf16.mxu0 0
      %1288 = vmatmul.mubr.bf16.gmra.mxu0 %v1110
      %v1289 = vpop.f32.mrf.mxu0
      %v1290 = vadd.f32 %v1157, %v1289
      %v1291 = vpop.f32.mrf.mxu0
      %v1292 = vpop.f32.mrf.mxu0
      %v1293 = vadd.f32 %v1157, %v1292
      %v1294 = vpop.f32.mrf.mxu0
      %1295 = vmatprep.mubr.bf16.mxu0 0
      %1296 = vmatmul.mubr.bf16.gmra.mxu0 %v1111
      %v1297 = vpop.f32.mrf.mxu0
      %v1298 = vadd.f32 %v1157, %v1297
      %v1299 = vpop.f32.mrf.mxu0
      %v1300 = vpop.f32.mrf.mxu0
      %v1301 = vadd.f32 %v1157, %v1300
      %v1302 = vpop.f32.mrf.mxu0
      %1303 = vmatprep.mubr.bf16.mxu0 0
      %1304 = vmatmul.mubr.bf16.gmra.mxu0 %v1112
      %v1305 = vpop.f32.mrf.mxu0
      %v1306 = vadd.f32 %v1157, %v1305
      %v1307 = vpop.f32.mrf.mxu0
      %v1308 = vpop.f32.mrf.mxu0
      %v1309 = vadd.f32 %v1157, %v1308
      %v1310 = vpop.f32.mrf.mxu0
      %1311 = vmatprep.mubr.bf16.mxu0 0
      %1312 = vmatmul.mubr.bf16.gmra.mxu0 %v1113
      %v1313 = vpop.f32.mrf.mxu0
      %v1314 = vadd.f32 %v1157, %v1313
      %v1315 = vpop.f32.mrf.mxu0
      %v1316 = vpop.f32.mrf.mxu0
      %v1317 = vadd.f32 %v1157, %v1316
      %v1318 = vpop.f32.mrf.mxu0
      %1319 = vmatprep.mubr.bf16.mxu0 0
      %1320 = vmatmul.mubr.bf16.gmra.mxu0 %v1114
      %v1321 = vpop.f32.mrf.mxu0
      %v1322 = vadd.f32 %v1157, %v1321
      %v1323 = vpop.f32.mrf.mxu0
      %v1324 = vpop.f32.mrf.mxu0
      %v1325 = vadd.f32 %v1157, %v1324
      %v1326 = vpop.f32.mrf.mxu0
      %1327 = vmatprep.mubr.bf16.mxu0 0
      %1328 = vmatmul.mubr.bf16.gmra.mxu0 %v1115
      %v1329 = vpop.f32.mrf.mxu0
      %v1330 = vadd.f32 %v1157, %v1329
      %v1331 = vpop.f32.mrf.mxu0
      %v1332 = vpop.f32.mrf.mxu0
      %v1333 = vadd.f32 %v1157, %v1332
      %v1334 = vpop.f32.mrf.mxu0
      %1335 = vmatprep.mubr.bf16.mxu0 0
      %1336 = vmatmul.mubr.bf16.gmra.mxu0 %v1116
      %v1337 = vpop.f32.mrf.mxu0
      %v1338 = vadd.f32 %v1157, %v1337
      %v1339 = vpop.f32.mrf.mxu0
      %v1340 = vpop.f32.mrf.mxu0
      %v1341 = vadd.f32 %v1157, %v1340
      %v1342 = vpop.f32.mrf.mxu0
      %1343 = vmatprep.mubr.bf16.mxu0 0
      %1344 = vmatmul.mubr.bf16.gmra.mxu0 %v1117
      %v1345 = vpop.f32.mrf.mxu0
      %v1346 = vadd.f32 %v1157, %v1345
      %v1347 = vpop.f32.mrf.mxu0
      %v1348 = vpop.f32.mrf.mxu0
      %v1349 = vadd.f32 %v1157, %v1348
      %v1350 = vpop.f32.mrf.mxu0
      %1351 = vmatprep.mubr.bf16.mxu0 0
      %1352 = vmatmul.mubr.bf16.gmra.mxu0 %v1118
      %v1353 = vpop.f32.mrf.mxu0
      %v1354 = vadd.f32 %v1157, %v1353
      %v1355 = vpop.f32.mrf.mxu0
      %v1356 = vpop.f32.mrf.mxu0
      %v1357 = vadd.f32 %v1157, %v1356
      %v1358 = vpop.f32.mrf.mxu0
      %1359 = vmatprep.mubr.bf16.mxu0 0
      %1360 = vmatmul.mubr.bf16.gmra.mxu0 %v1119
      %v1361 = vpop.f32.mrf.mxu0
      %v1362 = vadd.f32 %v1157, %v1361
      %v1363 = vpop.f32.mrf.mxu0
      %v1364 = vpop.f32.mrf.mxu0
      %v1365 = vadd.f32 %v1157, %v1364
      %v1366 = vpop.f32.mrf.mxu0
      %1367 = vmatprep.mubr.bf16.mxu0 0
      %1368 = vmatmul.mubr.bf16.gmra.mxu0 %v1120
      %v1369 = vpop.f32.mrf.mxu0
      %v1370 = vadd.f32 %v1157, %v1369
      %v1371 = vpop.f32.mrf.mxu0
      %v1372 = vpop.f32.mrf.mxu0
      %v1373 = vadd.f32 %v1157, %v1372
      %v1374 = vpop.f32.mrf.mxu0
      %1375 = vmatprep.mubr.bf16.mxu0 0
      %1376 = vmatmul.mubr.bf16.gmra.mxu0 %v1121
      %v1377 = vpop.f32.mrf.mxu0
      %v1378 = vadd.f32 %v1157, %v1377
      %v1379 = vpop.f32.mrf.mxu0
      %v1380 = vpop.f32.mrf.mxu0
      %v1381 = vadd.f32 %v1157, %v1380
      %v1382 = vpop.f32.mrf.mxu0
      %1383 = vmatprep.mubr.bf16.mxu0 0
      %1384 = vmatmul.mubr.bf16.gmra.mxu0 %v1122
      %v1385 = vpop.f32.mrf.mxu0
      %v1386 = vadd.f32 %v1157, %v1385
      %v1387 = vpop.f32.mrf.mxu0
      %v1388 = vpop.f32.mrf.mxu0
      %v1389 = vadd.f32 %v1157, %v1388
      %v1390 = vpop.f32.mrf.mxu0
      %1391 = vmatprep.mubr.bf16.mxu0 0
      %1392 = vmatmul.mubr.bf16.gmra.mxu0 %v1123
      %v1393 = vpop.f32.mrf.mxu0
      %v1394 = vadd.f32 %v1157, %v1393
      %v1395 = vpop.f32.mrf.mxu0
      %v1396 = vpop.f32.mrf.mxu0
      %v1397 = vadd.f32 %v1157, %v1396
      %v1398 = vpop.f32.mrf.mxu0
      %1399 = vmatprep.mubr.bf16.mxu0 0
      %1400 = vmatmul.mubr.bf16.gmra.mxu0 %v1124
      %v1401 = vpop.f32.mrf.mxu0
      %v1402 = vadd.f32 %v1157, %v1401
      %v1403 = vpop.f32.mrf.mxu0
      %v1404 = vpop.f32.mrf.mxu0
      %v1405 = vadd.f32 %v1157, %v1404
      %v1406 = vpop.f32.mrf.mxu0
      %1407 = vmatprep.mubr.bf16.mxu0 0
      %1408 = vmatmul.mubr.bf16.gmra.mxu0 %v1125
      %v1409 = vpop.f32.mrf.mxu0
      %v1410 = vadd.f32 %v1157, %v1409
      %v1411 = vpop.f32.mrf.mxu0
      %v1412 = vpop.f32.mrf.mxu0
      %v1413 = vadd.f32 %v1157, %v1412
      %v1414 = vpop.f32.mrf.mxu0
      %1415 = vmatprep.mubr.bf16.mxu0 0
      %1416 = vmatmul.mubr.bf16.gmra.mxu0 %v1126
      %v1417 = vpop.f32.mrf.mxu0
      %v1418 = vadd.f32 %v1157, %v1417
      %v1419 = vpop.f32.mrf.mxu0
      %v1420 = vpop.f32.mrf.mxu0
      %v1421 = vadd.f32 %v1157, %v1420
      %v1422 = vpop.f32.mrf.mxu0
      %1423 = vmatprep.mubr.bf16.mxu0 0
      %1424 = vmatmul.mubr.bf16.gmra.mxu0 %v1127
      %v1425 = vpop.f32.mrf.mxu0
      %v1426 = vadd.f32 %v1157, %v1425
      %v1427 = vpop.f32.mrf.mxu0
      %v1428 = vpop.f32.mrf.mxu0
      %v1429 = vadd.f32 %v1157, %v1428
      %v1430 = vpop.f32.mrf.mxu0
      %1431 = vmatprep.mubr.bf16.mxu0 0
      %1432 = vmatmul.mubr.bf16.gmra.mxu0 %v1128
      %v1433 = vpop.f32.mrf.mxu0
      %v1434 = vadd.f32 %v1157, %v1433
      %v1435 = vpop.f32.mrf.mxu0
      %v1436 = vpop.f32.mrf.mxu0
      %v1437 = vadd.f32 %v1157, %v1436
      %v1438 = vpop.f32.mrf.mxu0
      %1439 = vmatprep.mubr.bf16.mxu0 0
      %1440 = vmatmul.mubr.bf16.gmra.mxu0 %v1129
      %v1441 = vpop.f32.mrf.mxu0
      %v1442 = vadd.f32 %v1157, %v1441
      %v1443 = vpop.f32.mrf.mxu0
      %v1444 = vpop.f32.mrf.mxu0
      %v1445 = vadd.f32 %v1157, %v1444
      %v1446 = vpop.f32.mrf.mxu0
      %1447 = vmatprep.mubr.bf16.mxu0 0
      %1448 = vmatmul.mubr.bf16.gmra.mxu0 %v1130
      %v1449 = vpop.f32.mrf.mxu0
      %v1450 = vadd.f32 %v1157, %v1449
      %v1451 = vpop.f32.mrf.mxu0
      %v1452 = vpop.f32.mrf.mxu0
      %v1453 = vadd.f32 %v1157, %v1452
      %v1454 = vpop.f32.mrf.mxu0
      %1455 = vmatprep.mubr.bf16.mxu0 0
      %1456 = vmatmul.mubr.bf16.gmra.mxu0 %v1131
      %v1457 = vpop.f32.mrf.mxu0
      %v1458 = vadd.f32 %v1157, %v1457
      %v1459 = vpop.f32.mrf.mxu0
      %v1460 = vpop.f32.mrf.mxu0
      %v1461 = vadd.f32 %v1157, %v1460
      %v1462 = vpop.f32.mrf.mxu0
      %1463 = vmatprep.mubr.bf16.mxu0 0
      %1464 = vmatmul.mubr.bf16.gmra.mxu0 %v1132
      %v1465 = vpop.f32.mrf.mxu0
      %v1466 = vadd.f32 %v1157, %v1465
      %v1467 = vpop.f32.mrf.mxu0
      %v1468 = vpop.f32.mrf.mxu0
      %v1469 = vadd.f32 %v1157, %v1468
      %v1470 = vpop.f32.mrf.mxu0
      %1471 = vmatprep.mubr.bf16.mxu0 0
      %1472 = vmatmul.mubr.bf16.gmra.mxu0 %v1133
      %v1473 = vpop.f32.mrf.mxu0
      %v1474 = vadd.f32 %v1157, %v1473
      %v1475 = vpop.f32.mrf.mxu0
      %v1476 = vpop.f32.mrf.mxu0
      %v1477 = vadd.f32 %v1157, %v1476
      %v1478 = vpop.f32.mrf.mxu0
      %1479 = vmatprep.mubr.bf16.mxu0 0
      %1480 = vmatmul.mubr.bf16.gmra.mxu0 %v1134
      %v1481 = vpop.f32.mrf.mxu0
      %v1482 = vadd.f32 %v1157, %v1481
      %v1483 = vpop.f32.mrf.mxu0
      %v1484 = vpop.f32.mrf.mxu0
      %v1485 = vadd.f32 %v1157, %v1484
      %v1486 = vpop.f32.mrf.mxu0
      %1487 = vmatprep.mubr.bf16.mxu0 0
      %1488 = vmatmul.mubr.bf16.gmra.mxu0 %v1135
      %v1489 = vpop.f32.mrf.mxu0
      %v1490 = vadd.f32 %v1157, %v1489
      %v1491 = vpop.f32.mrf.mxu0
      %v1492 = vpop.f32.mrf.mxu0
      %v1493 = vadd.f32 %v1157, %v1492
      %v1494 = vpop.f32.mrf.mxu0
      %1495 = vdwg.mxu0
      %v1496 = vmax.f32 %v1242, 0.0
      %v1497 = vmax.f32 %v1245, 0.0
      %v1498 = vmax.f32 %v1250, 0.0
      %v1499 = vmax.f32 %v1253, 0.0
      %v1500 = vmax.f32 %v1258, 0.0
      %v1501 = vmax.f32 %v1261, 0.0
      %v1502 = vmax.f32 %v1266, 0.0
      %v1503 = vmax.f32 %v1269, 0.0
      %v1504 = vmax.f32 %v1274, 0.0
      %v1505 = vmax.f32 %v1277, 0.0
      %v1506 = vmax.f32 %v1282, 0.0
      %v1507 = vmax.f32 %v1285, 0.0
      %v1508 = vmax.f32 %v1290, 0.0
      %v1509 = vmax.f32 %v1293, 0.0
      %v1510 = vmax.f32 %v1298, 0.0
      %v1511 = vmax.f32 %v1301, 0.0
      %v1512 = vmax.f32 %v1306, 0.0
      %v1513 = vmax.f32 %v1309, 0.0
      %v1514 = vmax.f32 %v1314, 0.0
      %v1515 = vmax.f32 %v1317, 0.0
      %v1516 = vmax.f32 %v1322, 0.0
      %v1517 = vmax.f32 %v1325, 0.0
      %v1518 = vmax.f32 %v1330, 0.0
      %v1519 = vmax.f32 %v1333, 0.0
      %v1520 = vmax.f32 %v1338, 0.0
      %v1521 = vmax.f32 %v1341, 0.0
      %v1522 = vmax.f32 %v1346, 0.0
      %v1523 = vmax.f32 %v1349, 0.0
      %v1524 = vmax.f32 %v1354, 0.0
      %v1525 = vmax.f32 %v1357, 0.0
      %v1526 = vmax.f32 %v1362, 0.0
      %v1527 = vmax.f32 %v1365, 0.0
      %v1528 = vmax.f32 %v1370, 0.0
      %v1529 = vmax.f32 %v1373, 0.0
      %v1530 = vmax.f32 %v1378, 0.0
      %v1531 = vmax.f32 %v1381, 0.0
      %v1532 = vmax.f32 %v1386, 0.0
      %v1533 = vmax.f32 %v1389, 0.0
      %v1534 = vmax.f32 %v1394, 0.0
      %v1535 = vmax.f32 %v1397, 0.0
      %v1536 = vmax.f32 %v1402, 0.0
      %v1537 = vmax.f32 %v1405, 0.0
      %v1538 = vmax.f32 %v1410, 0.0
      %v1539 = vmax.f32 %v1413, 0.0
      %v1540 = vmax.f32 %v1418, 0.0
      %v1541 = vmax.f32 %v1421, 0.0
      %v1542 = vmax.f32 %v1426, 0.0
      %v1543 = vmax.f32 %v1429, 0.0
      %v1544 = vmax.f32 %v1434, 0.0
      %v1545 = vmax.f32 %v1437, 0.0
      %v1546 = vmax.f32 %v1442, 0.0
      %v1547 = vmax.f32 %v1445, 0.0
      %v1548 = vmax.f32 %v1450, 0.0
      %v1549 = vmax.f32 %v1453, 0.0
      %v1550 = vmax.f32 %v1458, 0.0
      %v1551 = vmax.f32 %v1461, 0.0
      %v1552 = vmax.f32 %v1466, 0.0
      %v1553 = vmax.f32 %v1469, 0.0
      %v1554 = vmax.f32 %v1474, 0.0
      %v1555 = vmax.f32 %v1477, 0.0
      %v1556 = vmax.f32 %v1482, 0.0
      %v1557 = vmax.f32 %v1485, 0.0
      %v1558 = vmax.f32 %v1490, 0.0
      %v1559 = vmax.f32 %v1493, 0.0
      %1560 = vst [vmem:[%s229] sm:$0xff] %v1496
      %1561 = vst [vmem:[%s229 + $0x8] sm:$0xff] %v1497
      %1562 = vst [vmem:[%s229 + $0x10] sm:$0xff] %v1498
      %1563 = vst [vmem:[%s229 + $0x18] sm:$0xff] %v1499
      %1564 = vst [vmem:[%s229 + $0x20] sm:$0xff] %v1500
      %1565 = vst [vmem:[%s229 + $0x28] sm:$0xff] %v1501
      %1566 = vst [vmem:[%s229 + $0x30] sm:$0xff] %v1502
      %1567 = vst [vmem:[%s229 + $0x38] sm:$0xff] %v1503
      %1568 = vst [vmem:[%s229 + $0x40] sm:$0xff] %v1504
      %1569 = vst [vmem:[%s229 + $0x48] sm:$0xff] %v1505
      %1570 = vst [vmem:[%s229 + $0x50] sm:$0xff] %v1506
      %1571 = vst [vmem:[%s229 + $0x58] sm:$0xff] %v1507
      %1572 = vst [vmem:[%s229 + $0x60] sm:$0xff] %v1508
      %1573 = vst [vmem:[%s229 + $0x68] sm:$0xff] %v1509
      %1574 = vst [vmem:[%s229 + $0x70] sm:$0xff] %v1510
      %1575 = vst [vmem:[%s229 + $0x78] sm:$0xff] %v1511
      %1576 = vst [vmem:[%s229 + $0x80] sm:$0xff] %v1512
      %1577 = vst [vmem:[%s229 + $0x88] sm:$0xff] %v1513
      %1578 = vst [vmem:[%s229 + $0x90] sm:$0xff] %v1514
      %1579 = vst [vmem:[%s229 + $0x98] sm:$0xff] %v1515
      %1580 = vst [vmem:[%s229 + $0xa0] sm:$0xff] %v1516
      %1581 = vst [vmem:[%s229 + $0xa8] sm:$0xff] %v1517
      %1582 = vst [vmem:[%s229 + $0xb0] sm:$0xff] %v1518
      %1583 = vst [vmem:[%s229 + $0xb8] sm:$0xff] %v1519
      %1584 = vst [vmem:[%s229 + $0xc0] sm:$0xff] %v1520
      %1585 = vst [vmem:[%s229 + $0xc8] sm:$0xff] %v1521
      %1586 = vst [vmem:[%s229 + $0xd0] sm:$0xff] %v1522
      %1587 = vst [vmem:[%s229 + $0xd8] sm:$0xff] %v1523
      %1588 = vst [vmem:[%s229 + $0xe0] sm:$0xff] %v1524
      %1589 = vst [vmem:[%s229 + $0xe8] sm:$0xff] %v1525
      %1590 = vst [vmem:[%s229 + $0xf0] sm:$0xff] %v1526
      %1591 = vst [vmem:[%s229 + $0xf8] sm:$0xff] %v1527
      %1592 = vst [vmem:[%s229 + $0x100] sm:$0xff] %v1528
      %1593 = vst [vmem:[%s229 + $0x108] sm:$0xff] %v1529
      %1594 = vst [vmem:[%s229 + $0x110] sm:$0xff] %v1530
      %1595 = vst [vmem:[%s229 + $0x118] sm:$0xff] %v1531
      %1596 = vst [vmem:[%s229 + $0x120] sm:$0xff] %v1532
      %1597 = vst [vmem:[%s229 + $0x128] sm:$0xff] %v1533
      %1598 = vst [vmem:[%s229 + $0x130] sm:$0xff] %v1534
      %1599 = vst [vmem:[%s229 + $0x138] sm:$0xff] %v1535
      %1600 = vst [vmem:[%s229 + $0x140] sm:$0xff] %v1536
      %1601 = vst [vmem:[%s229 + $0x148] sm:$0xff] %v1537
      %1602 = vst [vmem:[%s229 + $0x150] sm:$0xff] %v1538
      %1603 = vst [vmem:[%s229 + $0x158] sm:$0xff] %v1539
      %1604 = vst [vmem:[%s229 + $0x160] sm:$0xff] %v1540
      %1605 = vst [vmem:[%s229 + $0x168] sm:$0xff] %v1541
      %1606 = vst [vmem:[%s229 + $0x170] sm:$0xff] %v1542
      %1607 = vst [vmem:[%s229 + $0x178] sm:$0xff] %v1543
      %1608 = vst [vmem:[%s229 + $0x180] sm:$0xff] %v1544
      %1609 = vst [vmem:[%s229 + $0x188] sm:$0xff] %v1545
      %1610 = vst [vmem:[%s229 + $0x190] sm:$0xff] %v1546
      %1611 = vst [vmem:[%s229 + $0x198] sm:$0xff] %v1547
      %1612 = vst [vmem:[%s229 + $0x1a0] sm:$0xff] %v1548
      %1613 = vst [vmem:[%s229 + $0x1a8] sm:$0xff] %v1549
      %1614 = vst [vmem:[%s229 + $0x1b0] sm:$0xff] %v1550
      %1615 = vst [vmem:[%s229 + $0x1b8] sm:$0xff] %v1551
      %1616 = vst [vmem:[%s229 + $0x1c0] sm:$0xff] %v1552
      %1617 = vst [vmem:[%s229 + $0x1c8] sm:$0xff] %v1553
      %1618 = vst [vmem:[%s229 + $0x1d0] sm:$0xff] %v1554
      %1619 = vst [vmem:[%s229 + $0x1d8] sm:$0xff] %v1555
      %1620 = vst [vmem:[%s229 + $0x1e0] sm:$0xff] %v1556
      %1621 = vst [vmem:[%s229 + $0x1e8] sm:$0xff] %v1557
      %1622 = vst [vmem:[%s229 + $0x1f0] sm:$0xff] %v1558
      %1623 = vst [vmem:[%s229 + $0x1f8] sm:$0xff] %v1559
      %s1624 = smul.u32 64, %s16
      %p1625 = scmp.lt.s32.totalorder %s1624, 127
      %s1626 = scalar_select %p1625, %s1624, 127
      %s1627 = smul.addr %s1626, 8
      %s1628 = scalar_lea.vmem %s5, %s1627
      // Predicated region
      $region41: #{srcnn_forward.2} parent=39 // pred_check
        %p1629 = pneg %p144
      $region42: #{srcnn_forward.2} parent=39 // pred_check_branch
        %1631 = sbr.rel (%p1629) target = $region44
      $region43: #{srcnn_forward.2} parent=39 // pred_region
        %s1632 = smul.u32 64, %s16
      $region44: #{srcnn_forward.2} parent=39 // pred_fallthru
        _
    $region40: #{srcnn_forward.2} parent=5 // pred_fallthru
      _
    %p1633 = scmp.le.s32.totalorder 2, %s11
    // Predicated region
    $region45: #{srcnn_forward.2} parent=5 // pred_check
      %p1634 = pneg %p1633
    $region46: #{srcnn_forward.2} parent=5 // pred_check_branch
      %1636 = sbr.rel (%p1634) target = $region48
    $region47: #{srcnn_forward.2} parent=5 // pred_region
      %s1637 = ssub.s32 %s11, 2
      // Predicated region
      $region49: #{srcnn_forward.2} parent=47 // pred_check
        %p1638 = pneg %p150
      $region50: #{srcnn_forward.2} parent=47 // pred_check_branch
        %1640 = sbr.rel (%p1638) target = $region52
      $region51: #{srcnn_forward.2} parent=47 // pred_region
        %s1641 = smul.u32 64, %s17
        %p1642 = scmp.lt.s32.totalorder %s1641, 127
        %s1643 = scalar_select %p1642, %s1641, 127
        %s1644 = smul.addr %s1643, 8
        %s1645 = scalar_lea.vmem %s5, %s1644
      $region52: #{srcnn_forward.2} parent=47 // pred_fallthru
        _
    $region48: #{srcnn_forward.2} parent=5 // pred_fallthru
      _
  $region6: #{srcnn_forward.2} parent=0 // loop_footer
    %s15 = sadd.s32 1, %s11
  $region7: #{srcnn_forward.2} parent=0 // loop_footer_branch
    %10 = sbr.rel target = $region3
  $region8: #{srcnn_forward.2} parent=0 // loop_exit
    _

// kernel: srcnn_forward.3
$region0: #{srcnn_forward.3}
  #allocation0 [shape = 'u32[]', space=smem, size = 0x4, offset = 0x4, fixed_abs, tag = 'smem constant byte address 0x4 - core index']
  #allocation1 [shape = 'u32[144,128]{1,0:T(1,128)}', space=vmem, size = 0x12000, scoped, tag = 'internal scratch']
  %s0 = inlined_call_operand.vmem [shape: bf16[1536,896], index: 0, kind: input, shape index: {}]
  %s1 = inlined_call_operand.vmem [shape: bf16[896,128], index: 1, kind: input, shape index: {}]
  %s2 = inlined_call_operand.vmem [shape: f32[1,128], index: 2, kind: input, shape index: {}]
  %s3 = inlined_call_operand.vmem [shape: f32[1536,128], index: 3, kind: output, shape index: {}]
  %s4 = sld [smem:[#allocation0]]
  $region45: #{srcnn_forward.3} parent=0
    _
  %s6 = ssub.s32 1, %s4
  %s7 = scalar_select 0, %s6, %s4
  loop: start=0, step=1, limit=5
  $region2: #{srcnn_forward.3} parent=0 // loop_pre_header
    _
  $region3: #{srcnn_forward.3} parent=0 // loop_header
    %s9 = sphi 0, %s13
    %p10 = scmp.ge.s32.totalorder %s9, 5
    %s19 = sphi 0, %s21
    %s22 = sphi 0, %s19
    %s23 = sphi 0, %s22
    %s39 = sphi 0, %s23
    %s43 = sphi 0, %s43
    %s45 = sphi 0, %s43
    %s46 = sphi 0, %s45
    %s60 = sphi 0, %s46
    %s64 = sphi 0, %s64
    %s66 = sphi 0, %s64
    %s67 = sphi 0, %s66
    %s81 = sphi 0, %s67
    %s87 = sphi 0, %s89
    %s90 = sphi 0, %s87
    %s91 = sphi 0, %s90
    %s107 = sphi 0, %s91
  $region4: #{srcnn_forward.3} parent=0 // loop_header_branch
    %12 = sbr.rel (%p10) target = $region8
  $region5: #{srcnn_forward.3} parent=0 // loop_body
    %s14 = ssub.s32 %s9, 1
    %s15 = ssub.s32 %s9, 2
    %s16 = sadd.s32 %s9, 1
    %s17 = ssub.s32 %s9, %s16
    %p18 = scmp.eq.s32.totalorder %s17, 0
    %s20 = sadd.s32 %s19, 1
    %s21 = scalar_select %p18, %s19, %s20
    %p24 = pneg %p18
    %p25 = scmp.eq.s32.totalorder %s9, 2
    %p26 = por %p24, %p25
    %p27 = scmp.ne.s32.totalorder %s19, %s22
    %p28 = scmp.eq.s32.totalorder %s9, 0
    %p29 = por %p27, %p28
    %p30 = scmp.ne.s32.totalorder %s19, %s22
    %p31 = scmp.eq.s32.totalorder %s14, 2
    %p32 = por %p30, %p31
    %p33 = scmp.ne.s32.totalorder %s22, %s23
    %p34 = scmp.eq.s32.totalorder %s14, 0
    %p35 = por %p33, %p34
    %p36 = scmp.ne.s32.totalorder %s22, %s23
    %p37 = scmp.eq.s32.totalorder %s15, 2
    %p38 = por %p36, %p37
    %p40 = scmp.ne.s32.totalorder %s23, %s39
    %p41 = scmp.eq.s32.totalorder %s15, 0
    %p42 = por %p40, %p41
    %s44 = sadd.s32 %s43, 1
    %p47 = scmp.eq.s32.totalorder %s9, 2
    %p48 = scmp.ne.s32.totalorder %s43, %s45
    %p49 = scmp.eq.s32.totalorder %s9, 0
    %p50 = por %p48, %p49
    %p51 = scmp.ne.s32.totalorder %s43, %s45
    %p52 = scmp.eq.s32.totalorder %s14, 2
    %p53 = por %p51, %p52
    %p54 = scmp.ne.s32.totalorder %s45, %s46
    %p55 = scmp.eq.s32.totalorder %s14, 0
    %p56 = por %p54, %p55
    %p57 = scmp.ne.s32.totalorder %s45, %s46
    %p58 = scmp.eq.s32.totalorder %s15, 2
    %p59 = por %p57, %p58
    %p61 = scmp.ne.s32.totalorder %s46, %s60
    %p62 = scmp.eq.s32.totalorder %s15, 0
    %p63 = por %p61, %p62
    %s65 = sadd.s32 %s64, 1
    %p68 = scmp.eq.s32.totalorder %s9, 2
    %p69 = scmp.ne.s32.totalorder %s64, %s66
    %p70 = scmp.eq.s32.totalorder %s9, 0
    %p71 = por %p69, %p70
    %p72 = scmp.ne.s32.totalorder %s64, %s66
    %p73 = scmp.eq.s32.totalorder %s14, 2
    %p74 = por %p72, %p73
    %p75 = scmp.ne.s32.totalorder %s66, %s67
    %p76 = scmp.eq.s32.totalorder %s14, 0
    %p77 = por %p75, %p76
    %p78 = scmp.ne.s32.totalorder %s66, %s67
    %p79 = scmp.eq.s32.totalorder %s15, 2
    %p80 = por %p78, %p79
    %p82 = scmp.ne.s32.totalorder %s67, %s81
    %p83 = scmp.eq.s32.totalorder %s15, 0
    %p84 = por %p82, %p83
    %s85 = ssub.s32 %s9, %s16
    %p86 = scmp.eq.s32.totalorder %s85, 0
    %s88 = sadd.s32 %s87, 1
    %s89 = scalar_select %p86, %s87, %s88
    %p92 = pneg %p86
    %p93 = scmp.eq.s32.totalorder %s9, 2
    %p94 = por %p92, %p93
    %p95 = scmp.ne.s32.totalorder %s87, %s90
    %p96 = scmp.eq.s32.totalorder %s9, 0
    %p97 = por %p95, %p96
    %p98 = scmp.ne.s32.totalorder %s87, %s90
    %p99 = scmp.eq.s32.totalorder %s14, 2
    %p100 = por %p98, %p99
    %p101 = scmp.ne.s32.totalorder %s90, %s91
    %p102 = scmp.eq.s32.totalorder %s14, 0
    %p103 = por %p101, %p102
    %p104 = scmp.ne.s32.totalorder %s90, %s91
    %p105 = scmp.eq.s32.totalorder %s15, 2
    %p106 = por %p104, %p105
    %p108 = scmp.ne.s32.totalorder %s91, %s107
    %p109 = scmp.eq.s32.totalorder %s15, 0
    %p110 = por %p108, %p109
    %p111 = scmp.le.s32.totalorder 1, %s9
    %p112 = scmp.lt.s32.totalorder %s9, 4
    %p113 = pnand %p111, %p112
    %p114 = pneg %p113
    // Predicated region
    $region9: #{srcnn_forward.3} parent=5 // pred_check
      _
    $region10: #{srcnn_forward.3} parent=5 // pred_check_branch
      %116 = sbr.rel (%p113) target = $region12
    $region11: #{srcnn_forward.3} parent=5 // pred_region
      %s117 = ssub.s32 %s9, 1
      // Predicated region
      $region13: #{srcnn_forward.3} parent=11 // pred_check
        %p118 = pneg %p56
      $region14: #{srcnn_forward.3} parent=11 // pred_check_branch
        %120 = sbr.rel (%p118) target = $region16
      $region15: #{srcnn_forward.3} parent=11 // pred_region
        _
      $region16: #{srcnn_forward.3} parent=11 // pred_fallthru
        _
      // Predicated region
      $region17: #{srcnn_forward.3} parent=11 // pred_check
        %p121 = pneg %p77
      $region18: #{srcnn_forward.3} parent=11 // pred_check_branch
        %123 = sbr.rel (%p121) target = $region20
      $region19: #{srcnn_forward.3} parent=11 // pred_region
        _
      $region20: #{srcnn_forward.3} parent=11 // pred_fallthru
        _
    $region12: #{srcnn_forward.3} parent=5 // pred_fallthru
      _
    %p124 = scmp.lt.s32.totalorder %s9, 3
    // Predicated region
    $region21: #{srcnn_forward.3} parent=5 // pred_check
      %p125 = pneg %p124
    $region22: #{srcnn_forward.3} parent=5 // pred_check_branch
      %127 = sbr.rel (%p125) target = $region24
    $region23: #{srcnn_forward.3} parent=5 // pred_region
      // Predicated region
      $region25: #{srcnn_forward.3} parent=23 // pred_check
        %p128 = pneg %p29
      $region26: #{srcnn_forward.3} parent=23 // pred_check_branch
        %130 = sbr.rel (%p128) target = $region28
      $region27: #{srcnn_forward.3} parent=23 // pred_region
        %s131 = smul.u32 64, %s9
        %p132 = scmp.lt.s32.totalorder %s131, 191
        %s133 = scalar_select %p132, %s131, 191
        %s134 = smul.addr %s133, 7
        %s135 = smul.addr %s134, 4
        %s136 = scalar_lea.vmem %s0, %s135
        %s137 = smul.u32 64, %s9
      $region28: #{srcnn_forward.3} parent=23 // pred_fallthru
        _
    $region24: #{srcnn_forward.3} parent=5 // pred_fallthru
      _
    %p138 = scmp.le.s32.totalorder 1, %s9
    %p139 = scmp.lt.s32.totalorder %s9, 4
    %p140 = pnand %p138, %p139
    %p141 = pneg %p140
    // Predicated region
    $region29: #{srcnn_forward.3} parent=5 // pred_check
      _
    $region30: #{srcnn_forward.3} parent=5 // pred_check_branch
      %143 = sbr.rel (%p140) target = $region32
    $region31: #{srcnn_forward.3} parent=5 // pred_region
      %s144 = ssub.s32 %s9, 1
      %s145 = smul.u32 64, %s14
      %p146 = scmp.lt.s32.totalorder %s145, 191
      %s147 = scalar_select %p146, %s145, 191
      %s148 = smul.addr %s147, 7
      %s149 = smul.addr %s148, 4
      %s150 = scalar_lea.vmem %s0, %s149
      %p151 = pneg %p35
      %p152 = pneg %p32
      %p153 = pneg %p56
      %p154 = pneg %p53
      %p155 = pneg %p77
      %p156 = pneg %p74
      %p157 = pneg %p103
      %p158 = pneg %p100
      %s159 = smul.u32 64, %s14
      %p160 = scmp.lt.s32.totalorder %s159, 191
      %s161 = scalar_select %p160, %s159, 191
      %s162 = smul.addr %s161, 8
      %s163 = scalar_lea.vmem %s3, %s162
      %s164 = smul.u32 64, %s14
      %p165 = scmp.lt.s32.totalorder %s164, 191
      %s166 = scalar_select %p165, %s164, 191
      %s167 = smul.addr %s166, 7
      %s168 = smul.addr %s167, 4
      %s169 = scalar_lea.vmem %s0, %s168
      %s170 = smul.u32 64, %s14
      %s171 = smul.u32 64, %s14
      %p172 = scmp.lt.s32.totalorder %s171, 191
      %s173 = scalar_select %p172, %s171, 191
      %s174 = smul.addr %s173, 8
      %s175 = scalar_lea.vmem %s3, %s174
      %s176 = smul.u32 64, %s14
      %v178 = vld [vmem:[%s169] sm:$0xff]
      %v179 = vld [vmem:[%s169 + $0x8] sm:$0xff]
      %v180 = vld [vmem:[%s169 + $0x10] sm:$0xff]
      %v181 = vld [vmem:[%s169 + $0x18] sm:$0xf]
      %v182 = vld [vmem:[%s169 + $0x1c] sm:$0xff]
      %v183 = vld [vmem:[%s169 + $0x24] sm:$0xff]
      %v184 = vld [vmem:[%s169 + $0x2c] sm:$0xff]
      %v185 = vld [vmem:[%s169 + $0x34] sm:$0xf]
      %v186 = vld [vmem:[%s169 + $0x38] sm:$0xff]
      %v187 = vld [vmem:[%s169 + $0x40] sm:$0xff]
      %v188 = vld [vmem:[%s169 + $0x48] sm:$0xff]
      %v189 = vld [vmem:[%s169 + $0x50] sm:$0xf]
      %v190 = vld [vmem:[%s169 + $0x54] sm:$0xff]
      %v191 = vld [vmem:[%s169 + $0x5c] sm:$0xff]
      %v192 = vld [vmem:[%s169 + $0x64] sm:$0xff]
      %v193 = vld [vmem:[%s169 + $0x6c] sm:$0xf]
      %v194 = vld [vmem:[%s169 + $0x70] sm:$0xff]
      %v195 = vld [vmem:[%s169 + $0x78] sm:$0xff]
      %v196 = vld [vmem:[%s169 + $0x80] sm:$0xff]
      %v197 = vld [vmem:[%s169 + $0x88] sm:$0xf]
      %v198 = vld [vmem:[%s169 + $0x8c] sm:$0xff]
      %v199 = vld [vmem:[%s169 + $0x94] sm:$0xff]
      %v200 = vld [vmem:[%s169 + $0x9c] sm:$0xff]
      %v201 = vld [vmem:[%s169 + $0xa4] sm:$0xf]
      %v202 = vld [vmem:[%s169 + $0xa8] sm:$0xff]
      %v203 = vld [vmem:[%s169 + $0xb0] sm:$0xff]
      %v204 = vld [vmem:[%s169 + $0xb8] sm:$0xff]
      %v205 = vld [vmem:[%s169 + $0xc0] sm:$0xf]
      %v206 = vld [vmem:[%s169 + $0xc4] sm:$0xff]
      %v207 = vld [vmem:[%s169 + $0xcc] sm:$0xff]
      %v208 = vld [vmem:[%s169 + $0xd4] sm:$0xff]
      %v209 = vld [vmem:[%s169 + $0xdc] sm:$0xf]
      %v210 = vld [vmem:[%s169 + $0xe0] sm:$0xff]
      %v211 = vld [vmem:[%s169 + $0xe8] sm:$0xff]
      %v212 = vld [vmem:[%s169 + $0xf0] sm:$0xff]
      %v213 = vld [vmem:[%s169 + $0xf8] sm:$0xf]
      %v214 = vld [vmem:[%s169 + $0xfc] sm:$0xff]
      %v215 = vld [vmem:[%s169 + $0x104] sm:$0xff]
      %v216 = vld [vmem:[%s169 + $0x10c] sm:$0xff]
      %v217 = vld [vmem:[%s169 + $0x114] sm:$0xf]
      %v218 = vld [vmem:[%s169 + $0x118] sm:$0xff]
      %v219 = vld [vmem:[%s169 + $0x120] sm:$0xff]
      %v220 = vld [vmem:[%s169 + $0x128] sm:$0xff]
      %v221 = vld [vmem:[%s169 + $0x130] sm:$0xf]
      %v222 = vld [vmem:[%s169 + $0x134] sm:$0xff]
      %v223 = vld [vmem:[%s169 + $0x13c] sm:$0xff]
      %v224 = vld [vmem:[%s169 + $0x144] sm:$0xff]
      %v225 = vld [vmem:[%s169 + $0x14c] sm:$0xf]
      %v226 = vld [vmem:[%s169 + $0x150] sm:$0xff]
      %v227 = vld [vmem:[%s169 + $0x158] sm:$0xff]
      %v228 = vld [vmem:[%s169 + $0x160] sm:$0xff]
      %v229 = vld [vmem:[%s169 + $0x168] sm:$0xf]
      %v230 = vld [vmem:[%s169 + $0x16c] sm:$0xff]
      %v231 = vld [vmem:[%s169 + $0x174] sm:$0xff]
      %v232 = vld [vmem:[%s169 + $0x17c] sm:$0xff]
      %v233 = vld [vmem:[%s169 + $0x184] sm:$0xf]
      %v234 = vld [vmem:[%s169 + $0x188] sm:$0xff]
      %v235 = vld [vmem:[%s169 + $0x190] sm:$0xff]
      %v236 = vld [vmem:[%s169 + $0x198] sm:$0xff]
      %v237 = vld [vmem:[%s169 + $0x1a0] sm:$0xf]
      %v238 = vld [vmem:[%s169 + $0x1a4] sm:$0xff]
      %v239 = vld [vmem:[%s169 + $0x1ac] sm:$0xff]
      %v240 = vld [vmem:[%s169 + $0x1b4] sm:$0xff]
      %v241 = vld [vmem:[%s169 + $0x1bc] sm:$0xf]
      %v242 = vld [vmem:[%s169 + $0x1c0] sm:$0xff]
      %v243 = vld [vmem:[%s169 + $0x1c8] sm:$0xff]
      %v244 = vld [vmem:[%s169 + $0x1d0] sm:$0xff]
      %v245 = vld [vmem:[%s169 + $0x1d8] sm:$0xf]
      %v246 = vld [vmem:[%s169 + $0x1dc] sm:$0xff]
      %v247 = vld [vmem:[%s169 + $0x1e4] sm:$0xff]
      %v248 = vld [vmem:[%s169 + $0x1ec] sm:$0xff]
      %v249 = vld [vmem:[%s169 + $0x1f4] sm:$0xf]
      %v250 = vld [vmem:[%s169 + $0x1f8] sm:$0xff]
      %v251 = vld [vmem:[%s169 + $0x200] sm:$0xff]
      %v252 = vld [vmem:[%s169 + $0x208] sm:$0xff]
      %v253 = vld [vmem:[%s169 + $0x210] sm:$0xf]
      %v254 = vld [vmem:[%s169 + $0x214] sm:$0xff]
      %v255 = vld [vmem:[%s169 + $0x21c] sm:$0xff]
      %v256 = vld [vmem:[%s169 + $0x224] sm:$0xff]
      %v257 = vld [vmem:[%s169 + $0x22c] sm:$0xf]
      %v258 = vld [vmem:[%s169 + $0x230] sm:$0xff]
      %v259 = vld [vmem:[%s169 + $0x238] sm:$0xff]
      %v260 = vld [vmem:[%s169 + $0x240] sm:$0xff]
      %v261 = vld [vmem:[%s169 + $0x248] sm:$0xf]
      %v262 = vld [vmem:[%s169 + $0x24c] sm:$0xff]
      %v263 = vld [vmem:[%s169 + $0x254] sm:$0xff]
      %v264 = vld [vmem:[%s169 + $0x25c] sm:$0xff]
      %v265 = vld [vmem:[%s169 + $0x264] sm:$0xf]
      %v266 = vld [vmem:[%s169 + $0x268] sm:$0xff]
      %v267 = vld [vmem:[%s169 + $0x270] sm:$0xff]
      %v268 = vld [vmem:[%s169 + $0x278] sm:$0xff]
      %v269 = vld [vmem:[%s169 + $0x280] sm:$0xf]
      %v270 = vld [vmem:[%s169 + $0x284] sm:$0xff]
      %v271 = vld [vmem:[%s169 + $0x28c] sm:$0xff]
      %v272 = vld [vmem:[%s169 + $0x294] sm:$0xff]
      %v273 = vld [vmem:[%s169 + $0x29c] sm:$0xf]
      %v274 = vld [vmem:[%s169 + $0x2a0] sm:$0xff]
      %v275 = vld [vmem:[%s169 + $0x2a8] sm:$0xff]
      %v276 = vld [vmem:[%s169 + $0x2b0] sm:$0xff]
      %v277 = vld [vmem:[%s169 + $0x2b8] sm:$0xf]
      %v278 = vld [vmem:[%s169 + $0x2bc] sm:$0xff]
      %v279 = vld [vmem:[%s169 + $0x2c4] sm:$0xff]
      %v280 = vld [vmem:[%s169 + $0x2cc] sm:$0xff]
      %v281 = vld [vmem:[%s169 + $0x2d4] sm:$0xf]
      %v282 = vld [vmem:[%s169 + $0x2d8] sm:$0xff]
      %v283 = vld [vmem:[%s169 + $0x2e0] sm:$0xff]
      %v284 = vld [vmem:[%s169 + $0x2e8] sm:$0xff]
      %v285 = vld [vmem:[%s169 + $0x2f0] sm:$0xf]
      %v286 = vld [vmem:[%s169 + $0x2f4] sm:$0xff]
      %v287 = vld [vmem:[%s169 + $0x2fc] sm:$0xff]
      %v288 = vld [vmem:[%s169 + $0x304] sm:$0xff]
      %v289 = vld [vmem:[%s169 + $0x30c] sm:$0xf]
      %v290 = vld [vmem:[%s169 + $0x310] sm:$0xff]
      %v291 = vld [vmem:[%s169 + $0x318] sm:$0xff]
      %v292 = vld [vmem:[%s169 + $0x320] sm:$0xff]
      %v293 = vld [vmem:[%s169 + $0x328] sm:$0xf]
      %v294 = vld [vmem:[%s169 + $0x32c] sm:$0xff]
      %v295 = vld [vmem:[%s169 + $0x334] sm:$0xff]
      %v296 = vld [vmem:[%s169 + $0x33c] sm:$0xff]
      %v297 = vld [vmem:[%s169 + $0x344] sm:$0xf]
      %v298 = vld [vmem:[%s169 + $0x348] sm:$0xff]
      %v299 = vld [vmem:[%s169 + $0x350] sm:$0xff]
      %v300 = vld [vmem:[%s169 + $0x358] sm:$0xff]
      %v301 = vld [vmem:[%s169 + $0x360] sm:$0xf]
      %v302 = vld [vmem:[%s169 + $0x364] sm:$0xff]
      %v303 = vld [vmem:[%s169 + $0x36c] sm:$0xff]
      %v304 = vld [vmem:[%s169 + $0x374] sm:$0xff]
      %v305 = vld [vmem:[%s169 + $0x37c] sm:$0xf]
      %v306 = vld [vmem:[%s169 + $0x380] sm:$0xff]
      %v307 = vld [vmem:[%s169 + $0x388] sm:$0xff]
      %v308 = vld [vmem:[%s169 + $0x390] sm:$0xff]
      %v309 = vld [vmem:[%s169 + $0x398] sm:$0xf]
      %v310 = vld [vmem:[%s169 + $0x39c] sm:$0xff]
      %v311 = vld [vmem:[%s169 + $0x3a4] sm:$0xff]
      %v312 = vld [vmem:[%s169 + $0x3ac] sm:$0xff]
      %v313 = vld [vmem:[%s169 + $0x3b4] sm:$0xf]
      %v314 = vld [vmem:[%s169 + $0x3b8] sm:$0xff]
      %v315 = vld [vmem:[%s169 + $0x3c0] sm:$0xff]
      %v316 = vld [vmem:[%s169 + $0x3c8] sm:$0xff]
      %v317 = vld [vmem:[%s169 + $0x3d0] sm:$0xf]
      %v318 = vld [vmem:[%s169 + $0x3d4] sm:$0xff]
      %v319 = vld [vmem:[%s169 + $0x3dc] sm:$0xff]
      %v320 = vld [vmem:[%s169 + $0x3e4] sm:$0xff]
      %v321 = vld [vmem:[%s169 + $0x3ec] sm:$0xf]
      %v322 = vld [vmem:[%s169 + $0x3f0] sm:$0xff]
      %v323 = vld [vmem:[%s169 + $0x3f8] sm:$0xff]
      %v324 = vld [vmem:[%s169 + $0x400] sm:$0xff]
      %v325 = vld [vmem:[%s169 + $0x408] sm:$0xf]
      %v326 = vld [vmem:[%s169 + $0x40c] sm:$0xff]
      %v327 = vld [vmem:[%s169 + $0x414] sm:$0xff]
      %v328 = vld [vmem:[%s169 + $0x41c] sm:$0xff]
      %v329 = vld [vmem:[%s169 + $0x424] sm:$0xf]
      %v330 = vld [vmem:[%s169 + $0x428] sm:$0xff]
      %v331 = vld [vmem:[%s169 + $0x430] sm:$0xff]
      %v332 = vld [vmem:[%s169 + $0x438] sm:$0xff]
      %v333 = vld [vmem:[%s169 + $0x440] sm:$0xf]
      %v334 = vld [vmem:[%s169 + $0x444] sm:$0xff]
      %v335 = vld [vmem:[%s169 + $0x44c] sm:$0xff]
      %v336 = vld [vmem:[%s169 + $0x454] sm:$0xff]
      %v337 = vld [vmem:[%s169 + $0x45c] sm:$0xf]
      %v338 = vld [vmem:[%s169 + $0x460] sm:$0xff]
      %v339 = vld [vmem:[%s169 + $0x468] sm:$0xff]
      %v340 = vld [vmem:[%s169 + $0x470] sm:$0xff]
      %v341 = vld [vmem:[%s169 + $0x478] sm:$0xf]
      %v342 = vld [vmem:[%s169 + $0x47c] sm:$0xff]
      %v343 = vld [vmem:[%s169 + $0x484] sm:$0xff]
      %v344 = vld [vmem:[%s169 + $0x48c] sm:$0xff]
      %v345 = vld [vmem:[%s169 + $0x494] sm:$0xf]
      %v346 = vld [vmem:[%s169 + $0x498] sm:$0xff]
      %v347 = vld [vmem:[%s169 + $0x4a0] sm:$0xff]
      %v348 = vld [vmem:[%s169 + $0x4a8] sm:$0xff]
      %v349 = vld [vmem:[%s169 + $0x4b0] sm:$0xf]
      %v350 = vld [vmem:[%s169 + $0x4b4] sm:$0xff]
      %v351 = vld [vmem:[%s169 + $0x4bc] sm:$0xff]
      %v352 = vld [vmem:[%s169 + $0x4c4] sm:$0xff]
      %v353 = vld [vmem:[%s169 + $0x4cc] sm:$0xf]
      %v354 = vld [vmem:[%s169 + $0x4d0] sm:$0xff]
      %v355 = vld [vmem:[%s169 + $0x4d8] sm:$0xff]
      %v356 = vld [vmem:[%s169 + $0x4e0] sm:$0xff]
      %v357 = vld [vmem:[%s169 + $0x4e8] sm:$0xf]
      %v358 = vld [vmem:[%s169 + $0x4ec] sm:$0xff]
      %v359 = vld [vmem:[%s169 + $0x4f4] sm:$0xff]
      %v360 = vld [vmem:[%s169 + $0x4fc] sm:$0xff]
      %v361 = vld [vmem:[%s169 + $0x504] sm:$0xf]
      %v362 = vld [vmem:[%s169 + $0x508] sm:$0xff]
      %v363 = vld [vmem:[%s169 + $0x510] sm:$0xff]
      %v364 = vld [vmem:[%s169 + $0x518] sm:$0xff]
      %v365 = vld [vmem:[%s169 + $0x520] sm:$0xf]
      %v366 = vld [vmem:[%s169 + $0x524] sm:$0xff]
      %v367 = vld [vmem:[%s169 + $0x52c] sm:$0xff]
      %v368 = vld [vmem:[%s169 + $0x534] sm:$0xff]
      %v369 = vld [vmem:[%s169 + $0x53c] sm:$0xf]
      %v370 = vld [vmem:[%s169 + $0x540] sm:$0xff]
      %v371 = vld [vmem:[%s169 + $0x548] sm:$0xff]
      %v372 = vld [vmem:[%s169 + $0x550] sm:$0xff]
      %v373 = vld [vmem:[%s169 + $0x558] sm:$0xf]
      %v374 = vld [vmem:[%s169 + $0x55c] sm:$0xff]
      %v375 = vld [vmem:[%s169 + $0x564] sm:$0xff]
      %v376 = vld [vmem:[%s169 + $0x56c] sm:$0xff]
      %v377 = vld [vmem:[%s169 + $0x574] sm:$0xf]
      %v378 = vld [vmem:[%s169 + $0x578] sm:$0xff]
      %v379 = vld [vmem:[%s169 + $0x580] sm:$0xff]
      %v380 = vld [vmem:[%s169 + $0x588] sm:$0xff]
      %v381 = vld [vmem:[%s169 + $0x590] sm:$0xf]
      %v382 = vld [vmem:[%s169 + $0x594] sm:$0xff]
      %v383 = vld [vmem:[%s169 + $0x59c] sm:$0xff]
      %v384 = vld [vmem:[%s169 + $0x5a4] sm:$0xff]
      %v385 = vld [vmem:[%s169 + $0x5ac] sm:$0xf]
      %v386 = vld [vmem:[%s169 + $0x5b0] sm:$0xff]
      %v387 = vld [vmem:[%s169 + $0x5b8] sm:$0xff]
      %v388 = vld [vmem:[%s169 + $0x5c0] sm:$0xff]
      %v389 = vld [vmem:[%s169 + $0x5c8] sm:$0xf]
      %v390 = vld [vmem:[%s169 + $0x5cc] sm:$0xff]
      %v391 = vld [vmem:[%s169 + $0x5d4] sm:$0xff]
      %v392 = vld [vmem:[%s169 + $0x5dc] sm:$0xff]
      %v393 = vld [vmem:[%s169 + $0x5e4] sm:$0xf]
      %v394 = vld [vmem:[%s169 + $0x5e8] sm:$0xff]
      %v395 = vld [vmem:[%s169 + $0x5f0] sm:$0xff]
      %v396 = vld [vmem:[%s169 + $0x5f8] sm:$0xff]
      %v397 = vld [vmem:[%s169 + $0x600] sm:$0xf]
      %v398 = vld [vmem:[%s169 + $0x604] sm:$0xff]
      %v399 = vld [vmem:[%s169 + $0x60c] sm:$0xff]
      %v400 = vld [vmem:[%s169 + $0x614] sm:$0xff]
      %v401 = vld [vmem:[%s169 + $0x61c] sm:$0xf]
      %v402 = vld [vmem:[%s169 + $0x620] sm:$0xff]
      %v403 = vld [vmem:[%s169 + $0x628] sm:$0xff]
      %v404 = vld [vmem:[%s169 + $0x630] sm:$0xff]
      %v405 = vld [vmem:[%s169 + $0x638] sm:$0xf]
      %v406 = vld [vmem:[%s169 + $0x63c] sm:$0xff]
      %v407 = vld [vmem:[%s169 + $0x644] sm:$0xff]
      %v408 = vld [vmem:[%s169 + $0x64c] sm:$0xff]
      %v409 = vld [vmem:[%s169 + $0x654] sm:$0xf]
      %v410 = vld [vmem:[%s169 + $0x658] sm:$0xff]
      %v411 = vld [vmem:[%s169 + $0x660] sm:$0xff]
      %v412 = vld [vmem:[%s169 + $0x668] sm:$0xff]
      %v413 = vld [vmem:[%s169 + $0x670] sm:$0xf]
      %v414 = vld [vmem:[%s169 + $0x674] sm:$0xff]
      %v415 = vld [vmem:[%s169 + $0x67c] sm:$0xff]
      %v416 = vld [vmem:[%s169 + $0x684] sm:$0xff]
      %v417 = vld [vmem:[%s169 + $0x68c] sm:$0xf]
      %v418 = vld [vmem:[%s169 + $0x690] sm:$0xff]
      %v419 = vld [vmem:[%s169 + $0x698] sm:$0xff]
      %v420 = vld [vmem:[%s169 + $0x6a0] sm:$0xff]
      %v421 = vld [vmem:[%s169 + $0x6a8] sm:$0xf]
      %v422 = vld [vmem:[%s169 + $0x6ac] sm:$0xff]
      %v423 = vld [vmem:[%s169 + $0x6b4] sm:$0xff]
      %v424 = vld [vmem:[%s169 + $0x6bc] sm:$0xff]
      %v425 = vld [vmem:[%s169 + $0x6c4] sm:$0xf]
      %v426 = vld [vmem:[%s169 + $0x6c8] sm:$0xff]
      %v427 = vld [vmem:[%s169 + $0x6d0] sm:$0xff]
      %v428 = vld [vmem:[%s169 + $0x6d8] sm:$0xff]
      %v429 = vld [vmem:[%s169 + $0x6e0] sm:$0xf]
      %v430 = vld [vmem:[%s169 + $0x6e4] sm:$0xff]
      %v431 = vld [vmem:[%s169 + $0x6ec] sm:$0xff]
      %v432 = vld [vmem:[%s169 + $0x6f4] sm:$0xff]
      %v433 = vld [vmem:[%s169 + $0x6fc] sm:$0xf]
      %v434 = vld [vmem:[%s1] sm:$0xf]
      %v435 = vld [vmem:[%s1 + $0x4] sm:$0xf]
      %v436 = vld [vmem:[%s1 + $0x8] sm:$0xf]
      %v437 = vld [vmem:[%s1 + $0xc] sm:$0xf]
      %v438 = vld [vmem:[%s1 + $0x10] sm:$0xf]
      %v439 = vld [vmem:[%s1 + $0x14] sm:$0xf]
      %v440 = vld [vmem:[%s1 + $0x18] sm:$0xf]
      %v441 = vld [vmem:[%s1 + $0x1c] sm:$0xf]
      %v442 = vld [vmem:[%s1 + $0x20] sm:$0xf]
      %v443 = vld [vmem:[%s1 + $0x24] sm:$0xf]
      %v444 = vld [vmem:[%s1 + $0x28] sm:$0xf]
      %v445 = vld [vmem:[%s1 + $0x2c] sm:$0xf]
      %v446 = vld [vmem:[%s1 + $0x30] sm:$0xf]
      %v447 = vld [vmem:[%s1 + $0x34] sm:$0xf]
      %v448 = vld [vmem:[%s1 + $0x38] sm:$0xf]
      %v449 = vld [vmem:[%s1 + $0x3c] sm:$0xf]
      %v450 = vld [vmem:[%s1 + $0x40] sm:$0xf]
      %v451 = vld [vmem:[%s1 + $0x44] sm:$0xf]
      %v452 = vld [vmem:[%s1 + $0x48] sm:$0xf]
      %v453 = vld [vmem:[%s1 + $0x4c] sm:$0xf]
      %v454 = vld [vmem:[%s1 + $0x50] sm:$0xf]
      %v455 = vld [vmem:[%s1 + $0x54] sm:$0xf]
      %v456 = vld [vmem:[%s1 + $0x58] sm:$0xf]
      %v457 = vld [vmem:[%s1 + $0x5c] sm:$0xf]
      %v458 = vld [vmem:[%s1 + $0x60] sm:$0xf]
      %v459 = vld [vmem:[%s1 + $0x64] sm:$0xf]
      %v460 = vld [vmem:[%s1 + $0x68] sm:$0xf]
      %v461 = vld [vmem:[%s1 + $0x6c] sm:$0xf]
      %v462 = vld [vmem:[%s1 + $0x70] sm:$0xf]
      %v463 = vld [vmem:[%s1 + $0x74] sm:$0xf]
      %v464 = vld [vmem:[%s1 + $0x78] sm:$0xf]
      %v465 = vld [vmem:[%s1 + $0x7c] sm:$0xf]
      %v466 = vld [vmem:[%s1 + $0x80] sm:$0xf]
      %v467 = vld [vmem:[%s1 + $0x84] sm:$0xf]
      %v468 = vld [vmem:[%s1 + $0x88] sm:$0xf]
      %v469 = vld [vmem:[%s1 + $0x8c] sm:$0xf]
      %v470 = vld [vmem:[%s1 + $0x90] sm:$0xf]
      %v471 = vld [vmem:[%s1 + $0x94] sm:$0xf]
      %v472 = vld [vmem:[%s1 + $0x98] sm:$0xf]
      %v473 = vld [vmem:[%s1 + $0x9c] sm:$0xf]
      %v474 = vld [vmem:[%s1 + $0xa0] sm:$0xf]
      %v475 = vld [vmem:[%s1 + $0xa4] sm:$0xf]
      %v476 = vld [vmem:[%s1 + $0xa8] sm:$0xf]
      %v477 = vld [vmem:[%s1 + $0xac] sm:$0xf]
      %v478 = vld [vmem:[%s1 + $0xb0] sm:$0xf]
      %v479 = vld [vmem:[%s1 + $0xb4] sm:$0xf]
      %v480 = vld [vmem:[%s1 + $0xb8] sm:$0xf]
      %v481 = vld [vmem:[%s1 + $0xbc] sm:$0xf]
      %v482 = vld [vmem:[%s1 + $0xc0] sm:$0xf]
      %v483 = vld [vmem:[%s1 + $0xc4] sm:$0xf]
      %v484 = vld [vmem:[%s1 + $0xc8] sm:$0xf]
      %v485 = vld [vmem:[%s1 + $0xcc] sm:$0xf]
      %v486 = vld [vmem:[%s1 + $0xd0] sm:$0xf]
      %v487 = vld [vmem:[%s1 + $0xd4] sm:$0xf]
      %v488 = vld [vmem:[%s1 + $0xd8] sm:$0xf]
      %v489 = vld [vmem:[%s1 + $0xdc] sm:$0xf]
      %v490 = vld [vmem:[%s1 + $0xe0] sm:$0xf]
      %v491 = vld [vmem:[%s1 + $0xe4] sm:$0xf]
      %v492 = vld [vmem:[%s1 + $0xe8] sm:$0xf]
      %v493 = vld [vmem:[%s1 + $0xec] sm:$0xf]
      %v494 = vld [vmem:[%s1 + $0xf0] sm:$0xf]
      %v495 = vld [vmem:[%s1 + $0xf4] sm:$0xf]
      %v496 = vld [vmem:[%s1 + $0xf8] sm:$0xf]
      %v497 = vld [vmem:[%s1 + $0xfc] sm:$0xf]
      %v498 = vld [vmem:[%s1 + $0x100] sm:$0xf]
      %v499 = vld [vmem:[%s1 + $0x104] sm:$0xf]
      %v500 = vld [vmem:[%s1 + $0x108] sm:$0xf]
      %v501 = vld [vmem:[%s1 + $0x10c] sm:$0xf]
      %v502 = vld [vmem:[%s1 + $0x110] sm:$0xf]
      %v503 = vld [vmem:[%s1 + $0x114] sm:$0xf]
      %v504 = vld [vmem:[%s1 + $0x118] sm:$0xf]
      %v505 = vld [vmem:[%s1 + $0x11c] sm:$0xf]
      %v506 = vld [vmem:[%s1 + $0x120] sm:$0xf]
      %v507 = vld [vmem:[%s1 + $0x124] sm:$0xf]
      %v508 = vld [vmem:[%s1 + $0x128] sm:$0xf]
      %v509 = vld [vmem:[%s1 + $0x12c] sm:$0xf]
      %v510 = vld [vmem:[%s1 + $0x130] sm:$0xf]
      %v511 = vld [vmem:[%s1 + $0x134] sm:$0xf]
      %v512 = vld [vmem:[%s1 + $0x138] sm:$0xf]
      %v513 = vld [vmem:[%s1 + $0x13c] sm:$0xf]
      %v514 = vld [vmem:[%s1 + $0x140] sm:$0xf]
      %v515 = vld [vmem:[%s1 + $0x144] sm:$0xf]
      %v516 = vld [vmem:[%s1 + $0x148] sm:$0xf]
      %v517 = vld [vmem:[%s1 + $0x14c] sm:$0xf]
      %v518 = vld [vmem:[%s1 + $0x150] sm:$0xf]
      %v519 = vld [vmem:[%s1 + $0x154] sm:$0xf]
      %v520 = vld [vmem:[%s1 + $0x158] sm:$0xf]
      %v521 = vld [vmem:[%s1 + $0x15c] sm:$0xf]
      %v522 = vld [vmem:[%s1 + $0x160] sm:$0xf]
      %v523 = vld [vmem:[%s1 + $0x164] sm:$0xf]
      %v524 = vld [vmem:[%s1 + $0x168] sm:$0xf]
      %v525 = vld [vmem:[%s1 + $0x16c] sm:$0xf]
      %v526 = vld [vmem:[%s1 + $0x170] sm:$0xf]
      %v527 = vld [vmem:[%s1 + $0x174] sm:$0xf]
      %v528 = vld [vmem:[%s1 + $0x178] sm:$0xf]
      %v529 = vld [vmem:[%s1 + $0x17c] sm:$0xf]
      %v530 = vld [vmem:[%s1 + $0x180] sm:$0xf]
      %v531 = vld [vmem:[%s1 + $0x184] sm:$0xf]
      %v532 = vld [vmem:[%s1 + $0x188] sm:$0xf]
      %v533 = vld [vmem:[%s1 + $0x18c] sm:$0xf]
      %v534 = vld [vmem:[%s1 + $0x190] sm:$0xf]
      %v535 = vld [vmem:[%s1 + $0x194] sm:$0xf]
      %v536 = vld [vmem:[%s1 + $0x198] sm:$0xf]
      %v537 = vld [vmem:[%s1 + $0x19c] sm:$0xf]
      %v538 = vld [vmem:[%s1 + $0x1a0] sm:$0xf]
      %v539 = vld [vmem:[%s1 + $0x1a4] sm:$0xf]
      %v540 = vld [vmem:[%s1 + $0x1a8] sm:$0xf]
      %v541 = vld [vmem:[%s1 + $0x1ac] sm:$0xf]
      %v542 = vld [vmem:[%s1 + $0x1b0] sm:$0xf]
      %v543 = vld [vmem:[%s1 + $0x1b4] sm:$0xf]
      %v544 = vld [vmem:[%s1 + $0x1b8] sm:$0xf]
      %v545 = vld [vmem:[%s1 + $0x1bc] sm:$0xf]
      %v546 = vld [vmem:[%s2] sm:$0x1]
      %v548 = vlaneseq
      %v549 = vshrl.u32 %v548, 7
      %v550 = vsub.s32 0, %v549
      %v551 = vrot.slane %v546, %v550
      %v809 = vunpack.c.l.b16 %v178
      %v810 = vunpack.c.h.b16 %v178
      %v811 = vunpack.c.l.b16 %v179
      %v812 = vunpack.c.h.b16 %v179
      %v813 = vunpack.c.l.b16 %v180
      %v814 = vunpack.c.h.b16 %v180
      %v815 = vunpack.c.l.b16 %v181
      %v816 = vunpack.c.l.b16 %v182
      %v817 = vunpack.c.h.b16 %v182
      %v818 = vunpack.c.l.b16 %v183
      %v819 = vunpack.c.h.b16 %v183
      %v820 = vunpack.c.l.b16 %v184
      %v821 = vunpack.c.h.b16 %v184
      %v822 = vunpack.c.l.b16 %v185
      %v823 = vunpack.c.l.b16 %v186
      %v824 = vunpack.c.h.b16 %v186
      %v825 = vunpack.c.l.b16 %v187
      %v826 = vunpack.c.h.b16 %v187
      %v827 = vunpack.c.l.b16 %v188
      %v828 = vunpack.c.h.b16 %v188
      %v829 = vunpack.c.l.b16 %v189
      %v830 = vunpack.c.l.b16 %v190
      %v831 = vunpack.c.h.b16 %v190
      %v832 = vunpack.c.l.b16 %v191
      %v833 = vunpack.c.h.b16 %v191
      %v834 = vunpack.c.l.b16 %v192
      %v835 = vunpack.c.h.b16 %v192
      %v836 = vunpack.c.l.b16 %v193
      %v837 = vunpack.c.l.b16 %v194
      %v838 = vunpack.c.h.b16 %v194
      %v839 = vunpack.c.l.b16 %v195
      %v840 = vunpack.c.h.b16 %v195
      %v841 = vunpack.c.l.b16 %v196
      %v842 = vunpack.c.h.b16 %v196
      %v843 = vunpack.c.l.b16 %v197
      %v844 = vunpack.c.l.b16 %v198
      %v845 = vunpack.c.h.b16 %v198
      %v846 = vunpack.c.l.b16 %v199
      %v847 = vunpack.c.h.b16 %v199
      %v848 = vunpack.c.l.b16 %v200
      %v849 = vunpack.c.h.b16 %v200
      %v850 = vunpack.c.l.b16 %v201
      %v851 = vunpack.c.l.b16 %v202
      %v852 = vunpack.c.h.b16 %v202
      %v853 = vunpack.c.l.b16 %v203
      %v854 = vunpack.c.h.b16 %v203
      %v855 = vunpack.c.l.b16 %v204
      %v856 = vunpack.c.h.b16 %v204
      %v857 = vunpack.c.l.b16 %v205
      %v858 = vunpack.c.l.b16 %v206
      %v859 = vunpack.c.h.b16 %v206
      %v860 = vunpack.c.l.b16 %v207
      %v861 = vunpack.c.h.b16 %v207
      %v862 = vunpack.c.l.b16 %v208
      %v863 = vunpack.c.h.b16 %v208
      %v864 = vunpack.c.l.b16 %v209
      %v865 = vunpack.c.l.b16 %v210
      %v866 = vunpack.c.h.b16 %v210
      %v867 = vunpack.c.l.b16 %v211
      %v868 = vunpack.c.h.b16 %v211
      %v869 = vunpack.c.l.b16 %v212
      %v870 = vunpack.c.h.b16 %v212
      %v871 = vunpack.c.l.b16 %v213
      %v872 = vunpack.c.l.b16 %v214
      %v873 = vunpack.c.h.b16 %v214
      %v874 = vunpack.c.l.b16 %v215
      %v875 = vunpack.c.h.b16 %v215
      %v876 = vunpack.c.l.b16 %v216
      %v877 = vunpack.c.h.b16 %v216
      %v878 = vunpack.c.l.b16 %v217
      %v879 = vunpack.c.l.b16 %v218
      %v880 = vunpack.c.h.b16 %v218
      %v881 = vunpack.c.l.b16 %v219
      %v882 = vunpack.c.h.b16 %v219
      %v883 = vunpack.c.l.b16 %v220
      %v884 = vunpack.c.h.b16 %v220
      %v885 = vunpack.c.l.b16 %v221
      %v886 = vunpack.c.l.b16 %v222
      %v887 = vunpack.c.h.b16 %v222
      %v888 = vunpack.c.l.b16 %v223
      %v889 = vunpack.c.h.b16 %v223
      %v890 = vunpack.c.l.b16 %v224
      %v891 = vunpack.c.h.b16 %v224
      %v892 = vunpack.c.l.b16 %v225
      %v893 = vunpack.c.l.b16 %v226
      %v894 = vunpack.c.h.b16 %v226
      %v895 = vunpack.c.l.b16 %v227
      %v896 = vunpack.c.h.b16 %v227
      %v897 = vunpack.c.l.b16 %v228
      %v898 = vunpack.c.h.b16 %v228
      %v899 = vunpack.c.l.b16 %v229
      %v900 = vunpack.c.l.b16 %v230
      %v901 = vunpack.c.h.b16 %v230
      %v902 = vunpack.c.l.b16 %v231
      %v903 = vunpack.c.h.b16 %v231
      %v904 = vunpack.c.l.b16 %v232
      %v905 = vunpack.c.h.b16 %v232
      %v906 = vunpack.c.l.b16 %v233
      %v907 = vunpack.c.l.b16 %v234
      %v908 = vunpack.c.h.b16 %v234
      %v909 = vunpack.c.l.b16 %v235
      %v910 = vunpack.c.h.b16 %v235
      %v911 = vunpack.c.l.b16 %v236
      %v912 = vunpack.c.h.b16 %v236
      %v913 = vunpack.c.l.b16 %v237
      %v914 = vunpack.c.l.b16 %v238
      %v915 = vunpack.c.h.b16 %v238
      %v916 = vunpack.c.l.b16 %v239
      %v917 = vunpack.c.h.b16 %v239
      %v918 = vunpack.c.l.b16 %v240
      %v919 = vunpack.c.h.b16 %v240
      %v920 = vunpack.c.l.b16 %v241
      %v921 = vunpack.c.l.b16 %v242
      %v922 = vunpack.c.h.b16 %v242
      %v923 = vunpack.c.l.b16 %v243
      %v924 = vunpack.c.h.b16 %v243
      %v925 = vunpack.c.l.b16 %v244
      %v926 = vunpack.c.h.b16 %v244
      %v927 = vunpack.c.l.b16 %v245
      %v928 = vunpack.c.l.b16 %v246
      %v929 = vunpack.c.h.b16 %v246
      %v930 = vunpack.c.l.b16 %v247
      %v931 = vunpack.c.h.b16 %v247
      %v932 = vunpack.c.l.b16 %v248
      %v933 = vunpack.c.h.b16 %v248
      %v934 = vunpack.c.l.b16 %v249
      %v935 = vunpack.c.l.b16 %v250
      %v936 = vunpack.c.h.b16 %v250
      %v937 = vunpack.c.l.b16 %v251
      %v938 = vunpack.c.h.b16 %v251
      %v939 = vunpack.c.l.b16 %v252
      %v940 = vunpack.c.h.b16 %v252
      %v941 = vunpack.c.l.b16 %v253
      %v942 = vunpack.c.l.b16 %v254
      %v943 = vunpack.c.h.b16 %v254
      %v944 = vunpack.c.l.b16 %v255
      %v945 = vunpack.c.h.b16 %v255
      %v946 = vunpack.c.l.b16 %v256
      %v947 = vunpack.c.h.b16 %v256
      %v948 = vunpack.c.l.b16 %v257
      %v949 = vunpack.c.l.b16 %v258
      %v950 = vunpack.c.h.b16 %v258
      %v951 = vunpack.c.l.b16 %v259
      %v952 = vunpack.c.h.b16 %v259
      %v953 = vunpack.c.l.b16 %v260
      %v954 = vunpack.c.h.b16 %v260
      %v955 = vunpack.c.l.b16 %v261
      %v956 = vunpack.c.l.b16 %v262
      %v957 = vunpack.c.h.b16 %v262
      %v958 = vunpack.c.l.b16 %v263
      %v959 = vunpack.c.h.b16 %v263
      %v960 = vunpack.c.l.b16 %v264
      %v961 = vunpack.c.h.b16 %v264
      %v962 = vunpack.c.l.b16 %v265
      %v963 = vunpack.c.l.b16 %v266
      %v964 = vunpack.c.h.b16 %v266
      %v965 = vunpack.c.l.b16 %v267
      %v966 = vunpack.c.h.b16 %v267
      %v967 = vunpack.c.l.b16 %v268
      %v968 = vunpack.c.h.b16 %v268
      %v969 = vunpack.c.l.b16 %v269
      %v970 = vunpack.c.l.b16 %v270
      %v971 = vunpack.c.h.b16 %v270
      %v972 = vunpack.c.l.b16 %v271
      %v973 = vunpack.c.h.b16 %v271
      %v974 = vunpack.c.l.b16 %v272
      %v975 = vunpack.c.h.b16 %v272
      %v976 = vunpack.c.l.b16 %v273
      %v977 = vunpack.c.l.b16 %v274
      %v978 = vunpack.c.h.b16 %v274
      %v979 = vunpack.c.l.b16 %v275
      %v980 = vunpack.c.h.b16 %v275
      %v981 = vunpack.c.l.b16 %v276
      %v982 = vunpack.c.h.b16 %v276
      %v983 = vunpack.c.l.b16 %v277
      %v984 = vunpack.c.l.b16 %v278
      %v985 = vunpack.c.h.b16 %v278
      %v986 = vunpack.c.l.b16 %v279
      %v987 = vunpack.c.h.b16 %v279
      %v988 = vunpack.c.l.b16 %v280
      %v989 = vunpack.c.h.b16 %v280
      %v990 = vunpack.c.l.b16 %v281
      %v991 = vunpack.c.l.b16 %v282
      %v992 = vunpack.c.h.b16 %v282
      %v993 = vunpack.c.l.b16 %v283
      %v994 = vunpack.c.h.b16 %v283
      %v995 = vunpack.c.l.b16 %v284
      %v996 = vunpack.c.h.b16 %v284
      %v997 = vunpack.c.l.b16 %v285
      %v998 = vunpack.c.l.b16 %v286
      %v999 = vunpack.c.h.b16 %v286
      %v1000 = vunpack.c.l.b16 %v287
      %v1001 = vunpack.c.h.b16 %v287
      %v1002 = vunpack.c.l.b16 %v288
      %v1003 = vunpack.c.h.b16 %v288
      %v1004 = vunpack.c.l.b16 %v289
      %v1005 = vunpack.c.l.b16 %v290
      %v1006 = vunpack.c.h.b16 %v290
      %v1007 = vunpack.c.l.b16 %v291
      %v1008 = vunpack.c.h.b16 %v291
      %v1009 = vunpack.c.l.b16 %v292
      %v1010 = vunpack.c.h.b16 %v292
      %v1011 = vunpack.c.l.b16 %v293
      %v1012 = vunpack.c.l.b16 %v294
      %v1013 = vunpack.c.h.b16 %v294
      %v1014 = vunpack.c.l.b16 %v295
      %v1015 = vunpack.c.h.b16 %v295
      %v1016 = vunpack.c.l.b16 %v296
      %v1017 = vunpack.c.h.b16 %v296
      %v1018 = vunpack.c.l.b16 %v297
      %v1019 = vunpack.c.l.b16 %v298
      %v1020 = vunpack.c.h.b16 %v298
      %v1021 = vunpack.c.l.b16 %v299
      %v1022 = vunpack.c.h.b16 %v299
      %v1023 = vunpack.c.l.b16 %v300
      %v1024 = vunpack.c.h.b16 %v300
      %v1025 = vunpack.c.l.b16 %v301
      %v1026 = vunpack.c.l.b16 %v302
      %v1027 = vunpack.c.h.b16 %v302
      %v1028 = vunpack.c.l.b16 %v303
      %v1029 = vunpack.c.h.b16 %v303
      %v1030 = vunpack.c.l.b16 %v304
      %v1031 = vunpack.c.h.b16 %v304
      %v1032 = vunpack.c.l.b16 %v305
      %v1033 = vunpack.c.l.b16 %v306
      %v1034 = vunpack.c.h.b16 %v306
      %v1035 = vunpack.c.l.b16 %v307
      %v1036 = vunpack.c.h.b16 %v307
      %v1037 = vunpack.c.l.b16 %v308
      %v1038 = vunpack.c.h.b16 %v308
      %v1039 = vunpack.c.l.b16 %v309
      %v1040 = vunpack.c.l.b16 %v310
      %v1041 = vunpack.c.h.b16 %v310
      %v1042 = vunpack.c.l.b16 %v311
      %v1043 = vunpack.c.h.b16 %v311
      %v1044 = vunpack.c.l.b16 %v312
      %v1045 = vunpack.c.h.b16 %v312
      %v1046 = vunpack.c.l.b16 %v313
      %v1047 = vunpack.c.l.b16 %v314
      %v1048 = vunpack.c.h.b16 %v314
      %v1049 = vunpack.c.l.b16 %v315
      %v1050 = vunpack.c.h.b16 %v315
      %v1051 = vunpack.c.l.b16 %v316
      %v1052 = vunpack.c.h.b16 %v316
      %v1053 = vunpack.c.l.b16 %v317
      %v1054 = vunpack.c.l.b16 %v318
      %v1055 = vunpack.c.h.b16 %v318
      %v1056 = vunpack.c.l.b16 %v319
      %v1057 = vunpack.c.h.b16 %v319
      %v1058 = vunpack.c.l.b16 %v320
      %v1059 = vunpack.c.h.b16 %v320
      %v1060 = vunpack.c.l.b16 %v321
      %v1061 = vunpack.c.l.b16 %v322
      %v1062 = vunpack.c.h.b16 %v322
      %v1063 = vunpack.c.l.b16 %v323
      %v1064 = vunpack.c.h.b16 %v323
      %v1065 = vunpack.c.l.b16 %v324
      %v1066 = vunpack.c.h.b16 %v324
      %v1067 = vunpack.c.l.b16 %v325
      %v1068 = vunpack.c.l.b16 %v326
      %v1069 = vunpack.c.h.b16 %v326
      %v1070 = vunpack.c.l.b16 %v327
      %v1071 = vunpack.c.h.b16 %v327
      %v1072 = vunpack.c.l.b16 %v328
      %v1073 = vunpack.c.h.b16 %v328
      %v1074 = vunpack.c.l.b16 %v329
      %v1075 = vunpack.c.l.b16 %v330
      %v1076 = vunpack.c.h.b16 %v330
      %v1077 = vunpack.c.l.b16 %v331
      %v1078 = vunpack.c.h.b16 %v331
      %v1079 = vunpack.c.l.b16 %v332
      %v1080 = vunpack.c.h.b16 %v332
      %v1081 = vunpack.c.l.b16 %v333
      %v1082 = vunpack.c.l.b16 %v334
      %v1083 = vunpack.c.h.b16 %v334
      %v1084 = vunpack.c.l.b16 %v335
      %v1085 = vunpack.c.h.b16 %v335
      %v1086 = vunpack.c.l.b16 %v336
      %v1087 = vunpack.c.h.b16 %v336
      %v1088 = vunpack.c.l.b16 %v337
      %v1089 = vunpack.c.l.b16 %v338
      %v1090 = vunpack.c.h.b16 %v338
      %v1091 = vunpack.c.l.b16 %v339
      %v1092 = vunpack.c.h.b16 %v339
      %v1093 = vunpack.c.l.b16 %v340
      %v1094 = vunpack.c.h.b16 %v340
      %v1095 = vunpack.c.l.b16 %v341
      %v1096 = vunpack.c.l.b16 %v342
      %v1097 = vunpack.c.h.b16 %v342
      %v1098 = vunpack.c.l.b16 %v343
      %v1099 = vunpack.c.h.b16 %v343
      %v1100 = vunpack.c.l.b16 %v344
      %v1101 = vunpack.c.h.b16 %v344
      %v1102 = vunpack.c.l.b16 %v345
      %v1103 = vunpack.c.l.b16 %v346
      %v1104 = vunpack.c.h.b16 %v346
      %v1105 = vunpack.c.l.b16 %v347
      %v1106 = vunpack.c.h.b16 %v347
      %v1107 = vunpack.c.l.b16 %v348
      %v1108 = vunpack.c.h.b16 %v348
      %v1109 = vunpack.c.l.b16 %v349
      %v1110 = vunpack.c.l.b16 %v350
      %v1111 = vunpack.c.h.b16 %v350
      %v1112 = vunpack.c.l.b16 %v351
      %v1113 = vunpack.c.h.b16 %v351
      %v1114 = vunpack.c.l.b16 %v352
      %v1115 = vunpack.c.h.b16 %v352
      %v1116 = vunpack.c.l.b16 %v353
      %v1117 = vunpack.c.l.b16 %v354
      %v1118 = vunpack.c.h.b16 %v354
      %v1119 = vunpack.c.l.b16 %v355
      %v1120 = vunpack.c.h.b16 %v355
      %v1121 = vunpack.c.l.b16 %v356
      %v1122 = vunpack.c.h.b16 %v356
      %v1123 = vunpack.c.l.b16 %v357
      %v1124 = vunpack.c.l.b16 %v358
      %v1125 = vunpack.c.h.b16 %v358
      %v1126 = vunpack.c.l.b16 %v359
      %v1127 = vunpack.c.h.b16 %v359
      %v1128 = vunpack.c.l.b16 %v360
      %v1129 = vunpack.c.h.b16 %v360
      %v1130 = vunpack.c.l.b16 %v361
      %v1131 = vunpack.c.l.b16 %v362
      %v1132 = vunpack.c.h.b16 %v362
      %v1133 = vunpack.c.l.b16 %v363
      %v1134 = vunpack.c.h.b16 %v363
      %v1135 = vunpack.c.l.b16 %v364
      %v1136 = vunpack.c.h.b16 %v364
      %v1137 = vunpack.c.l.b16 %v365
      %v1138 = vunpack.c.l.b16 %v366
      %v1139 = vunpack.c.h.b16 %v366
      %v1140 = vunpack.c.l.b16 %v367
      %v1141 = vunpack.c.h.b16 %v367
      %v1142 = vunpack.c.l.b16 %v368
      %v1143 = vunpack.c.h.b16 %v368
      %v1144 = vunpack.c.l.b16 %v369
      %v1145 = vunpack.c.l.b16 %v370
      %v1146 = vunpack.c.h.b16 %v370
      %v1147 = vunpack.c.l.b16 %v371
      %v1148 = vunpack.c.h.b16 %v371
      %v1149 = vunpack.c.l.b16 %v372
      %v1150 = vunpack.c.h.b16 %v372
      %v1151 = vunpack.c.l.b16 %v373
      %v1152 = vunpack.c.l.b16 %v374
      %v1153 = vunpack.c.h.b16 %v374
      %v1154 = vunpack.c.l.b16 %v375
      %v1155 = vunpack.c.h.b16 %v375
      %v1156 = vunpack.c.l.b16 %v376
      %v1157 = vunpack.c.h.b16 %v376
      %v1158 = vunpack.c.l.b16 %v377
      %v1159 = vunpack.c.l.b16 %v378
      %v1160 = vunpack.c.h.b16 %v378
      %v1161 = vunpack.c.l.b16 %v379
      %v1162 = vunpack.c.h.b16 %v379
      %v1163 = vunpack.c.l.b16 %v380
      %v1164 = vunpack.c.h.b16 %v380
      %v1165 = vunpack.c.l.b16 %v381
      %v1166 = vunpack.c.l.b16 %v382
      %v1167 = vunpack.c.h.b16 %v382
      %v1168 = vunpack.c.l.b16 %v383
      %v1169 = vunpack.c.h.b16 %v383
      %v1170 = vunpack.c.l.b16 %v384
      %v1171 = vunpack.c.h.b16 %v384
      %v1172 = vunpack.c.l.b16 %v385
      %v1173 = vunpack.c.l.b16 %v386
      %v1174 = vunpack.c.h.b16 %v386
      %v1175 = vunpack.c.l.b16 %v387
      %v1176 = vunpack.c.h.b16 %v387
      %v1177 = vunpack.c.l.b16 %v388
      %v1178 = vunpack.c.h.b16 %v388
      %v1179 = vunpack.c.l.b16 %v389
      %v1180 = vunpack.c.l.b16 %v390
      %v1181 = vunpack.c.h.b16 %v390
      %v1182 = vunpack.c.l.b16 %v391
      %v1183 = vunpack.c.h.b16 %v391
      %v1184 = vunpack.c.l.b16 %v392
      %v1185 = vunpack.c.h.b16 %v392
      %v1186 = vunpack.c.l.b16 %v393
      %v1187 = vunpack.c.l.b16 %v394
      %v1188 = vunpack.c.h.b16 %v394
      %v1189 = vunpack.c.l.b16 %v395
      %v1190 = vunpack.c.h.b16 %v395
      %v1191 = vunpack.c.l.b16 %v396
      %v1192 = vunpack.c.h.b16 %v396
      %v1193 = vunpack.c.l.b16 %v397
      %v1194 = vunpack.c.l.b16 %v398
      %v1195 = vunpack.c.h.b16 %v398
      %v1196 = vunpack.c.l.b16 %v399
      %v1197 = vunpack.c.h.b16 %v399
      %v1198 = vunpack.c.l.b16 %v400
      %v1199 = vunpack.c.h.b16 %v400
      %v1200 = vunpack.c.l.b16 %v401
      %v1201 = vunpack.c.l.b16 %v402
      %v1202 = vunpack.c.h.b16 %v402
      %v1203 = vunpack.c.l.b16 %v403
      %v1204 = vunpack.c.h.b16 %v403
      %v1205 = vunpack.c.l.b16 %v404
      %v1206 = vunpack.c.h.b16 %v404
      %v1207 = vunpack.c.l.b16 %v405
      %v1208 = vunpack.c.l.b16 %v406
      %v1209 = vunpack.c.h.b16 %v406
      %v1210 = vunpack.c.l.b16 %v407
      %v1211 = vunpack.c.h.b16 %v407
      %v1212 = vunpack.c.l.b16 %v408
      %v1213 = vunpack.c.h.b16 %v408
      %v1214 = vunpack.c.l.b16 %v409
      %v1215 = vunpack.c.l.b16 %v410
      %v1216 = vunpack.c.h.b16 %v410
      %v1217 = vunpack.c.l.b16 %v411
      %v1218 = vunpack.c.h.b16 %v411
      %v1219 = vunpack.c.l.b16 %v412
      %v1220 = vunpack.c.h.b16 %v412
      %v1221 = vunpack.c.l.b16 %v413
      %v1222 = vunpack.c.l.b16 %v414
      %v1223 = vunpack.c.h.b16 %v414
      %v1224 = vunpack.c.l.b16 %v415
      %v1225 = vunpack.c.h.b16 %v415
      %v1226 = vunpack.c.l.b16 %v416
      %v1227 = vunpack.c.h.b16 %v416
      %v1228 = vunpack.c.l.b16 %v417
      %v1229 = vunpack.c.l.b16 %v418
      %v1230 = vunpack.c.h.b16 %v418
      %v1231 = vunpack.c.l.b16 %v419
      %v1232 = vunpack.c.h.b16 %v419
      %v1233 = vunpack.c.l.b16 %v420
      %v1234 = vunpack.c.h.b16 %v420
      %v1235 = vunpack.c.l.b16 %v421
      %v1236 = vunpack.c.l.b16 %v422
      %v1237 = vunpack.c.h.b16 %v422
      %v1238 = vunpack.c.l.b16 %v423
      %v1239 = vunpack.c.h.b16 %v423
      %v1240 = vunpack.c.l.b16 %v424
      %v1241 = vunpack.c.h.b16 %v424
      %v1242 = vunpack.c.l.b16 %v425
      %v1243 = vunpack.c.l.b16 %v426
      %v1244 = vunpack.c.h.b16 %v426
      %v1245 = vunpack.c.l.b16 %v427
      %v1246 = vunpack.c.h.b16 %v427
      %v1247 = vunpack.c.l.b16 %v428
      %v1248 = vunpack.c.h.b16 %v428
      %v1249 = vunpack.c.l.b16 %v429
      %v1250 = vunpack.c.l.b16 %v430
      %v1251 = vunpack.c.h.b16 %v430
      %v1252 = vunpack.c.l.b16 %v431
      %v1253 = vunpack.c.h.b16 %v431
      %v1254 = vunpack.c.l.b16 %v432
      %v1255 = vunpack.c.h.b16 %v432
      %v1256 = vunpack.c.l.b16 %v433
      %v1257 = vpack.c.b16 %v816, %v809
      %v1258 = vpack.c.b16 %v817, %v810
      %v1259 = vpack.c.b16 %v818, %v811
      %v1260 = vpack.c.b16 %v819, %v812
      %v1261 = vpack.c.b16 %v820, %v813
      %v1262 = vpack.c.b16 %v821, %v814
      %v1263 = vpack.c.b16 %v822, %v815
      %v1264 = vpack.c.b16 %v830, %v823
      %v1265 = vpack.c.b16 %v831, %v824
      %v1266 = vpack.c.b16 %v832, %v825
      %v1267 = vpack.c.b16 %v833, %v826
      %v1268 = vpack.c.b16 %v834, %v827
      %v1269 = vpack.c.b16 %v835, %v828
      %v1270 = vpack.c.b16 %v836, %v829
      %v1271 = vpack.c.b16 %v844, %v837
      %v1272 = vpack.c.b16 %v845, %v838
      %v1273 = vpack.c.b16 %v846, %v839
      %v1274 = vpack.c.b16 %v847, %v840
      %v1275 = vpack.c.b16 %v848, %v841
      %v1276 = vpack.c.b16 %v849, %v842
      %v1277 = vpack.c.b16 %v850, %v843
      %v1278 = vpack.c.b16 %v858, %v851
      %v1279 = vpack.c.b16 %v859, %v852
      %v1280 = vpack.c.b16 %v860, %v853
      %v1281 = vpack.c.b16 %v861, %v854
      %v1282 = vpack.c.b16 %v862, %v855
      %v1283 = vpack.c.b16 %v863, %v856
      %v1284 = vpack.c.b16 %v864, %v857
      %v1285 = vpack.c.b16 %v872, %v865
      %v1286 = vpack.c.b16 %v873, %v866
      %v1287 = vpack.c.b16 %v874, %v867
      %v1288 = vpack.c.b16 %v875, %v868
      %v1289 = vpack.c.b16 %v876, %v869
      %v1290 = vpack.c.b16 %v877, %v870
      %v1291 = vpack.c.b16 %v878, %v871
      %v1292 = vpack.c.b16 %v886, %v879
      %v1293 = vpack.c.b16 %v887, %v880
      %v1294 = vpack.c.b16 %v888, %v881
      %v1295 = vpack.c.b16 %v889, %v882
      %v1296 = vpack.c.b16 %v890, %v883
      %v1297 = vpack.c.b16 %v891, %v884
      %v1298 = vpack.c.b16 %v892, %v885
      %v1299 = vpack.c.b16 %v900, %v893
      %v1300 = vpack.c.b16 %v901, %v894
      %v1301 = vpack.c.b16 %v902, %v895
      %v1302 = vpack.c.b16 %v903, %v896
      %v1303 = vpack.c.b16 %v904, %v897
      %v1304 = vpack.c.b16 %v905, %v898
      %v1305 = vpack.c.b16 %v906, %v899
      %v1306 = vpack.c.b16 %v914, %v907
      %v1307 = vpack.c.b16 %v915, %v908
      %v1308 = vpack.c.b16 %v916, %v909
      %v1309 = vpack.c.b16 %v917, %v910
      %v1310 = vpack.c.b16 %v918, %v911
      %v1311 = vpack.c.b16 %v919, %v912
      %v1312 = vpack.c.b16 %v920, %v913
      %v1313 = vpack.c.b16 %v928, %v921
      %v1314 = vpack.c.b16 %v929, %v922
      %v1315 = vpack.c.b16 %v930, %v923
      %v1316 = vpack.c.b16 %v931, %v924
      %v1317 = vpack.c.b16 %v932, %v925
      %v1318 = vpack.c.b16 %v933, %v926
      %v1319 = vpack.c.b16 %v934, %v927
      %v1320 = vpack.c.b16 %v942, %v935
      %v1321 = vpack.c.b16 %v943, %v936
      %v1322 = vpack.c.b16 %v944, %v937
      %v1323 = vpack.c.b16 %v945, %v938
      %v1324 = vpack.c.b16 %v946, %v939
      %v1325 = vpack.c.b16 %v947, %v940
      %v1326 = vpack.c.b16 %v948, %v941
      %v1327 = vpack.c.b16 %v956, %v949
      %v1328 = vpack.c.b16 %v957, %v950
      %v1329 = vpack.c.b16 %v958, %v951
      %v1330 = vpack.c.b16 %v959, %v952
      %v1331 = vpack.c.b16 %v960, %v953
      %v1332 = vpack.c.b16 %v961, %v954
      %v1333 = vpack.c.b16 %v962, %v955
      %v1334 = vpack.c.b16 %v970, %v963
      %v1335 = vpack.c.b16 %v971, %v964
      %v1336 = vpack.c.b16 %v972, %v965
      %v1337 = vpack.c.b16 %v973, %v966
      %v1338 = vpack.c.b16 %v974, %v967
      %v1339 = vpack.c.b16 %v975, %v968
      %v1340 = vpack.c.b16 %v976, %v969
      %v1341 = vpack.c.b16 %v984, %v977
      %v1342 = vpack.c.b16 %v985, %v978
      %v1343 = vpack.c.b16 %v986, %v979
      %v1344 = vpack.c.b16 %v987, %v980
      %v1345 = vpack.c.b16 %v988, %v981
      %v1346 = vpack.c.b16 %v989, %v982
      %v1347 = vpack.c.b16 %v990, %v983
      %v1348 = vpack.c.b16 %v998, %v991
      %v1349 = vpack.c.b16 %v999, %v992
      %v1350 = vpack.c.b16 %v1000, %v993
      %v1351 = vpack.c.b16 %v1001, %v994
      %v1352 = vpack.c.b16 %v1002, %v995
      %v1353 = vpack.c.b16 %v1003, %v996
      %v1354 = vpack.c.b16 %v1004, %v997
      %v1355 = vpack.c.b16 %v1012, %v1005
      %v1356 = vpack.c.b16 %v1013, %v1006
      %v1357 = vpack.c.b16 %v1014, %v1007
      %v1358 = vpack.c.b16 %v1015, %v1008
      %v1359 = vpack.c.b16 %v1016, %v1009
      %v1360 = vpack.c.b16 %v1017, %v1010
      %v1361 = vpack.c.b16 %v1018, %v1011
      %v1362 = vpack.c.b16 %v1026, %v1019
      %v1363 = vpack.c.b16 %v1027, %v1020
      %v1364 = vpack.c.b16 %v1028, %v1021
      %v1365 = vpack.c.b16 %v1029, %v1022
      %v1366 = vpack.c.b16 %v1030, %v1023
      %v1367 = vpack.c.b16 %v1031, %v1024
      %v1368 = vpack.c.b16 %v1032, %v1025
      %v1369 = vpack.c.b16 %v1040, %v1033
      %v1370 = vpack.c.b16 %v1041, %v1034
      %v1371 = vpack.c.b16 %v1042, %v1035
      %v1372 = vpack.c.b16 %v1043, %v1036
      %v1373 = vpack.c.b16 %v1044, %v1037
      %v1374 = vpack.c.b16 %v1045, %v1038
      %v1375 = vpack.c.b16 %v1046, %v1039
      %v1376 = vpack.c.b16 %v1054, %v1047
      %v1377 = vpack.c.b16 %v1055, %v1048
      %v1378 = vpack.c.b16 %v1056, %v1049
      %v1379 = vpack.c.b16 %v1057, %v1050
      %v1380 = vpack.c.b16 %v1058, %v1051
      %v1381 = vpack.c.b16 %v1059, %v1052
      %v1382 = vpack.c.b16 %v1060, %v1053
      %v1383 = vpack.c.b16 %v1068, %v1061
      %v1384 = vpack.c.b16 %v1069, %v1062
      %v1385 = vpack.c.b16 %v1070, %v1063
      %v1386 = vpack.c.b16 %v1071, %v1064
      %v1387 = vpack.c.b16 %v1072, %v1065
      %v1388 = vpack.c.b16 %v1073, %v1066
      %v1389 = vpack.c.b16 %v1074, %v1067
      %v1390 = vpack.c.b16 %v1082, %v1075
      %v1391 = vpack.c.b16 %v1083, %v1076
      %v1392 = vpack.c.b16 %v1084, %v1077
      %v1393 = vpack.c.b16 %v1085, %v1078
      %v1394 = vpack.c.b16 %v1086, %v1079
      %v1395 = vpack.c.b16 %v1087, %v1080
      %v1396 = vpack.c.b16 %v1088, %v1081
      %v1397 = vpack.c.b16 %v1096, %v1089
      %v1398 = vpack.c.b16 %v1097, %v1090
      %v1399 = vpack.c.b16 %v1098, %v1091
      %v1400 = vpack.c.b16 %v1099, %v1092
      %v1401 = vpack.c.b16 %v1100, %v1093
      %v1402 = vpack.c.b16 %v1101, %v1094
      %v1403 = vpack.c.b16 %v1102, %v1095
      %v1404 = vpack.c.b16 %v1110, %v1103
      %v1405 = vpack.c.b16 %v1111, %v1104
      %v1406 = vpack.c.b16 %v1112, %v1105
      %v1407 = vpack.c.b16 %v1113, %v1106
      %v1408 = vpack.c.b16 %v1114, %v1107
      %v1409 = vpack.c.b16 %v1115, %v1108
      %v1410 = vpack.c.b16 %v1116, %v1109
      %v1411 = vpack.c.b16 %v1124, %v1117
      %v1412 = vpack.c.b16 %v1125, %v1118
      %v1413 = vpack.c.b16 %v1126, %v1119
      %v1414 = vpack.c.b16 %v1127, %v1120
      %v1415 = vpack.c.b16 %v1128, %v1121
      %v1416 = vpack.c.b16 %v1129, %v1122
      %v1417 = vpack.c.b16 %v1130, %v1123
      %v1418 = vpack.c.b16 %v1138, %v1131
      %v1419 = vpack.c.b16 %v1139, %v1132
      %v1420 = vpack.c.b16 %v1140, %v1133
      %v1421 = vpack.c.b16 %v1141, %v1134
      %v1422 = vpack.c.b16 %v1142, %v1135
      %v1423 = vpack.c.b16 %v1143, %v1136
      %v1424 = vpack.c.b16 %v1144, %v1137
      %v1425 = vpack.c.b16 %v1152, %v1145
      %v1426 = vpack.c.b16 %v1153, %v1146
      %v1427 = vpack.c.b16 %v1154, %v1147
      %v1428 = vpack.c.b16 %v1155, %v1148
      %v1429 = vpack.c.b16 %v1156, %v1149
      %v1430 = vpack.c.b16 %v1157, %v1150
      %v1431 = vpack.c.b16 %v1158, %v1151
      %v1432 = vpack.c.b16 %v1166, %v1159
      %v1433 = vpack.c.b16 %v1167, %v1160
      %v1434 = vpack.c.b16 %v1168, %v1161
      %v1435 = vpack.c.b16 %v1169, %v1162
      %v1436 = vpack.c.b16 %v1170, %v1163
      %v1437 = vpack.c.b16 %v1171, %v1164
      %v1438 = vpack.c.b16 %v1172, %v1165
      %v1439 = vpack.c.b16 %v1180, %v1173
      %v1440 = vpack.c.b16 %v1181, %v1174
      %v1441 = vpack.c.b16 %v1182, %v1175
      %v1442 = vpack.c.b16 %v1183, %v1176
      %v1443 = vpack.c.b16 %v1184, %v1177
      %v1444 = vpack.c.b16 %v1185, %v1178
      %v1445 = vpack.c.b16 %v1186, %v1179
      %v1446 = vpack.c.b16 %v1194, %v1187
      %v1447 = vpack.c.b16 %v1195, %v1188
      %v1448 = vpack.c.b16 %v1196, %v1189
      %v1449 = vpack.c.b16 %v1197, %v1190
      %v1450 = vpack.c.b16 %v1198, %v1191
      %v1451 = vpack.c.b16 %v1199, %v1192
      %v1452 = vpack.c.b16 %v1200, %v1193
      %v1453 = vpack.c.b16 %v1208, %v1201
      %v1454 = vpack.c.b16 %v1209, %v1202
      %v1455 = vpack.c.b16 %v1210, %v1203
      %v1456 = vpack.c.b16 %v1211, %v1204
      %v1457 = vpack.c.b16 %v1212, %v1205
      %v1458 = vpack.c.b16 %v1213, %v1206
      %v1459 = vpack.c.b16 %v1214, %v1207
      %v1460 = vpack.c.b16 %v1222, %v1215
      %v1461 = vpack.c.b16 %v1223, %v1216
      %v1462 = vpack.c.b16 %v1224, %v1217
      %v1463 = vpack.c.b16 %v1225, %v1218
      %v1464 = vpack.c.b16 %v1226, %v1219
      %v1465 = vpack.c.b16 %v1227, %v1220
      %v1466 = vpack.c.b16 %v1228, %v1221
      %v1467 = vpack.c.b16 %v1236, %v1229
      %v1468 = vpack.c.b16 %v1237, %v1230
      %v1469 = vpack.c.b16 %v1238, %v1231
      %v1470 = vpack.c.b16 %v1239, %v1232
      %v1471 = vpack.c.b16 %v1240, %v1233
      %v1472 = vpack.c.b16 %v1241, %v1234
      %v1473 = vpack.c.b16 %v1242, %v1235
      %v1474 = vpack.c.b16 %v1250, %v1243
      %v1475 = vpack.c.b16 %v1251, %v1244
      %v1476 = vpack.c.b16 %v1252, %v1245
      %v1477 = vpack.c.b16 %v1253, %v1246
      %v1478 = vpack.c.b16 %v1254, %v1247
      %v1479 = vpack.c.b16 %v1255, %v1248
      %v1480 = vpack.c.b16 %v1256, %v1249
      %v1817 = vunpack.c.l.b16 %v434
      %v1818 = vunpack.c.l.b16 %v435
      %v1819 = vunpack.c.l.b16 %v436
      %v1820 = vunpack.c.l.b16 %v437
      %v1821 = vunpack.c.l.b16 %v438
      %v1822 = vunpack.c.l.b16 %v439
      %v1823 = vunpack.c.l.b16 %v440
      %v1824 = vunpack.c.l.b16 %v441
      %v1825 = vunpack.c.l.b16 %v442
      %v1826 = vunpack.c.l.b16 %v443
      %v1827 = vunpack.c.l.b16 %v444
      %v1828 = vunpack.c.l.b16 %v445
      %v1829 = vunpack.c.l.b16 %v446
      %v1830 = vunpack.c.l.b16 %v447
      %v1831 = vunpack.c.l.b16 %v448
      %v1832 = vunpack.c.l.b16 %v449
      %v1833 = vunpack.c.l.b16 %v450
      %v1834 = vunpack.c.l.b16 %v451
      %v1835 = vunpack.c.l.b16 %v452
      %v1836 = vunpack.c.l.b16 %v453
      %v1837 = vunpack.c.l.b16 %v454
      %v1838 = vunpack.c.l.b16 %v455
      %v1839 = vunpack.c.l.b16 %v456
      %v1840 = vunpack.c.l.b16 %v457
      %v1841 = vunpack.c.l.b16 %v458
      %v1842 = vunpack.c.l.b16 %v459
      %v1843 = vunpack.c.l.b16 %v460
      %v1844 = vunpack.c.l.b16 %v461
      %v1845 = vunpack.c.l.b16 %v462
      %v1846 = vunpack.c.l.b16 %v463
      %v1847 = vunpack.c.l.b16 %v464
      %v1848 = vunpack.c.l.b16 %v465
      %v1849 = vunpack.c.l.b16 %v466
      %v1850 = vunpack.c.l.b16 %v467
      %v1851 = vunpack.c.l.b16 %v468
      %v1852 = vunpack.c.l.b16 %v469
      %v1853 = vunpack.c.l.b16 %v470
      %v1854 = vunpack.c.l.b16 %v471
      %v1855 = vunpack.c.l.b16 %v472
      %v1856 = vunpack.c.l.b16 %v473
      %v1857 = vunpack.c.l.b16 %v474
      %v1858 = vunpack.c.l.b16 %v475
      %v1859 = vunpack.c.l.b16 %v476
      %v1860 = vunpack.c.l.b16 %v477
      %v1861 = vunpack.c.l.b16 %v478
      %v1862 = vunpack.c.l.b16 %v479
      %v1863 = vunpack.c.l.b16 %v480
      %v1864 = vunpack.c.l.b16 %v481
      %v1865 = vunpack.c.l.b16 %v482
      %v1866 = vunpack.c.l.b16 %v483
      %v1867 = vunpack.c.l.b16 %v484
      %v1868 = vunpack.c.l.b16 %v485
      %v1869 = vunpack.c.l.b16 %v486
      %v1870 = vunpack.c.l.b16 %v487
      %v1871 = vunpack.c.l.b16 %v488
      %v1872 = vunpack.c.l.b16 %v489
      %v1873 = vunpack.c.l.b16 %v490
      %v1874 = vunpack.c.l.b16 %v491
      %v1875 = vunpack.c.l.b16 %v492
      %v1876 = vunpack.c.l.b16 %v493
      %v1877 = vunpack.c.l.b16 %v494
      %v1878 = vunpack.c.l.b16 %v495
      %v1879 = vunpack.c.l.b16 %v496
      %v1880 = vunpack.c.l.b16 %v497
      %v1881 = vunpack.c.l.b16 %v498
      %v1882 = vunpack.c.l.b16 %v499
      %v1883 = vunpack.c.l.b16 %v500
      %v1884 = vunpack.c.l.b16 %v501
      %v1885 = vunpack.c.l.b16 %v502
      %v1886 = vunpack.c.l.b16 %v503
      %v1887 = vunpack.c.l.b16 %v504
      %v1888 = vunpack.c.l.b16 %v505
      %v1889 = vunpack.c.l.b16 %v506
      %v1890 = vunpack.c.l.b16 %v507
      %v1891 = vunpack.c.l.b16 %v508
      %v1892 = vunpack.c.l.b16 %v509
      %v1893 = vunpack.c.l.b16 %v510
      %v1894 = vunpack.c.l.b16 %v511
      %v1895 = vunpack.c.l.b16 %v512
      %v1896 = vunpack.c.l.b16 %v513
      %v1897 = vunpack.c.l.b16 %v514
      %v1898 = vunpack.c.l.b16 %v515
      %v1899 = vunpack.c.l.b16 %v516
      %v1900 = vunpack.c.l.b16 %v517
      %v1901 = vunpack.c.l.b16 %v518
      %v1902 = vunpack.c.l.b16 %v519
      %v1903 = vunpack.c.l.b16 %v520
      %v1904 = vunpack.c.l.b16 %v521
      %v1905 = vunpack.c.l.b16 %v522
      %v1906 = vunpack.c.l.b16 %v523
      %v1907 = vunpack.c.l.b16 %v524
      %v1908 = vunpack.c.l.b16 %v525
      %v1909 = vunpack.c.l.b16 %v526
      %v1910 = vunpack.c.l.b16 %v527
      %v1911 = vunpack.c.l.b16 %v528
      %v1912 = vunpack.c.l.b16 %v529
      %v1913 = vunpack.c.l.b16 %v530
      %v1914 = vunpack.c.l.b16 %v531
      %v1915 = vunpack.c.l.b16 %v532
      %v1916 = vunpack.c.l.b16 %v533
      %v1917 = vunpack.c.l.b16 %v534
      %v1918 = vunpack.c.l.b16 %v535
      %v1919 = vunpack.c.l.b16 %v536
      %v1920 = vunpack.c.l.b16 %v537
      %v1921 = vunpack.c.l.b16 %v538
      %v1922 = vunpack.c.l.b16 %v539
      %v1923 = vunpack.c.l.b16 %v540
      %v1924 = vunpack.c.l.b16 %v541
      %v1925 = vunpack.c.l.b16 %v542
      %v1926 = vunpack.c.l.b16 %v543
      %v1927 = vunpack.c.l.b16 %v544
      %v1928 = vunpack.c.l.b16 %v545
      %v1929 = vpack.c.b16 %v1818, %v1817
      %v1930 = vpack.c.b16 %v1820, %v1819
      %v1931 = vpack.c.b16 %v1822, %v1821
      %v1932 = vpack.c.b16 %v1824, %v1823
      %v1933 = vpack.c.b16 %v1826, %v1825
      %v1934 = vpack.c.b16 %v1828, %v1827
      %v1935 = vpack.c.b16 %v1830, %v1829
      %v1936 = vpack.c.b16 %v1832, %v1831
      %v1937 = vpack.c.b16 %v1834, %v1833
      %v1938 = vpack.c.b16 %v1836, %v1835
      %v1939 = vpack.c.b16 %v1838, %v1837
      %v1940 = vpack.c.b16 %v1840, %v1839
      %v1941 = vpack.c.b16 %v1842, %v1841
      %v1942 = vpack.c.b16 %v1844, %v1843
      %v1943 = vpack.c.b16 %v1846, %v1845
      %v1944 = vpack.c.b16 %v1848, %v1847
      %v1945 = vpack.c.b16 %v1850, %v1849
      %v1946 = vpack.c.b16 %v1852, %v1851
      %v1947 = vpack.c.b16 %v1854, %v1853
      %v1948 = vpack.c.b16 %v1856, %v1855
      %v1949 = vpack.c.b16 %v1858, %v1857
      %v1950 = vpack.c.b16 %v1860, %v1859
      %v1951 = vpack.c.b16 %v1862, %v1861
      %v1952 = vpack.c.b16 %v1864, %v1863
      %v1953 = vpack.c.b16 %v1866, %v1865
      %v1954 = vpack.c.b16 %v1868, %v1867
      %v1955 = vpack.c.b16 %v1870, %v1869
      %v1956 = vpack.c.b16 %v1872, %v1871
      %v1957 = vpack.c.b16 %v1874, %v1873
      %v1958 = vpack.c.b16 %v1876, %v1875
      %v1959 = vpack.c.b16 %v1878, %v1877
      %v1960 = vpack.c.b16 %v1880, %v1879
      %v1961 = vpack.c.b16 %v1882, %v1881
      %v1962 = vpack.c.b16 %v1884, %v1883
      %v1963 = vpack.c.b16 %v1886, %v1885
      %v1964 = vpack.c.b16 %v1888, %v1887
      %v1965 = vpack.c.b16 %v1890, %v1889
      %v1966 = vpack.c.b16 %v1892, %v1891
      %v1967 = vpack.c.b16 %v1894, %v1893
      %v1968 = vpack.c.b16 %v1896, %v1895
      %v1969 = vpack.c.b16 %v1898, %v1897
      %v1970 = vpack.c.b16 %v1900, %v1899
      %v1971 = vpack.c.b16 %v1902, %v1901
      %v1972 = vpack.c.b16 %v1904, %v1903
      %v1973 = vpack.c.b16 %v1906, %v1905
      %v1974 = vpack.c.b16 %v1908, %v1907
      %v1975 = vpack.c.b16 %v1910, %v1909
      %v1976 = vpack.c.b16 %v1912, %v1911
      %v1977 = vpack.c.b16 %v1914, %v1913
      %v1978 = vpack.c.b16 %v1916, %v1915
      %v1979 = vpack.c.b16 %v1918, %v1917
      %v1980 = vpack.c.b16 %v1920, %v1919
      %v1981 = vpack.c.b16 %v1922, %v1921
      %v1982 = vpack.c.b16 %v1924, %v1923
      %v1983 = vpack.c.b16 %v1926, %v1925
      %v1984 = vpack.c.b16 %v1928, %v1927
      %2041 = vmatprep.subr.bf16.mxu0 0
      %2042 = vmatpush1.bf16.msra.mxu0 %v1936
      %2043 = vmatprep.subr.bf16.mxu0 0
      %2044 = vmatpush1.bf16.msra.mxu0 %v1935
      %2045 = vmatprep.subr.bf16.mxu0 0
      %2046 = vmatpush1.bf16.msra.mxu0 %v1934
      %2047 = vmatprep.subr.bf16.mxu0 0
      %2048 = vmatpush1.bf16.msra.mxu0 %v1933
      %2049 = vmatprep.subr.bf16.mxu0 0
      %2050 = vmatpush1.bf16.msra.mxu0 %v1932
      %2051 = vmatprep.subr.bf16.mxu0 0
      %2052 = vmatpush1.bf16.msra.mxu0 %v1931
      %2053 = vmatprep.subr.bf16.mxu0 0
      %2054 = vmatpush1.bf16.msra.mxu0 %v1930
      %2055 = vmatprep.subr.bf16.mxu0 0
      %2056 = vmatpush1.bf16.msra.mxu0 %v1929
      %2057 = vmatprep.subr.bf16.mxu0 0
      %2058 = vmatpush2.bf16.msra.mxu0 %v1944
      %2059 = vmatprep.subr.bf16.mxu0 0
      %2060 = vmatpush2.bf16.msra.mxu0 %v1943
      %2061 = vmatprep.subr.bf16.mxu0 0
      %2062 = vmatpush2.bf16.msra.mxu0 %v1942
      %2063 = vmatprep.subr.bf16.mxu0 0
      %2064 = vmatpush2.bf16.msra.mxu0 %v1941
      %2065 = vmatprep.subr.bf16.mxu0 0
      %2066 = vmatpush2.bf16.msra.mxu0 %v1940
      %2067 = vmatprep.subr.bf16.mxu0 0
      %2068 = vmatpush2.bf16.msra.mxu0 %v1939
      %2069 = vmatprep.subr.bf16.mxu0 0
      %2070 = vmatpush2.bf16.msra.mxu0 %v1938
      %2071 = vmatprep.subr.bf16.mxu0 0
      %2072 = vmatpush2.bf16.msra.mxu0 %v1937
      %2073 = vmatprep.mubr.bf16.mxu0 %v1258
      %2074 = vmatmul.mubr.bf16.gmra.mxu0 %v1257
      %v2075 = vpop.f32.mrf.mxu0
      %v2076 = vadd.f32 %v551, %v2075
      %v2077 = vpop.f32.mrf.mxu0
      %v2078 = vpop.f32.mrf.mxu0
      %v2079 = vadd.f32 %v551, %v2078
      %v2080 = vpop.f32.mrf.mxu0
      %2081 = vmatprep.mubr.bf16.mxu0 %v1265
      %2082 = vmatmul.mubr.bf16.gmra.mxu0 %v1264
      %v2083 = vpop.f32.mrf.mxu0
      %v2084 = vadd.f32 %v551, %v2083
      %v2085 = vpop.f32.mrf.mxu0
      %v2086 = vpop.f32.mrf.mxu0
      %v2087 = vadd.f32 %v551, %v2086
      %v2088 = vpop.f32.mrf.mxu0
      %2089 = vmatprep.mubr.bf16.mxu0 %v1272
      %2090 = vmatmul.mubr.bf16.gmra.mxu0 %v1271
      %v2091 = vpop.f32.mrf.mxu0
      %v2092 = vadd.f32 %v551, %v2091
      %v2093 = vpop.f32.mrf.mxu0
      %v2094 = vpop.f32.mrf.mxu0
      %v2095 = vadd.f32 %v551, %v2094
      %v2096 = vpop.f32.mrf.mxu0
      %2097 = vmatprep.mubr.bf16.mxu0 %v1279
      %2098 = vmatmul.mubr.bf16.gmra.mxu0 %v1278
      %v2099 = vpop.f32.mrf.mxu0
      %v2100 = vadd.f32 %v551, %v2099
      %v2101 = vpop.f32.mrf.mxu0
      %v2102 = vpop.f32.mrf.mxu0
      %v2103 = vadd.f32 %v551, %v2102
      %v2104 = vpop.f32.mrf.mxu0
      %2105 = vmatprep.mubr.bf16.mxu0 %v1286
      %2106 = vmatmul.mubr.bf16.gmra.mxu0 %v1285
      %v2107 = vpop.f32.mrf.mxu0
      %v2108 = vadd.f32 %v551, %v2107
      %v2109 = vpop.f32.mrf.mxu0
      %v2110 = vpop.f32.mrf.mxu0
      %v2111 = vadd.f32 %v551, %v2110
      %v2112 = vpop.f32.mrf.mxu0
      %2113 = vmatprep.mubr.bf16.mxu0 %v1293
      %2114 = vmatmul.mubr.bf16.gmra.mxu0 %v1292
      %v2115 = vpop.f32.mrf.mxu0
      %v2116 = vadd.f32 %v551, %v2115
      %v2117 = vpop.f32.mrf.mxu0
      %v2118 = vpop.f32.mrf.mxu0
      %v2119 = vadd.f32 %v551, %v2118
      %v2120 = vpop.f32.mrf.mxu0
      %2121 = vmatprep.mubr.bf16.mxu0 %v1300
      %2122 = vmatmul.mubr.bf16.gmra.mxu0 %v1299
      %v2123 = vpop.f32.mrf.mxu0
      %v2124 = vadd.f32 %v551, %v2123
      %v2125 = vpop.f32.mrf.mxu0
      %v2126 = vpop.f32.mrf.mxu0
      %v2127 = vadd.f32 %v551, %v2126
      %v2128 = vpop.f32.mrf.mxu0
      %2129 = vmatprep.mubr.bf16.mxu0 %v1307
      %2130 = vmatmul.mubr.bf16.gmra.mxu0 %v1306
      %v2131 = vpop.f32.mrf.mxu0
      %v2132 = vadd.f32 %v551, %v2131
      %v2133 = vpop.f32.mrf.mxu0
      %v2134 = vpop.f32.mrf.mxu0
      %v2135 = vadd.f32 %v551, %v2134
      %v2136 = vpop.f32.mrf.mxu0
      %2137 = vmatprep.mubr.bf16.mxu0 %v1314
      %2138 = vmatmul.mubr.bf16.gmra.mxu0 %v1313
      %v2139 = vpop.f32.mrf.mxu0
      %v2140 = vadd.f32 %v551, %v2139
      %v2141 = vpop.f32.mrf.mxu0
      %v2142 = vpop.f32.mrf.mxu0
      %v2143 = vadd.f32 %v551, %v2142
      %v2144 = vpop.f32.mrf.mxu0
      %2145 = vmatprep.mubr.bf16.mxu0 %v1321
      %2146 = vmatmul.mubr.bf16.gmra.mxu0 %v1320
      %v2147 = vpop.f32.mrf.mxu0
      %v2148 = vadd.f32 %v551, %v2147
      %v2149 = vpop.f32.mrf.mxu0
      %v2150 = vpop.f32.mrf.mxu0
      %v2151 = vadd.f32 %v551, %v2150
      %v2152 = vpop.f32.mrf.mxu0
      %2153 = vmatprep.mubr.bf16.mxu0 %v1328
      %2154 = vmatmul.mubr.bf16.gmra.mxu0 %v1327
      %v2155 = vpop.f32.mrf.mxu0
      %v2156 = vadd.f32 %v551, %v2155
      %v2157 = vpop.f32.mrf.mxu0
      %v2158 = vpop.f32.mrf.mxu0
      %v2159 = vadd.f32 %v551, %v2158
      %v2160 = vpop.f32.mrf.mxu0
      %2161 = vmatprep.mubr.bf16.mxu0 %v1335
      %2162 = vmatmul.mubr.bf16.gmra.mxu0 %v1334
      %v2163 = vpop.f32.mrf.mxu0
      %v2164 = vadd.f32 %v551, %v2163
      %v2165 = vpop.f32.mrf.mxu0
      %v2166 = vpop.f32.mrf.mxu0
      %v2167 = vadd.f32 %v551, %v2166
      %v2168 = vpop.f32.mrf.mxu0
      %2169 = vmatprep.mubr.bf16.mxu0 %v1342
      %2170 = vmatmul.mubr.bf16.gmra.mxu0 %v1341
      %v2171 = vpop.f32.mrf.mxu0
      %v2172 = vadd.f32 %v551, %v2171
      %v2173 = vpop.f32.mrf.mxu0
      %v2174 = vpop.f32.mrf.mxu0
      %v2175 = vadd.f32 %v551, %v2174
      %v2176 = vpop.f32.mrf.mxu0
      %2177 = vmatprep.mubr.bf16.mxu0 %v1349
      %2178 = vmatmul.mubr.bf16.gmra.mxu0 %v1348
      %v2179 = vpop.f32.mrf.mxu0
      %v2180 = vadd.f32 %v551, %v2179
      %v2181 = vpop.f32.mrf.mxu0
      %v2182 = vpop.f32.mrf.mxu0
      %v2183 = vadd.f32 %v551, %v2182
      %v2184 = vpop.f32.mrf.mxu0
      %2185 = vmatprep.mubr.bf16.mxu0 %v1356
      %2186 = vmatmul.mubr.bf16.gmra.mxu0 %v1355
      %v2187 = vpop.f32.mrf.mxu0
      %v2188 = vadd.f32 %v551, %v2187
      %v2189 = vpop.f32.mrf.mxu0
      %v2190 = vpop.f32.mrf.mxu0
      %v2191 = vadd.f32 %v551, %v2190
      %v2192 = vpop.f32.mrf.mxu0
      %2193 = vmatprep.mubr.bf16.mxu0 %v1363
      %2194 = vmatmul.mubr.bf16.gmra.mxu0 %v1362
      %v2195 = vpop.f32.mrf.mxu0
      %v2196 = vadd.f32 %v551, %v2195
      %v2197 = vpop.f32.mrf.mxu0
      %v2198 = vpop.f32.mrf.mxu0
      %v2199 = vadd.f32 %v551, %v2198
      %v2200 = vpop.f32.mrf.mxu0
      %2201 = vmatprep.mubr.bf16.mxu0 %v1370
      %2202 = vmatmul.mubr.bf16.gmra.mxu0 %v1369
      %v2203 = vpop.f32.mrf.mxu0
      %v2204 = vadd.f32 %v551, %v2203
      %v2205 = vpop.f32.mrf.mxu0
      %v2206 = vpop.f32.mrf.mxu0
      %v2207 = vadd.f32 %v551, %v2206
      %v2208 = vpop.f32.mrf.mxu0
      %2209 = vmatprep.mubr.bf16.mxu0 %v1377
      %2210 = vmatmul.mubr.bf16.gmra.mxu0 %v1376
      %v2211 = vpop.f32.mrf.mxu0
      %v2212 = vadd.f32 %v551, %v2211
      %v2213 = vpop.f32.mrf.mxu0
      %v2214 = vpop.f32.mrf.mxu0
      %v2215 = vadd.f32 %v551, %v2214
      %v2216 = vpop.f32.mrf.mxu0
      %2217 = vmatprep.mubr.bf16.mxu0 %v1384
      %2218 = vmatmul.mubr.bf16.gmra.mxu0 %v1383
      %v2219 = vpop.f32.mrf.mxu0
      %v2220 = vadd.f32 %v551, %v2219
      %v2221 = vpop.f32.mrf.mxu0
      %v2222 = vpop.f32.mrf.mxu0
      %v2223 = vadd.f32 %v551, %v2222
      %v2224 = vpop.f32.mrf.mxu0
      %2225 = vmatprep.mubr.bf16.mxu0 %v1391
      %2226 = vmatmul.mubr.bf16.gmra.mxu0 %v1390
      %v2227 = vpop.f32.mrf.mxu0
      %v2228 = vadd.f32 %v551, %v2227
      %v2229 = vpop.f32.mrf.mxu0
      %v2230 = vpop.f32.mrf.mxu0
      %v2231 = vadd.f32 %v551, %v2230
      %v2232 = vpop.f32.mrf.mxu0
      %2233 = vmatprep.mubr.bf16.mxu0 %v1398
      %2234 = vmatmul.mubr.bf16.gmra.mxu0 %v1397
      %v2235 = vpop.f32.mrf.mxu0
      %v2236 = vadd.f32 %v551, %v2235
      %v2237 = vpop.f32.mrf.mxu0
      %v2238 = vpop.f32.mrf.mxu0
      %v2239 = vadd.f32 %v551, %v2238
      %v2240 = vpop.f32.mrf.mxu0
      %2241 = vmatprep.mubr.bf16.mxu0 %v1405
      %2242 = vmatmul.mubr.bf16.gmra.mxu0 %v1404
      %v2243 = vpop.f32.mrf.mxu0
      %v2244 = vadd.f32 %v551, %v2243
      %v2245 = vpop.f32.mrf.mxu0
      %v2246 = vpop.f32.mrf.mxu0
      %v2247 = vadd.f32 %v551, %v2246
      %v2248 = vpop.f32.mrf.mxu0
      %2249 = vmatprep.mubr.bf16.mxu0 %v1412
      %2250 = vmatmul.mubr.bf16.gmra.mxu0 %v1411
      %v2251 = vpop.f32.mrf.mxu0
      %v2252 = vadd.f32 %v551, %v2251
      %v2253 = vpop.f32.mrf.mxu0
      %v2254 = vpop.f32.mrf.mxu0
      %v2255 = vadd.f32 %v551, %v2254
      %v2256 = vpop.f32.mrf.mxu0
      %2257 = vmatprep.mubr.bf16.mxu0 %v1419
      %2258 = vmatmul.mubr.bf16.gmra.mxu0 %v1418
      %v2259 = vpop.f32.mrf.mxu0
      %v2260 = vadd.f32 %v551, %v2259
      %v2261 = vpop.f32.mrf.mxu0
      %v2262 = vpop.f32.mrf.mxu0
      %v2263 = vadd.f32 %v551, %v2262
      %v2264 = vpop.f32.mrf.mxu0
      %2265 = vmatprep.mubr.bf16.mxu0 %v1426
      %2266 = vmatmul.mubr.bf16.gmra.mxu0 %v1425
      %v2267 = vpop.f32.mrf.mxu0
      %v2268 = vadd.f32 %v551, %v2267
      %v2269 = vpop.f32.mrf.mxu0
      %v2270 = vpop.f32.mrf.mxu0
      %v2271 = vadd.f32 %v551, %v2270
      %v2272 = vpop.f32.mrf.mxu0
      %2273 = vmatprep.mubr.bf16.mxu0 %v1433
      %2274 = vmatmul.mubr.bf16.gmra.mxu0 %v1432
      %v2275 = vpop.f32.mrf.mxu0
      %v2276 = vadd.f32 %v551, %v2275
      %v2277 = vpop.f32.mrf.mxu0
      %v2278 = vpop.f32.mrf.mxu0
      %v2279 = vadd.f32 %v551, %v2278
      %v2280 = vpop.f32.mrf.mxu0
      %2281 = vmatprep.mubr.bf16.mxu0 %v1440
      %2282 = vmatmul.mubr.bf16.gmra.mxu0 %v1439
      %v2283 = vpop.f32.mrf.mxu0
      %v2284 = vadd.f32 %v551, %v2283
      %v2285 = vpop.f32.mrf.mxu0
      %v2286 = vpop.f32.mrf.mxu0
      %v2287 = vadd.f32 %v551, %v2286
      %v2288 = vpop.f32.mrf.mxu0
      %2289 = vmatprep.mubr.bf16.mxu0 %v1447
      %2290 = vmatmul.mubr.bf16.gmra.mxu0 %v1446
      %v2291 = vpop.f32.mrf.mxu0
      %v2292 = vadd.f32 %v551, %v2291
      %v2293 = vpop.f32.mrf.mxu0
      %v2294 = vpop.f32.mrf.mxu0
      %v2295 = vadd.f32 %v551, %v2294
      %v2296 = vpop.f32.mrf.mxu0
      %2297 = vmatprep.mubr.bf16.mxu0 %v1454
      %2298 = vmatmul.mubr.bf16.gmra.mxu0 %v1453
      %v2299 = vpop.f32.mrf.mxu0
      %v2300 = vadd.f32 %v551, %v2299
      %v2301 = vpop.f32.mrf.mxu0
      %v2302 = vpop.f32.mrf.mxu0
      %v2303 = vadd.f32 %v551, %v2302
      %v2304 = vpop.f32.mrf.mxu0
      %2305 = vmatprep.mubr.bf16.mxu0 %v1461
      %2306 = vmatmul.mubr.bf16.gmra.mxu0 %v1460
      %v2307 = vpop.f32.mrf.mxu0
      %v2308 = vadd.f32 %v551, %v2307
      %v2309 = vpop.f32.mrf.mxu0
      %v2310 = vpop.f32.mrf.mxu0
      %v2311 = vadd.f32 %v551, %v2310
      %v2312 = vpop.f32.mrf.mxu0
      %2313 = vmatprep.mubr.bf16.mxu0 %v1468
      %2314 = vmatmul.mubr.bf16.gmra.mxu0 %v1467
      %v2315 = vpop.f32.mrf.mxu0
      %v2316 = vadd.f32 %v551, %v2315
      %v2317 = vpop.f32.mrf.mxu0
      %v2318 = vpop.f32.mrf.mxu0
      %v2319 = vadd.f32 %v551, %v2318
      %v2320 = vpop.f32.mrf.mxu0
      %2321 = vmatprep.mubr.bf16.mxu0 %v1475
      %2322 = vmatmul.mubr.bf16.gmra.mxu0 %v1474
      %v2323 = vpop.f32.mrf.mxu0
      %v2324 = vadd.f32 %v551, %v2323
      %v2325 = vpop.f32.mrf.mxu0
      %v2326 = vpop.f32.mrf.mxu0
      %v2327 = vadd.f32 %v551, %v2326
      %v2328 = vpop.f32.mrf.mxu0
      %2329 = vdwg.mxu0
      %2330 = vmatprep.subr.bf16.mxu0 0
      %2331 = vmatpush1.bf16.msra.mxu0 %v1952
      %2332 = vmatprep.subr.bf16.mxu0 0
      %2333 = vmatpush1.bf16.msra.mxu0 %v1951
      %2334 = vmatprep.subr.bf16.mxu0 0
      %2335 = vmatpush1.bf16.msra.mxu0 %v1950
      %2336 = vmatprep.subr.bf16.mxu0 0
      %2337 = vmatpush1.bf16.msra.mxu0 %v1949
      %2338 = vmatprep.subr.bf16.mxu0 0
      %2339 = vmatpush1.bf16.msra.mxu0 %v1948
      %2340 = vmatprep.subr.bf16.mxu0 0
      %2341 = vmatpush1.bf16.msra.mxu0 %v1947
      %2342 = vmatprep.subr.bf16.mxu0 0
      %2343 = vmatpush1.bf16.msra.mxu0 %v1946
      %2344 = vmatprep.subr.bf16.mxu0 0
      %2345 = vmatpush1.bf16.msra.mxu0 %v1945
      %2346 = vmatprep.subr.bf16.mxu0 0
      %2347 = vmatpush2.bf16.msra.mxu0 %v1960
      %2348 = vmatprep.subr.bf16.mxu0 0
      %2349 = vmatpush2.bf16.msra.mxu0 %v1959
      %2350 = vmatprep.subr.bf16.mxu0 0
      %2351 = vmatpush2.bf16.msra.mxu0 %v1958
      %2352 = vmatprep.subr.bf16.mxu0 0
      %2353 = vmatpush2.bf16.msra.mxu0 %v1957
      %2354 = vmatprep.subr.bf16.mxu0 0
      %2355 = vmatpush2.bf16.msra.mxu0 %v1956
      %2356 = vmatprep.subr.bf16.mxu0 0
      %2357 = vmatpush2.bf16.msra.mxu0 %v1955
      %2358 = vmatprep.subr.bf16.mxu0 0
      %2359 = vmatpush2.bf16.msra.mxu0 %v1954
      %2360 = vmatprep.subr.bf16.mxu0 0
      %2361 = vmatpush2.bf16.msra.mxu0 %v1953
      %2362 = vmatprep.mubr.bf16.mxu0 %v1260
      %2363 = vmatmul.mubr.bf16.gmra.mxu0 %v1259
      %v2364 = vpop.f32.mrf.mxu0
      %v2365 = vadd.f32 %v2076, %v2364
      %v2366 = vpop.f32.mrf.mxu0
      %v2367 = vpop.f32.mrf.mxu0
      %v2368 = vadd.f32 %v2079, %v2367
      %v2369 = vpop.f32.mrf.mxu0
      %2370 = vmatprep.mubr.bf16.mxu0 %v1267
      %2371 = vmatmul.mubr.bf16.gmra.mxu0 %v1266
      %v2372 = vpop.f32.mrf.mxu0
      %v2373 = vadd.f32 %v2084, %v2372
      %v2374 = vpop.f32.mrf.mxu0
      %v2375 = vpop.f32.mrf.mxu0
      %v2376 = vadd.f32 %v2087, %v2375
      %v2377 = vpop.f32.mrf.mxu0
      %2378 = vmatprep.mubr.bf16.mxu0 %v1274
      %2379 = vmatmul.mubr.bf16.gmra.mxu0 %v1273
      %v2380 = vpop.f32.mrf.mxu0
      %v2381 = vadd.f32 %v2092, %v2380
      %v2382 = vpop.f32.mrf.mxu0
      %v2383 = vpop.f32.mrf.mxu0
      %v2384 = vadd.f32 %v2095, %v2383
      %v2385 = vpop.f32.mrf.mxu0
      %2386 = vmatprep.mubr.bf16.mxu0 %v1281
      %2387 = vmatmul.mubr.bf16.gmra.mxu0 %v1280
      %v2388 = vpop.f32.mrf.mxu0
      %v2389 = vadd.f32 %v2100, %v2388
      %v2390 = vpop.f32.mrf.mxu0
      %v2391 = vpop.f32.mrf.mxu0
      %v2392 = vadd.f32 %v2103, %v2391
      %v2393 = vpop.f32.mrf.mxu0
      %2394 = vmatprep.mubr.bf16.mxu0 %v1288
      %2395 = vmatmul.mubr.bf16.gmra.mxu0 %v1287
      %v2396 = vpop.f32.mrf.mxu0
      %v2397 = vadd.f32 %v2108, %v2396
      %v2398 = vpop.f32.mrf.mxu0
      %v2399 = vpop.f32.mrf.mxu0
      %v2400 = vadd.f32 %v2111, %v2399
      %v2401 = vpop.f32.mrf.mxu0
      %2402 = vmatprep.mubr.bf16.mxu0 %v1295
      %2403 = vmatmul.mubr.bf16.gmra.mxu0 %v1294
      %v2404 = vpop.f32.mrf.mxu0
      %v2405 = vadd.f32 %v2116, %v2404
      %v2406 = vpop.f32.mrf.mxu0
      %v2407 = vpop.f32.mrf.mxu0
      %v2408 = vadd.f32 %v2119, %v2407
      %v2409 = vpop.f32.mrf.mxu0
      %2410 = vmatprep.mubr.bf16.mxu0 %v1302
      %2411 = vmatmul.mubr.bf16.gmra.mxu0 %v1301
      %v2412 = vpop.f32.mrf.mxu0
      %v2413 = vadd.f32 %v2124, %v2412
      %v2414 = vpop.f32.mrf.mxu0
      %v2415 = vpop.f32.mrf.mxu0
      %v2416 = vadd.f32 %v2127, %v2415
      %v2417 = vpop.f32.mrf.mxu0
      %2418 = vmatprep.mubr.bf16.mxu0 %v1309
      %2419 = vmatmul.mubr.bf16.gmra.mxu0 %v1308
      %v2420 = vpop.f32.mrf.mxu0
      %v2421 = vadd.f32 %v2132, %v2420
      %v2422 = vpop.f32.mrf.mxu0
      %v2423 = vpop.f32.mrf.mxu0
      %v2424 = vadd.f32 %v2135, %v2423
      %v2425 = vpop.f32.mrf.mxu0
      %2426 = vmatprep.mubr.bf16.mxu0 %v1316
      %2427 = vmatmul.mubr.bf16.gmra.mxu0 %v1315
      %v2428 = vpop.f32.mrf.mxu0
      %v2429 = vadd.f32 %v2140, %v2428
      %v2430 = vpop.f32.mrf.mxu0
      %v2431 = vpop.f32.mrf.mxu0
      %v2432 = vadd.f32 %v2143, %v2431
      %v2433 = vpop.f32.mrf.mxu0
      %2434 = vmatprep.mubr.bf16.mxu0 %v1323
      %2435 = vmatmul.mubr.bf16.gmra.mxu0 %v1322
      %v2436 = vpop.f32.mrf.mxu0
      %v2437 = vadd.f32 %v2148, %v2436
      %v2438 = vpop.f32.mrf.mxu0
      %v2439 = vpop.f32.mrf.mxu0
      %v2440 = vadd.f32 %v2151, %v2439
      %v2441 = vpop.f32.mrf.mxu0
      %2442 = vmatprep.mubr.bf16.mxu0 %v1330
      %2443 = vmatmul.mubr.bf16.gmra.mxu0 %v1329
      %v2444 = vpop.f32.mrf.mxu0
      %v2445 = vadd.f32 %v2156, %v2444
      %v2446 = vpop.f32.mrf.mxu0
      %v2447 = vpop.f32.mrf.mxu0
      %v2448 = vadd.f32 %v2159, %v2447
      %v2449 = vpop.f32.mrf.mxu0
      %2450 = vmatprep.mubr.bf16.mxu0 %v1337
      %2451 = vmatmul.mubr.bf16.gmra.mxu0 %v1336
      %v2452 = vpop.f32.mrf.mxu0
      %v2453 = vadd.f32 %v2164, %v2452
      %v2454 = vpop.f32.mrf.mxu0
      %v2455 = vpop.f32.mrf.mxu0
      %v2456 = vadd.f32 %v2167, %v2455
      %v2457 = vpop.f32.mrf.mxu0
      %2458 = vmatprep.mubr.bf16.mxu0 %v1344
      %2459 = vmatmul.mubr.bf16.gmra.mxu0 %v1343
      %v2460 = vpop.f32.mrf.mxu0
      %v2461 = vadd.f32 %v2172, %v2460
      %v2462 = vpop.f32.mrf.mxu0
      %v2463 = vpop.f32.mrf.mxu0
      %v2464 = vadd.f32 %v2175, %v2463
      %v2465 = vpop.f32.mrf.mxu0
      %2466 = vmatprep.mubr.bf16.mxu0 %v1351
      %2467 = vmatmul.mubr.bf16.gmra.mxu0 %v1350
      %v2468 = vpop.f32.mrf.mxu0
      %v2469 = vadd.f32 %v2180, %v2468
      %v2470 = vpop.f32.mrf.mxu0
      %v2471 = vpop.f32.mrf.mxu0
      %v2472 = vadd.f32 %v2183, %v2471
      %v2473 = vpop.f32.mrf.mxu0
      %2474 = vmatprep.mubr.bf16.mxu0 %v1358
      %2475 = vmatmul.mubr.bf16.gmra.mxu0 %v1357
      %v2476 = vpop.f32.mrf.mxu0
      %v2477 = vadd.f32 %v2188, %v2476
      %v2478 = vpop.f32.mrf.mxu0
      %v2479 = vpop.f32.mrf.mxu0
      %v2480 = vadd.f32 %v2191, %v2479
      %v2481 = vpop.f32.mrf.mxu0
      %2482 = vmatprep.mubr.bf16.mxu0 %v1365
      %2483 = vmatmul.mubr.bf16.gmra.mxu0 %v1364
      %v2484 = vpop.f32.mrf.mxu0
      %v2485 = vadd.f32 %v2196, %v2484
      %v2486 = vpop.f32.mrf.mxu0
      %v2487 = vpop.f32.mrf.mxu0
      %v2488 = vadd.f32 %v2199, %v2487
      %v2489 = vpop.f32.mrf.mxu0
      %2490 = vmatprep.mubr.bf16.mxu0 %v1372
      %2491 = vmatmul.mubr.bf16.gmra.mxu0 %v1371
      %v2492 = vpop.f32.mrf.mxu0
      %v2493 = vadd.f32 %v2204, %v2492
      %v2494 = vpop.f32.mrf.mxu0
      %v2495 = vpop.f32.mrf.mxu0
      %v2496 = vadd.f32 %v2207, %v2495
      %v2497 = vpop.f32.mrf.mxu0
      %2498 = vmatprep.mubr.bf16.mxu0 %v1379
      %2499 = vmatmul.mubr.bf16.gmra.mxu0 %v1378
      %v2500 = vpop.f32.mrf.mxu0
      %v2501 = vadd.f32 %v2212, %v2500
      %v2502 = vpop.f32.mrf.mxu0
      %v2503 = vpop.f32.mrf.mxu0
      %v2504 = vadd.f32 %v2215, %v2503
      %v2505 = vpop.f32.mrf.mxu0
      %2506 = vmatprep.mubr.bf16.mxu0 %v1386
      %2507 = vmatmul.mubr.bf16.gmra.mxu0 %v1385
      %v2508 = vpop.f32.mrf.mxu0
      %v2509 = vadd.f32 %v2220, %v2508
      %v2510 = vpop.f32.mrf.mxu0
      %v2511 = vpop.f32.mrf.mxu0
      %v2512 = vadd.f32 %v2223, %v2511
      %v2513 = vpop.f32.mrf.mxu0
      %2514 = vmatprep.mubr.bf16.mxu0 %v1393
      %2515 = vmatmul.mubr.bf16.gmra.mxu0 %v1392
      %v2516 = vpop.f32.mrf.mxu0
      %v2517 = vadd.f32 %v2228, %v2516
      %v2518 = vpop.f32.mrf.mxu0
      %v2519 = vpop.f32.mrf.mxu0
      %v2520 = vadd.f32 %v2231, %v2519
      %v2521 = vpop.f32.mrf.mxu0
      %2522 = vmatprep.mubr.bf16.mxu0 %v1400
      %2523 = vmatmul.mubr.bf16.gmra.mxu0 %v1399
      %v2524 = vpop.f32.mrf.mxu0
      %v2525 = vadd.f32 %v2236, %v2524
      %v2526 = vpop.f32.mrf.mxu0
      %v2527 = vpop.f32.mrf.mxu0
      %v2528 = vadd.f32 %v2239, %v2527
      %v2529 = vpop.f32.mrf.mxu0
      %2530 = vmatprep.mubr.bf16.mxu0 %v1407
      %2531 = vmatmul.mubr.bf16.gmra.mxu0 %v1406
      %v2532 = vpop.f32.mrf.mxu0
      %v2533 = vadd.f32 %v2244, %v2532
      %v2534 = vpop.f32.mrf.mxu0
      %v2535 = vpop.f32.mrf.mxu0
      %v2536 = vadd.f32 %v2247, %v2535
      %v2537 = vpop.f32.mrf.mxu0
      %2538 = vmatprep.mubr.bf16.mxu0 %v1414
      %2539 = vmatmul.mubr.bf16.gmra.mxu0 %v1413
      %v2540 = vpop.f32.mrf.mxu0
      %v2541 = vadd.f32 %v2252, %v2540
      %v2542 = vpop.f32.mrf.mxu0
      %v2543 = vpop.f32.mrf.mxu0
      %v2544 = vadd.f32 %v2255, %v2543
      %v2545 = vpop.f32.mrf.mxu0
      %2546 = vmatprep.mubr.bf16.mxu0 %v1421
      %2547 = vmatmul.mubr.bf16.gmra.mxu0 %v1420
      %v2548 = vpop.f32.mrf.mxu0
      %v2549 = vadd.f32 %v2260, %v2548
      %v2550 = vpop.f32.mrf.mxu0
      %v2551 = vpop.f32.mrf.mxu0
      %v2552 = vadd.f32 %v2263, %v2551
      %v2553 = vpop.f32.mrf.mxu0
      %2554 = vmatprep.mubr.bf16.mxu0 %v1428
      %2555 = vmatmul.mubr.bf16.gmra.mxu0 %v1427
      %v2556 = vpop.f32.mrf.mxu0
      %v2557 = vadd.f32 %v2268, %v2556
      %v2558 = vpop.f32.mrf.mxu0
      %v2559 = vpop.f32.mrf.mxu0
      %v2560 = vadd.f32 %v2271, %v2559
      %v2561 = vpop.f32.mrf.mxu0
      %2562 = vmatprep.mubr.bf16.mxu0 %v1435
      %2563 = vmatmul.mubr.bf16.gmra.mxu0 %v1434
      %v2564 = vpop.f32.mrf.mxu0
      %v2565 = vadd.f32 %v2276, %v2564
      %v2566 = vpop.f32.mrf.mxu0
      %v2567 = vpop.f32.mrf.mxu0
      %v2568 = vadd.f32 %v2279, %v2567
      %v2569 = vpop.f32.mrf.mxu0
      %2570 = vmatprep.mubr.bf16.mxu0 %v1442
      %2571 = vmatmul.mubr.bf16.gmra.mxu0 %v1441
      %v2572 = vpop.f32.mrf.mxu0
      %v2573 = vadd.f32 %v2284, %v2572
      %v2574 = vpop.f32.mrf.mxu0
      %v2575 = vpop.f32.mrf.mxu0
      %v2576 = vadd.f32 %v2287, %v2575
      %v2577 = vpop.f32.mrf.mxu0
      %2578 = vmatprep.mubr.bf16.mxu0 %v1449
      %2579 = vmatmul.mubr.bf16.gmra.mxu0 %v1448
      %v2580 = vpop.f32.mrf.mxu0
      %v2581 = vadd.f32 %v2292, %v2580
      %v2582 = vpop.f32.mrf.mxu0
      %v2583 = vpop.f32.mrf.mxu0
      %v2584 = vadd.f32 %v2295, %v2583
      %v2585 = vpop.f32.mrf.mxu0
      %2586 = vmatprep.mubr.bf16.mxu0 %v1456
      %2587 = vmatmul.mubr.bf16.gmra.mxu0 %v1455
      %v2588 = vpop.f32.mrf.mxu0
      %v2589 = vadd.f32 %v2300, %v2588
      %v2590 = vpop.f32.mrf.mxu0
      %v2591 = vpop.f32.mrf.mxu0
      %v2592 = vadd.f32 %v2303, %v2591
      %v2593 = vpop.f32.mrf.mxu0
      %2594 = vmatprep.mubr.bf16.mxu0 %v1463
      %2595 = vmatmul.mubr.bf16.gmra.mxu0 %v1462
      %v2596 = vpop.f32.mrf.mxu0
      %v2597 = vadd.f32 %v2308, %v2596
      %v2598 = vpop.f32.mrf.mxu0
      %v2599 = vpop.f32.mrf.mxu0
      %v2600 = vadd.f32 %v2311, %v2599
      %v2601 = vpop.f32.mrf.mxu0
      %2602 = vmatprep.mubr.bf16.mxu0 %v1470
      %2603 = vmatmul.mubr.bf16.gmra.mxu0 %v1469
      %v2604 = vpop.f32.mrf.mxu0
      %v2605 = vadd.f32 %v2316, %v2604
      %v2606 = vpop.f32.mrf.mxu0
      %v2607 = vpop.f32.mrf.mxu0
      %v2608 = vadd.f32 %v2319, %v2607
      %v2609 = vpop.f32.mrf.mxu0
      %2610 = vmatprep.mubr.bf16.mxu0 %v1477
      %2611 = vmatmul.mubr.bf16.gmra.mxu0 %v1476
      %v2612 = vpop.f32.mrf.mxu0
      %v2613 = vadd.f32 %v2324, %v2612
      %v2614 = vpop.f32.mrf.mxu0
      %v2615 = vpop.f32.mrf.mxu0
      %v2616 = vadd.f32 %v2327, %v2615
      %v2617 = vpop.f32.mrf.mxu0
      %2618 = vdwg.mxu0
      %2619 = vmatprep.subr.bf16.mxu0 0
      %2620 = vmatpush1.bf16.msra.mxu0 %v1968
      %2621 = vmatprep.subr.bf16.mxu0 0
      %2622 = vmatpush1.bf16.msra.mxu0 %v1967
      %2623 = vmatprep.subr.bf16.mxu0 0
      %2624 = vmatpush1.bf16.msra.mxu0 %v1966
      %2625 = vmatprep.subr.bf16.mxu0 0
      %2626 = vmatpush1.bf16.msra.mxu0 %v1965
      %2627 = vmatprep.subr.bf16.mxu0 0
      %2628 = vmatpush1.bf16.msra.mxu0 %v1964
      %2629 = vmatprep.subr.bf16.mxu0 0
      %2630 = vmatpush1.bf16.msra.mxu0 %v1963
      %2631 = vmatprep.subr.bf16.mxu0 0
      %2632 = vmatpush1.bf16.msra.mxu0 %v1962
      %2633 = vmatprep.subr.bf16.mxu0 0
      %2634 = vmatpush1.bf16.msra.mxu0 %v1961
      %2635 = vmatprep.subr.bf16.mxu0 0
      %2636 = vmatpush2.bf16.msra.mxu0 %v1976
      %2637 = vmatprep.subr.bf16.mxu0 0
      %2638 = vmatpush2.bf16.msra.mxu0 %v1975
      %2639 = vmatprep.subr.bf16.mxu0 0
      %2640 = vmatpush2.bf16.msra.mxu0 %v1974
      %2641 = vmatprep.subr.bf16.mxu0 0
      %2642 = vmatpush2.bf16.msra.mxu0 %v1973
      %2643 = vmatprep.subr.bf16.mxu0 0
      %2644 = vmatpush2.bf16.msra.mxu0 %v1972
      %2645 = vmatprep.subr.bf16.mxu0 0
      %2646 = vmatpush2.bf16.msra.mxu0 %v1971
      %2647 = vmatprep.subr.bf16.mxu0 0
      %2648 = vmatpush2.bf16.msra.mxu0 %v1970
      %2649 = vmatprep.subr.bf16.mxu0 0
      %2650 = vmatpush2.bf16.msra.mxu0 %v1969
      %2651 = vmatprep.mubr.bf16.mxu0 %v1262
      %2652 = vmatmul.mubr.bf16.gmra.mxu0 %v1261
      %v2653 = vpop.f32.mrf.mxu0
      %v2654 = vadd.f32 %v2365, %v2653
      %v2655 = vpop.f32.mrf.mxu0
      %v2656 = vpop.f32.mrf.mxu0
      %v2657 = vadd.f32 %v2368, %v2656
      %v2658 = vpop.f32.mrf.mxu0
      %2659 = vmatprep.mubr.bf16.mxu0 %v1269
      %2660 = vmatmul.mubr.bf16.gmra.mxu0 %v1268
      %v2661 = vpop.f32.mrf.mxu0
      %v2662 = vadd.f32 %v2373, %v2661
      %v2663 = vpop.f32.mrf.mxu0
      %v2664 = vpop.f32.mrf.mxu0
      %v2665 = vadd.f32 %v2376, %v2664
      %v2666 = vpop.f32.mrf.mxu0
      %2667 = vmatprep.mubr.bf16.mxu0 %v1276
      %2668 = vmatmul.mubr.bf16.gmra.mxu0 %v1275
      %v2669 = vpop.f32.mrf.mxu0
      %v2670 = vadd.f32 %v2381, %v2669
      %v2671 = vpop.f32.mrf.mxu0
      %v2672 = vpop.f32.mrf.mxu0
      %v2673 = vadd.f32 %v2384, %v2672
      %v2674 = vpop.f32.mrf.mxu0
      %2675 = vmatprep.mubr.bf16.mxu0 %v1283
      %2676 = vmatmul.mubr.bf16.gmra.mxu0 %v1282
      %v2677 = vpop.f32.mrf.mxu0
      %v2678 = vadd.f32 %v2389, %v2677
      %v2679 = vpop.f32.mrf.mxu0
      %v2680 = vpop.f32.mrf.mxu0
      %v2681 = vadd.f32 %v2392, %v2680
      %v2682 = vpop.f32.mrf.mxu0
      %2683 = vmatprep.mubr.bf16.mxu0 %v1290
      %2684 = vmatmul.mubr.bf16.gmra.mxu0 %v1289
      %v2685 = vpop.f32.mrf.mxu0
      %v2686 = vadd.f32 %v2397, %v2685
      %v2687 = vpop.f32.mrf.mxu0
      %v2688 = vpop.f32.mrf.mxu0
      %v2689 = vadd.f32 %v2400, %v2688
      %v2690 = vpop.f32.mrf.mxu0
      %2691 = vmatprep.mubr.bf16.mxu0 %v1297
      %2692 = vmatmul.mubr.bf16.gmra.mxu0 %v1296
      %v2693 = vpop.f32.mrf.mxu0
      %v2694 = vadd.f32 %v2405, %v2693
      %v2695 = vpop.f32.mrf.mxu0
      %v2696 = vpop.f32.mrf.mxu0
      %v2697 = vadd.f32 %v2408, %v2696
      %v2698 = vpop.f32.mrf.mxu0
      %2699 = vmatprep.mubr.bf16.mxu0 %v1304
      %2700 = vmatmul.mubr.bf16.gmra.mxu0 %v1303
      %v2701 = vpop.f32.mrf.mxu0
      %v2702 = vadd.f32 %v2413, %v2701
      %v2703 = vpop.f32.mrf.mxu0
      %v2704 = vpop.f32.mrf.mxu0
      %v2705 = vadd.f32 %v2416, %v2704
      %v2706 = vpop.f32.mrf.mxu0
      %2707 = vmatprep.mubr.bf16.mxu0 %v1311
      %2708 = vmatmul.mubr.bf16.gmra.mxu0 %v1310
      %v2709 = vpop.f32.mrf.mxu0
      %v2710 = vadd.f32 %v2421, %v2709
      %v2711 = vpop.f32.mrf.mxu0
      %v2712 = vpop.f32.mrf.mxu0
      %v2713 = vadd.f32 %v2424, %v2712
      %v2714 = vpop.f32.mrf.mxu0
      %2715 = vmatprep.mubr.bf16.mxu0 %v1318
      %2716 = vmatmul.mubr.bf16.gmra.mxu0 %v1317
      %v2717 = vpop.f32.mrf.mxu0
      %v2718 = vadd.f32 %v2429, %v2717
      %v2719 = vpop.f32.mrf.mxu0
      %v2720 = vpop.f32.mrf.mxu0
      %v2721 = vadd.f32 %v2432, %v2720
      %v2722 = vpop.f32.mrf.mxu0
      %2723 = vmatprep.mubr.bf16.mxu0 %v1325
      %2724 = vmatmul.mubr.bf16.gmra.mxu0 %v1324
      %v2725 = vpop.f32.mrf.mxu0
      %v2726 = vadd.f32 %v2437, %v2725
      %v2727 = vpop.f32.mrf.mxu0
      %v2728 = vpop.f32.mrf.mxu0
      %v2729 = vadd.f32 %v2440, %v2728
      %v2730 = vpop.f32.mrf.mxu0
      %2731 = vmatprep.mubr.bf16.mxu0 %v1332
      %2732 = vmatmul.mubr.bf16.gmra.mxu0 %v1331
      %v2733 = vpop.f32.mrf.mxu0
      %v2734 = vadd.f32 %v2445, %v2733
      %v2735 = vpop.f32.mrf.mxu0
      %v2736 = vpop.f32.mrf.mxu0
      %v2737 = vadd.f32 %v2448, %v2736
      %v2738 = vpop.f32.mrf.mxu0
      %2739 = vmatprep.mubr.bf16.mxu0 %v1339
      %2740 = vmatmul.mubr.bf16.gmra.mxu0 %v1338
      %v2741 = vpop.f32.mrf.mxu0
      %v2742 = vadd.f32 %v2453, %v2741
      %v2743 = vpop.f32.mrf.mxu0
      %v2744 = vpop.f32.mrf.mxu0
      %v2745 = vadd.f32 %v2456, %v2744
      %v2746 = vpop.f32.mrf.mxu0
      %2747 = vmatprep.mubr.bf16.mxu0 %v1346
      %2748 = vmatmul.mubr.bf16.gmra.mxu0 %v1345
      %v2749 = vpop.f32.mrf.mxu0
      %v2750 = vadd.f32 %v2461, %v2749
      %v2751 = vpop.f32.mrf.mxu0
      %v2752 = vpop.f32.mrf.mxu0
      %v2753 = vadd.f32 %v2464, %v2752
      %v2754 = vpop.f32.mrf.mxu0
      %2755 = vmatprep.mubr.bf16.mxu0 %v1353
      %2756 = vmatmul.mubr.bf16.gmra.mxu0 %v1352
      %v2757 = vpop.f32.mrf.mxu0
      %v2758 = vadd.f32 %v2469, %v2757
      %v2759 = vpop.f32.mrf.mxu0
      %v2760 = vpop.f32.mrf.mxu0
      %v2761 = vadd.f32 %v2472, %v2760
      %v2762 = vpop.f32.mrf.mxu0
      %2763 = vmatprep.mubr.bf16.mxu0 %v1360
      %2764 = vmatmul.mubr.bf16.gmra.mxu0 %v1359
      %v2765 = vpop.f32.mrf.mxu0
      %v2766 = vadd.f32 %v2477, %v2765
      %v2767 = vpop.f32.mrf.mxu0
      %v2768 = vpop.f32.mrf.mxu0
      %v2769 = vadd.f32 %v2480, %v2768
      %v2770 = vpop.f32.mrf.mxu0
      %2771 = vmatprep.mubr.bf16.mxu0 %v1367
      %2772 = vmatmul.mubr.bf16.gmra.mxu0 %v1366
      %v2773 = vpop.f32.mrf.mxu0
      %v2774 = vadd.f32 %v2485, %v2773
      %v2775 = vpop.f32.mrf.mxu0
      %v2776 = vpop.f32.mrf.mxu0
      %v2777 = vadd.f32 %v2488, %v2776
      %v2778 = vpop.f32.mrf.mxu0
      %2779 = vmatprep.mubr.bf16.mxu0 %v1374
      %2780 = vmatmul.mubr.bf16.gmra.mxu0 %v1373
      %v2781 = vpop.f32.mrf.mxu0
      %v2782 = vadd.f32 %v2493, %v2781
      %v2783 = vpop.f32.mrf.mxu0
      %v2784 = vpop.f32.mrf.mxu0
      %v2785 = vadd.f32 %v2496, %v2784
      %v2786 = vpop.f32.mrf.mxu0
      %2787 = vmatprep.mubr.bf16.mxu0 %v1381
      %2788 = vmatmul.mubr.bf16.gmra.mxu0 %v1380
      %v2789 = vpop.f32.mrf.mxu0
      %v2790 = vadd.f32 %v2501, %v2789
      %v2791 = vpop.f32.mrf.mxu0
      %v2792 = vpop.f32.mrf.mxu0
      %v2793 = vadd.f32 %v2504, %v2792
      %v2794 = vpop.f32.mrf.mxu0
      %2795 = vmatprep.mubr.bf16.mxu0 %v1388
      %2796 = vmatmul.mubr.bf16.gmra.mxu0 %v1387
      %v2797 = vpop.f32.mrf.mxu0
      %v2798 = vadd.f32 %v2509, %v2797
      %v2799 = vpop.f32.mrf.mxu0
      %v2800 = vpop.f32.mrf.mxu0
      %v2801 = vadd.f32 %v2512, %v2800
      %v2802 = vpop.f32.mrf.mxu0
      %2803 = vmatprep.mubr.bf16.mxu0 %v1395
      %2804 = vmatmul.mubr.bf16.gmra.mxu0 %v1394
      %v2805 = vpop.f32.mrf.mxu0
      %v2806 = vadd.f32 %v2517, %v2805
      %v2807 = vpop.f32.mrf.mxu0
      %v2808 = vpop.f32.mrf.mxu0
      %v2809 = vadd.f32 %v2520, %v2808
      %v2810 = vpop.f32.mrf.mxu0
      %2811 = vmatprep.mubr.bf16.mxu0 %v1402
      %2812 = vmatmul.mubr.bf16.gmra.mxu0 %v1401
      %v2813 = vpop.f32.mrf.mxu0
      %v2814 = vadd.f32 %v2525, %v2813
      %v2815 = vpop.f32.mrf.mxu0
      %v2816 = vpop.f32.mrf.mxu0
      %v2817 = vadd.f32 %v2528, %v2816
      %v2818 = vpop.f32.mrf.mxu0
      %2819 = vmatprep.mubr.bf16.mxu0 %v1409
      %2820 = vmatmul.mubr.bf16.gmra.mxu0 %v1408
      %v2821 = vpop.f32.mrf.mxu0
      %v2822 = vadd.f32 %v2533, %v2821
      %v2823 = vpop.f32.mrf.mxu0
      %v2824 = vpop.f32.mrf.mxu0
      %v2825 = vadd.f32 %v2536, %v2824
      %v2826 = vpop.f32.mrf.mxu0
      %2827 = vmatprep.mubr.bf16.mxu0 %v1416
      %2828 = vmatmul.mubr.bf16.gmra.mxu0 %v1415
      %v2829 = vpop.f32.mrf.mxu0
      %v2830 = vadd.f32 %v2541, %v2829
      %v2831 = vpop.f32.mrf.mxu0
      %v2832 = vpop.f32.mrf.mxu0
      %v2833 = vadd.f32 %v2544, %v2832
      %v2834 = vpop.f32.mrf.mxu0
      %2835 = vmatprep.mubr.bf16.mxu0 %v1423
      %2836 = vmatmul.mubr.bf16.gmra.mxu0 %v1422
      %v2837 = vpop.f32.mrf.mxu0
      %v2838 = vadd.f32 %v2549, %v2837
      %v2839 = vpop.f32.mrf.mxu0
      %v2840 = vpop.f32.mrf.mxu0
      %v2841 = vadd.f32 %v2552, %v2840
      %v2842 = vpop.f32.mrf.mxu0
      %2843 = vmatprep.mubr.bf16.mxu0 %v1430
      %2844 = vmatmul.mubr.bf16.gmra.mxu0 %v1429
      %v2845 = vpop.f32.mrf.mxu0
      %v2846 = vadd.f32 %v2557, %v2845
      %v2847 = vpop.f32.mrf.mxu0
      %v2848 = vpop.f32.mrf.mxu0
      %v2849 = vadd.f32 %v2560, %v2848
      %v2850 = vpop.f32.mrf.mxu0
      %2851 = vmatprep.mubr.bf16.mxu0 %v1437
      %2852 = vmatmul.mubr.bf16.gmra.mxu0 %v1436
      %v2853 = vpop.f32.mrf.mxu0
      %v2854 = vadd.f32 %v2565, %v2853
      %v2855 = vpop.f32.mrf.mxu0
      %v2856 = vpop.f32.mrf.mxu0
      %v2857 = vadd.f32 %v2568, %v2856
      %v2858 = vpop.f32.mrf.mxu0
      %2859 = vmatprep.mubr.bf16.mxu0 %v1444
      %2860 = vmatmul.mubr.bf16.gmra.mxu0 %v1443
      %v2861 = vpop.f32.mrf.mxu0
      %v2862 = vadd.f32 %v2573, %v2861
      %v2863 = vpop.f32.mrf.mxu0
      %v2864 = vpop.f32.mrf.mxu0
      %v2865 = vadd.f32 %v2576, %v2864
      %v2866 = vpop.f32.mrf.mxu0
      %2867 = vmatprep.mubr.bf16.mxu0 %v1451
      %2868 = vmatmul.mubr.bf16.gmra.mxu0 %v1450
      %v2869 = vpop.f32.mrf.mxu0
      %v2870 = vadd.f32 %v2581, %v2869
      %v2871 = vpop.f32.mrf.mxu0
      %v2872 = vpop.f32.mrf.mxu0
      %v2873 = vadd.f32 %v2584, %v2872
      %v2874 = vpop.f32.mrf.mxu0
      %2875 = vmatprep.mubr.bf16.mxu0 %v1458
      %2876 = vmatmul.mubr.bf16.gmra.mxu0 %v1457
      %v2877 = vpop.f32.mrf.mxu0
      %v2878 = vadd.f32 %v2589, %v2877
      %v2879 = vpop.f32.mrf.mxu0
      %v2880 = vpop.f32.mrf.mxu0
      %v2881 = vadd.f32 %v2592, %v2880
      %v2882 = vpop.f32.mrf.mxu0
      %2883 = vmatprep.mubr.bf16.mxu0 %v1465
      %2884 = vmatmul.mubr.bf16.gmra.mxu0 %v1464
      %v2885 = vpop.f32.mrf.mxu0
      %v2886 = vadd.f32 %v2597, %v2885
      %v2887 = vpop.f32.mrf.mxu0
      %v2888 = vpop.f32.mrf.mxu0
      %v2889 = vadd.f32 %v2600, %v2888
      %v2890 = vpop.f32.mrf.mxu0
      %2891 = vmatprep.mubr.bf16.mxu0 %v1472
      %2892 = vmatmul.mubr.bf16.gmra.mxu0 %v1471
      %v2893 = vpop.f32.mrf.mxu0
      %v2894 = vadd.f32 %v2605, %v2893
      %v2895 = vpop.f32.mrf.mxu0
      %v2896 = vpop.f32.mrf.mxu0
      %v2897 = vadd.f32 %v2608, %v2896
      %v2898 = vpop.f32.mrf.mxu0
      %2899 = vmatprep.mubr.bf16.mxu0 %v1479
      %2900 = vmatmul.mubr.bf16.gmra.mxu0 %v1478
      %v2901 = vpop.f32.mrf.mxu0
      %v2902 = vadd.f32 %v2613, %v2901
      %v2903 = vpop.f32.mrf.mxu0
      %v2904 = vpop.f32.mrf.mxu0
      %v2905 = vadd.f32 %v2616, %v2904
      %v2906 = vpop.f32.mrf.mxu0
      %2907 = vdwg.mxu0
      %2908 = vmatprep.subr.bf16.mxu0 0
      %2909 = vmatpush1.bf16.msra.mxu0 %v1984
      %2910 = vmatprep.subr.bf16.mxu0 0
      %2911 = vmatpush1.bf16.msra.mxu0 %v1983
      %2912 = vmatprep.subr.bf16.mxu0 0
      %2913 = vmatpush1.bf16.msra.mxu0 %v1982
      %2914 = vmatprep.subr.bf16.mxu0 0
      %2915 = vmatpush1.bf16.msra.mxu0 %v1981
      %2916 = vmatprep.subr.bf16.mxu0 0
      %2917 = vmatpush1.bf16.msra.mxu0 %v1980
      %2918 = vmatprep.subr.bf16.mxu0 0
      %2919 = vmatpush1.bf16.msra.mxu0 %v1979
      %2920 = vmatprep.subr.bf16.mxu0 0
      %2921 = vmatpush1.bf16.msra.mxu0 %v1978
      %2922 = vmatprep.subr.bf16.mxu0 0
      %2923 = vmatpush1.bf16.msra.mxu0 %v1977
      %2924 = vmatprep.subr.bf16.mxu0 0
      %2925 = vmatpush2.bf16.msra.mxu0 0
      %2926 = vmatprep.subr.bf16.mxu0 0
      %2927 = vmatpush2.bf16.msra.mxu0 0
      %2928 = vmatprep.subr.bf16.mxu0 0
      %2929 = vmatpush2.bf16.msra.mxu0 0
      %2930 = vmatprep.subr.bf16.mxu0 0
      %2931 = vmatpush2.bf16.msra.mxu0 0
      %2932 = vmatprep.subr.bf16.mxu0 0
      %2933 = vmatpush2.bf16.msra.mxu0 0
      %2934 = vmatprep.subr.bf16.mxu0 0
      %2935 = vmatpush2.bf16.msra.mxu0 0
      %2936 = vmatprep.subr.bf16.mxu0 0
      %2937 = vmatpush2.bf16.msra.mxu0 0
      %2938 = vmatprep.subr.bf16.mxu0 0
      %2939 = vmatpush2.bf16.msra.mxu0 0
      %2940 = vmatprep.mubr.bf16.mxu0 0
      %2941 = vmatmul.mubr.bf16.gmra.mxu0 %v1263
      %v2942 = vpop.f32.mrf.mxu0
      %v2943 = vadd.f32 %v2654, %v2942
      %v2944 = vpop.f32.mrf.mxu0
      %v2945 = vpop.f32.mrf.mxu0
      %v2946 = vadd.f32 %v2657, %v2945
      %v2947 = vpop.f32.mrf.mxu0
      %2948 = vmatprep.mubr.bf16.mxu0 0
      %2949 = vmatmul.mubr.bf16.gmra.mxu0 %v1270
      %v2950 = vpop.f32.mrf.mxu0
      %v2951 = vadd.f32 %v2662, %v2950
      %v2952 = vpop.f32.mrf.mxu0
      %v2953 = vpop.f32.mrf.mxu0
      %v2954 = vadd.f32 %v2665, %v2953
      %v2955 = vpop.f32.mrf.mxu0
      %2956 = vmatprep.mubr.bf16.mxu0 0
      %2957 = vmatmul.mubr.bf16.gmra.mxu0 %v1277
      %v2958 = vpop.f32.mrf.mxu0
      %v2959 = vadd.f32 %v2670, %v2958
      %v2960 = vpop.f32.mrf.mxu0
      %v2961 = vpop.f32.mrf.mxu0
      %v2962 = vadd.f32 %v2673, %v2961
      %v2963 = vpop.f32.mrf.mxu0
      %2964 = vmatprep.mubr.bf16.mxu0 0
      %2965 = vmatmul.mubr.bf16.gmra.mxu0 %v1284
      %v2966 = vpop.f32.mrf.mxu0
      %v2967 = vadd.f32 %v2678, %v2966
      %v2968 = vpop.f32.mrf.mxu0
      %v2969 = vpop.f32.mrf.mxu0
      %v2970 = vadd.f32 %v2681, %v2969
      %v2971 = vpop.f32.mrf.mxu0
      %2972 = vmatprep.mubr.bf16.mxu0 0
      %2973 = vmatmul.mubr.bf16.gmra.mxu0 %v1291
      %v2974 = vpop.f32.mrf.mxu0
      %v2975 = vadd.f32 %v2686, %v2974
      %v2976 = vpop.f32.mrf.mxu0
      %v2977 = vpop.f32.mrf.mxu0
      %v2978 = vadd.f32 %v2689, %v2977
      %v2979 = vpop.f32.mrf.mxu0
      %2980 = vmatprep.mubr.bf16.mxu0 0
      %2981 = vmatmul.mubr.bf16.gmra.mxu0 %v1298
      %v2982 = vpop.f32.mrf.mxu0
      %v2983 = vadd.f32 %v2694, %v2982
      %v2984 = vpop.f32.mrf.mxu0
      %v2985 = vpop.f32.mrf.mxu0
      %v2986 = vadd.f32 %v2697, %v2985
      %v2987 = vpop.f32.mrf.mxu0
      %2988 = vmatprep.mubr.bf16.mxu0 0
      %2989 = vmatmul.mubr.bf16.gmra.mxu0 %v1305
      %v2990 = vpop.f32.mrf.mxu0
      %v2991 = vadd.f32 %v2702, %v2990
      %v2992 = vpop.f32.mrf.mxu0
      %v2993 = vpop.f32.mrf.mxu0
      %v2994 = vadd.f32 %v2705, %v2993
      %v2995 = vpop.f32.mrf.mxu0
      %2996 = vmatprep.mubr.bf16.mxu0 0
      %2997 = vmatmul.mubr.bf16.gmra.mxu0 %v1312
      %v2998 = vpop.f32.mrf.mxu0
      %v2999 = vadd.f32 %v2710, %v2998
      %v3000 = vpop.f32.mrf.mxu0
      %v3001 = vpop.f32.mrf.mxu0
      %v3002 = vadd.f32 %v2713, %v3001
      %v3003 = vpop.f32.mrf.mxu0
      %3004 = vmatprep.mubr.bf16.mxu0 0
      %3005 = vmatmul.mubr.bf16.gmra.mxu0 %v1319
      %v3006 = vpop.f32.mrf.mxu0
      %v3007 = vadd.f32 %v2718, %v3006
      %v3008 = vpop.f32.mrf.mxu0
      %v3009 = vpop.f32.mrf.mxu0
      %v3010 = vadd.f32 %v2721, %v3009
      %v3011 = vpop.f32.mrf.mxu0
      %3012 = vmatprep.mubr.bf16.mxu0 0
      %3013 = vmatmul.mubr.bf16.gmra.mxu0 %v1326
      %v3014 = vpop.f32.mrf.mxu0
      %v3015 = vadd.f32 %v2726, %v3014
      %v3016 = vpop.f32.mrf.mxu0
      %v3017 = vpop.f32.mrf.mxu0
      %v3018 = vadd.f32 %v2729, %v3017
      %v3019 = vpop.f32.mrf.mxu0
      %3020 = vmatprep.mubr.bf16.mxu0 0
      %3021 = vmatmul.mubr.bf16.gmra.mxu0 %v1333
      %v3022 = vpop.f32.mrf.mxu0
      %v3023 = vadd.f32 %v2734, %v3022
      %v3024 = vpop.f32.mrf.mxu0
      %v3025 = vpop.f32.mrf.mxu0
      %v3026 = vadd.f32 %v2737, %v3025
      %v3027 = vpop.f32.mrf.mxu0
      %3028 = vmatprep.mubr.bf16.mxu0 0
      %3029 = vmatmul.mubr.bf16.gmra.mxu0 %v1340
      %v3030 = vpop.f32.mrf.mxu0
      %v3031 = vadd.f32 %v2742, %v3030
      %v3032 = vpop.f32.mrf.mxu0
      %v3033 = vpop.f32.mrf.mxu0
      %v3034 = vadd.f32 %v2745, %v3033
      %v3035 = vpop.f32.mrf.mxu0
      %3036 = vmatprep.mubr.bf16.mxu0 0
      %3037 = vmatmul.mubr.bf16.gmra.mxu0 %v1347
      %v3038 = vpop.f32.mrf.mxu0
      %v3039 = vadd.f32 %v2750, %v3038
      %v3040 = vpop.f32.mrf.mxu0
      %v3041 = vpop.f32.mrf.mxu0
      %v3042 = vadd.f32 %v2753, %v3041
      %v3043 = vpop.f32.mrf.mxu0
      %3044 = vmatprep.mubr.bf16.mxu0 0
      %3045 = vmatmul.mubr.bf16.gmra.mxu0 %v1354
      %v3046 = vpop.f32.mrf.mxu0
      %v3047 = vadd.f32 %v2758, %v3046
      %v3048 = vpop.f32.mrf.mxu0
      %v3049 = vpop.f32.mrf.mxu0
      %v3050 = vadd.f32 %v2761, %v3049
      %v3051 = vpop.f32.mrf.mxu0
      %3052 = vmatprep.mubr.bf16.mxu0 0
      %3053 = vmatmul.mubr.bf16.gmra.mxu0 %v1361
      %v3054 = vpop.f32.mrf.mxu0
      %v3055 = vadd.f32 %v2766, %v3054
      %v3056 = vpop.f32.mrf.mxu0
      %v3057 = vpop.f32.mrf.mxu0
      %v3058 = vadd.f32 %v2769, %v3057
      %v3059 = vpop.f32.mrf.mxu0
      %3060 = vmatprep.mubr.bf16.mxu0 0
      %3061 = vmatmul.mubr.bf16.gmra.mxu0 %v1368
      %v3062 = vpop.f32.mrf.mxu0
      %v3063 = vadd.f32 %v2774, %v3062
      %v3064 = vpop.f32.mrf.mxu0
      %v3065 = vpop.f32.mrf.mxu0
      %v3066 = vadd.f32 %v2777, %v3065
      %v3067 = vpop.f32.mrf.mxu0
      %3068 = vmatprep.mubr.bf16.mxu0 0
      %3069 = vmatmul.mubr.bf16.gmra.mxu0 %v1375
      %v3070 = vpop.f32.mrf.mxu0
      %v3071 = vadd.f32 %v2782, %v3070
      %v3072 = vpop.f32.mrf.mxu0
      %v3073 = vpop.f32.mrf.mxu0
      %v3074 = vadd.f32 %v2785, %v3073
      %v3075 = vpop.f32.mrf.mxu0
      %3076 = vmatprep.mubr.bf16.mxu0 0
      %3077 = vmatmul.mubr.bf16.gmra.mxu0 %v1382
      %v3078 = vpop.f32.mrf.mxu0
      %v3079 = vadd.f32 %v2790, %v3078
      %v3080 = vpop.f32.mrf.mxu0
      %v3081 = vpop.f32.mrf.mxu0
      %v3082 = vadd.f32 %v2793, %v3081
      %v3083 = vpop.f32.mrf.mxu0
      %3084 = vmatprep.mubr.bf16.mxu0 0
      %3085 = vmatmul.mubr.bf16.gmra.mxu0 %v1389
      %v3086 = vpop.f32.mrf.mxu0
      %v3087 = vadd.f32 %v2798, %v3086
      %v3088 = vpop.f32.mrf.mxu0
      %v3089 = vpop.f32.mrf.mxu0
      %v3090 = vadd.f32 %v2801, %v3089
      %v3091 = vpop.f32.mrf.mxu0
      %3092 = vmatprep.mubr.bf16.mxu0 0
      %3093 = vmatmul.mubr.bf16.gmra.mxu0 %v1396
      %v3094 = vpop.f32.mrf.mxu0
      %v3095 = vadd.f32 %v2806, %v3094
      %v3096 = vpop.f32.mrf.mxu0
      %v3097 = vpop.f32.mrf.mxu0
      %v3098 = vadd.f32 %v2809, %v3097
      %v3099 = vpop.f32.mrf.mxu0
      %3100 = vmatprep.mubr.bf16.mxu0 0
      %3101 = vmatmul.mubr.bf16.gmra.mxu0 %v1403
      %v3102 = vpop.f32.mrf.mxu0
      %v3103 = vadd.f32 %v2814, %v3102
      %v3104 = vpop.f32.mrf.mxu0
      %v3105 = vpop.f32.mrf.mxu0
      %v3106 = vadd.f32 %v2817, %v3105
      %v3107 = vpop.f32.mrf.mxu0
      %3108 = vmatprep.mubr.bf16.mxu0 0
      %3109 = vmatmul.mubr.bf16.gmra.mxu0 %v1410
      %v3110 = vpop.f32.mrf.mxu0
      %v3111 = vadd.f32 %v2822, %v3110
      %v3112 = vpop.f32.mrf.mxu0
      %v3113 = vpop.f32.mrf.mxu0
      %v3114 = vadd.f32 %v2825, %v3113
      %v3115 = vpop.f32.mrf.mxu0
      %3116 = vmatprep.mubr.bf16.mxu0 0
      %3117 = vmatmul.mubr.bf16.gmra.mxu0 %v1417
      %v3118 = vpop.f32.mrf.mxu0
      %v3119 = vadd.f32 %v2830, %v3118
      %v3120 = vpop.f32.mrf.mxu0
      %v3121 = vpop.f32.mrf.mxu0
      %v3122 = vadd.f32 %v2833, %v3121
      %v3123 = vpop.f32.mrf.mxu0
      %3124 = vmatprep.mubr.bf16.mxu0 0
      %3125 = vmatmul.mubr.bf16.gmra.mxu0 %v1424
      %v3126 = vpop.f32.mrf.mxu0
      %v3127 = vadd.f32 %v2838, %v3126
      %v3128 = vpop.f32.mrf.mxu0
      %v3129 = vpop.f32.mrf.mxu0
      %v3130 = vadd.f32 %v2841, %v3129
      %v3131 = vpop.f32.mrf.mxu0
      %3132 = vmatprep.mubr.bf16.mxu0 0
      %3133 = vmatmul.mubr.bf16.gmra.mxu0 %v1431
      %v3134 = vpop.f32.mrf.mxu0
      %v3135 = vadd.f32 %v2846, %v3134
      %v3136 = vpop.f32.mrf.mxu0
      %v3137 = vpop.f32.mrf.mxu0
      %v3138 = vadd.f32 %v2849, %v3137
      %v3139 = vpop.f32.mrf.mxu0
      %3140 = vmatprep.mubr.bf16.mxu0 0
      %3141 = vmatmul.mubr.bf16.gmra.mxu0 %v1438
      %v3142 = vpop.f32.mrf.mxu0
      %v3143 = vadd.f32 %v2854, %v3142
      %v3144 = vpop.f32.mrf.mxu0
      %v3145 = vpop.f32.mrf.mxu0
      %v3146 = vadd.f32 %v2857, %v3145
      %v3147 = vpop.f32.mrf.mxu0
      %3148 = vmatprep.mubr.bf16.mxu0 0
      %3149 = vmatmul.mubr.bf16.gmra.mxu0 %v1445
      %v3150 = vpop.f32.mrf.mxu0
      %v3151 = vadd.f32 %v2862, %v3150
      %v3152 = vpop.f32.mrf.mxu0
      %v3153 = vpop.f32.mrf.mxu0
      %v3154 = vadd.f32 %v2865, %v3153
      %v3155 = vpop.f32.mrf.mxu0
      %3156 = vmatprep.mubr.bf16.mxu0 0
      %3157 = vmatmul.mubr.bf16.gmra.mxu0 %v1452
      %v3158 = vpop.f32.mrf.mxu0
      %v3159 = vadd.f32 %v2870, %v3158
      %v3160 = vpop.f32.mrf.mxu0
      %v3161 = vpop.f32.mrf.mxu0
      %v3162 = vadd.f32 %v2873, %v3161
      %v3163 = vpop.f32.mrf.mxu0
      %3164 = vmatprep.mubr.bf16.mxu0 0
      %3165 = vmatmul.mubr.bf16.gmra.mxu0 %v1459
      %v3166 = vpop.f32.mrf.mxu0
      %v3167 = vadd.f32 %v2878, %v3166
      %v3168 = vpop.f32.mrf.mxu0
      %v3169 = vpop.f32.mrf.mxu0
      %v3170 = vadd.f32 %v2881, %v3169
      %v3171 = vpop.f32.mrf.mxu0
      %3172 = vmatprep.mubr.bf16.mxu0 0
      %3173 = vmatmul.mubr.bf16.gmra.mxu0 %v1466
      %v3174 = vpop.f32.mrf.mxu0
      %v3175 = vadd.f32 %v2886, %v3174
      %v3176 = vpop.f32.mrf.mxu0
      %v3177 = vpop.f32.mrf.mxu0
      %v3178 = vadd.f32 %v2889, %v3177
      %v3179 = vpop.f32.mrf.mxu0
      %3180 = vmatprep.mubr.bf16.mxu0 0
      %3181 = vmatmul.mubr.bf16.gmra.mxu0 %v1473
      %v3182 = vpop.f32.mrf.mxu0
      %v3183 = vadd.f32 %v2894, %v3182
      %v3184 = vpop.f32.mrf.mxu0
      %v3185 = vpop.f32.mrf.mxu0
      %v3186 = vadd.f32 %v2897, %v3185
      %v3187 = vpop.f32.mrf.mxu0
      %3188 = vmatprep.mubr.bf16.mxu0 0
      %3189 = vmatmul.mubr.bf16.gmra.mxu0 %v1480
      %v3190 = vpop.f32.mrf.mxu0
      %v3191 = vadd.f32 %v2902, %v3190
      %v3192 = vpop.f32.mrf.mxu0
      %v3193 = vpop.f32.mrf.mxu0
      %v3194 = vadd.f32 %v2905, %v3193
      %v3195 = vpop.f32.mrf.mxu0
      %3196 = vdwg.mxu0
      %3197 = vst [vmem:[%s175] sm:$0xff] %v2943
      %3198 = vst [vmem:[%s175 + $0x8] sm:$0xff] %v2946
      %3199 = vst [vmem:[%s175 + $0x10] sm:$0xff] %v2951
      %3200 = vst [vmem:[%s175 + $0x18] sm:$0xff] %v2954
      %3201 = vst [vmem:[%s175 + $0x20] sm:$0xff] %v2959
      %3202 = vst [vmem:[%s175 + $0x28] sm:$0xff] %v2962
      %3203 = vst [vmem:[%s175 + $0x30] sm:$0xff] %v2967
      %3204 = vst [vmem:[%s175 + $0x38] sm:$0xff] %v2970
      %3205 = vst [vmem:[%s175 + $0x40] sm:$0xff] %v2975
      %3206 = vst [vmem:[%s175 + $0x48] sm:$0xff] %v2978
      %3207 = vst [vmem:[%s175 + $0x50] sm:$0xff] %v2983
      %3208 = vst [vmem:[%s175 + $0x58] sm:$0xff] %v2986
      %3209 = vst [vmem:[%s175 + $0x60] sm:$0xff] %v2991
      %3210 = vst [vmem:[%s175 + $0x68] sm:$0xff] %v2994
      %3211 = vst [vmem:[%s175 + $0x70] sm:$0xff] %v2999
      %3212 = vst [vmem:[%s175 + $0x78] sm:$0xff] %v3002
      %3213 = vst [vmem:[%s175 + $0x80] sm:$0xff] %v3007
      %3214 = vst [vmem:[%s175 + $0x88] sm:$0xff] %v3010
      %3215 = vst [vmem:[%s175 + $0x90] sm:$0xff] %v3015
      %3216 = vst [vmem:[%s175 + $0x98] sm:$0xff] %v3018
      %3217 = vst [vmem:[%s175 + $0xa0] sm:$0xff] %v3023
      %3218 = vst [vmem:[%s175 + $0xa8] sm:$0xff] %v3026
      %3219 = vst [vmem:[%s175 + $0xb0] sm:$0xff] %v3031
      %3220 = vst [vmem:[%s175 + $0xb8] sm:$0xff] %v3034
      %3221 = vst [vmem:[%s175 + $0xc0] sm:$0xff] %v3039
      %3222 = vst [vmem:[%s175 + $0xc8] sm:$0xff] %v3042
      %3223 = vst [vmem:[%s175 + $0xd0] sm:$0xff] %v3047
      %3224 = vst [vmem:[%s175 + $0xd8] sm:$0xff] %v3050
      %3225 = vst [vmem:[%s175 + $0xe0] sm:$0xff] %v3055
      %3226 = vst [vmem:[%s175 + $0xe8] sm:$0xff] %v3058
      %3227 = vst [vmem:[%s175 + $0xf0] sm:$0xff] %v3063
      %3228 = vst [vmem:[%s175 + $0xf8] sm:$0xff] %v3066
      %3229 = vst [vmem:[%s175 + $0x100] sm:$0xff] %v3071
      %3230 = vst [vmem:[%s175 + $0x108] sm:$0xff] %v3074
      %3231 = vst [vmem:[%s175 + $0x110] sm:$0xff] %v3079
      %3232 = vst [vmem:[%s175 + $0x118] sm:$0xff] %v3082
      %3233 = vst [vmem:[%s175 + $0x120] sm:$0xff] %v3087
      %3234 = vst [vmem:[%s175 + $0x128] sm:$0xff] %v3090
      %3235 = vst [vmem:[%s175 + $0x130] sm:$0xff] %v3095
      %3236 = vst [vmem:[%s175 + $0x138] sm:$0xff] %v3098
      %3237 = vst [vmem:[%s175 + $0x140] sm:$0xff] %v3103
      %3238 = vst [vmem:[%s175 + $0x148] sm:$0xff] %v3106
      %3239 = vst [vmem:[%s175 + $0x150] sm:$0xff] %v3111
      %3240 = vst [vmem:[%s175 + $0x158] sm:$0xff] %v3114
      %3241 = vst [vmem:[%s175 + $0x160] sm:$0xff] %v3119
      %3242 = vst [vmem:[%s175 + $0x168] sm:$0xff] %v3122
      %3243 = vst [vmem:[%s175 + $0x170] sm:$0xff] %v3127
      %3244 = vst [vmem:[%s175 + $0x178] sm:$0xff] %v3130
      %3245 = vst [vmem:[%s175 + $0x180] sm:$0xff] %v3135
      %3246 = vst [vmem:[%s175 + $0x188] sm:$0xff] %v3138
      %3247 = vst [vmem:[%s175 + $0x190] sm:$0xff] %v3143
      %3248 = vst [vmem:[%s175 + $0x198] sm:$0xff] %v3146
      %3249 = vst [vmem:[%s175 + $0x1a0] sm:$0xff] %v3151
      %3250 = vst [vmem:[%s175 + $0x1a8] sm:$0xff] %v3154
      %3251 = vst [vmem:[%s175 + $0x1b0] sm:$0xff] %v3159
      %3252 = vst [vmem:[%s175 + $0x1b8] sm:$0xff] %v3162
      %3253 = vst [vmem:[%s175 + $0x1c0] sm:$0xff] %v3167
      %3254 = vst [vmem:[%s175 + $0x1c8] sm:$0xff] %v3170
      %3255 = vst [vmem:[%s175 + $0x1d0] sm:$0xff] %v3175
      %3256 = vst [vmem:[%s175 + $0x1d8] sm:$0xff] %v3178
      %3257 = vst [vmem:[%s175 + $0x1e0] sm:$0xff] %v3183
      %3258 = vst [vmem:[%s175 + $0x1e8] sm:$0xff] %v3186
      %3259 = vst [vmem:[%s175 + $0x1f0] sm:$0xff] %v3191
      %3260 = vst [vmem:[%s175 + $0x1f8] sm:$0xff] %v3194
      %s3261 = smul.u32 64, %s14
      %p3262 = scmp.lt.s32.totalorder %s3261, 191
      %s3263 = scalar_select %p3262, %s3261, 191
      %s3264 = smul.addr %s3263, 8
      %s3265 = scalar_lea.vmem %s3, %s3264
      // Predicated region
      $region33: #{srcnn_forward.3} parent=31 // pred_check
        %p3266 = pneg %p100
      $region34: #{srcnn_forward.3} parent=31 // pred_check_branch
        %3268 = sbr.rel (%p3266) target = $region36
      $region35: #{srcnn_forward.3} parent=31 // pred_region
        %s3269 = smul.u32 64, %s14
      $region36: #{srcnn_forward.3} parent=31 // pred_fallthru
        _
    $region32: #{srcnn_forward.3} parent=5 // pred_fallthru
      _
    %p3270 = scmp.le.s32.totalorder 2, %s9
    // Predicated region
    $region37: #{srcnn_forward.3} parent=5 // pred_check
      %p3271 = pneg %p3270
    $region38: #{srcnn_forward.3} parent=5 // pred_check_branch
      %3273 = sbr.rel (%p3271) target = $region40
    $region39: #{srcnn_forward.3} parent=5 // pred_region
      %s3274 = ssub.s32 %s9, 2
      // Predicated region
      $region41: #{srcnn_forward.3} parent=39 // pred_check
        %p3275 = pneg %p106
      $region42: #{srcnn_forward.3} parent=39 // pred_check_branch
        %3277 = sbr.rel (%p3275) target = $region44
      $region43: #{srcnn_forward.3} parent=39 // pred_region
        %s3278 = smul.u32 64, %s15
        %p3279 = scmp.lt.s32.totalorder %s3278, 191
        %s3280 = scalar_select %p3279, %s3278, 191
        %s3281 = smul.addr %s3280, 8
        %s3282 = scalar_lea.vmem %s3, %s3281
      $region44: #{srcnn_forward.3} parent=39 // pred_fallthru
        _
    $region40: #{srcnn_forward.3} parent=5 // pred_fallthru
      _
  $region6: #{srcnn_forward.3} parent=0 // loop_footer
    %s13 = sadd.s32 1, %s9
  $region7: #{srcnn_forward.3} parent=0 // loop_footer_branch
    %8 = sbr.rel target = $region3
  $region8: #{srcnn_forward.3} parent=0 // loop_exit
    _

</llo_original>
